<compile_context>
chip_gen: v6e
topology: v6e:2x2x1
jax: 0.10.0
libtpu: 0.0.40
codegen_flags: <defaults>
</compile_context>

<pallas_src>
import math
import numpy as np

import jax
import jax.numpy as jnp
from jax.experimental import pallas as pl
from jax.experimental.pallas import tpu as pltpu


# ---------------------------------------------------------------------------
# Fused ABlock kernel
# ---------------------------------------------------------------------------
def _build_ablock_kernel(n_res_blocks, H, W):
    HW = H * W

    def conv3x3_prelu(x, masks, wt_ref, b_ref, a_ref):
        # x: (Cin, HW) f32; wt_ref: (Cout, 9*Cin); b_ref/a_ref: (Cout, 1)
        taps = []
        k = 0
        for dy in (-1, 0, 1):
            for dx in (-1, 0, 1):
                off = dy * W + dx            # neighbour offset in flattened HW
                if off == 0:
                    taps.append(x)           # centre tap: mask is all ones
                else:
                    s = pltpu.roll(x, (-off) % HW, axis=1)   # s[:,p] = x[:,p+off]
                    taps.append(s * masks[k])                # zero padded border
                k += 1
        xcat = jnp.concatenate(taps, axis=0)                 # (9*Cin, HW)
        y = jnp.dot(wt_ref[...], xcat,
                    preferred_element_type=jnp.float32)      # (Cout, HW)
        y = y + b_ref[...]
        return jnp.where(y > 0, y, a_ref[...] * y)           # per-channel PReLU

    def kernel(*refs):
        masks_ref, x_ref = refs[0], refs[1]
        prm = refs[2:-1]
        o_ref = refs[-1]

        masks = [masks_ref[k] for k in range(9)]   # each (1, HW), VMEM-resident
        h = x_ref[0]                               # (In_D, HW) f32

        pi = 0
        for _ in range(n_res_blocks):              # ResConvBlock: a -> b -> c, cat
            outs = []
            cur = h
            for _ in range(3):
                cur = conv3x3_prelu(cur, masks, prm[pi], prm[pi + 1], prm[pi + 2])
                pi += 3
                outs.append(cur)
            h = jnp.concatenate(outs, axis=0)      # torch.cat([a,b,c], dim=1)

        # head 1: 1x1 conv -> SubDepth, PReLU
        w1, b1, a1 = prm[pi], prm[pi + 1], prm[pi + 2]
        pi += 3
        h = jnp.dot(w1[...], h, preferred_element_type=jnp.float32) + b1[...]
        h = jnp.where(h > 0, h, a1[...] * h)

        # head 2: 1x1 conv -> Out_D (no activation)
        w2, b2 = prm[pi], prm[pi + 1]
        o_ref[0] = jnp.dot(w2[...], h, preferred_element_type=jnp.float32) + b2[...]

    return kernel


def _border_masks(H, W):
    """9 x (1, H*W) 0/1 masks: validity of each 3x3 tap under zero padding."""
    HW = H * W
    yy, xx = np.meshgrid(np.arange(H), np.arange(W), indexing="ij")
    masks = np.zeros((9, 1, HW), np.float32)
    k = 0
    for dy in (-1, 0, 1):
        for dx in (-1, 0, 1):
            valid = ((yy + dy >= 0) & (yy + dy < H) &
                     (xx + dx >= 0) & (xx + dx < W))
            masks[k, 0] = valid.reshape(-1).astype(np.float32)
            k += 1
    return jnp.asarray(masks)


# ---------------------------------------------------------------------------
# Wrapper: layout glue + single pallas_call for the whole ABlock
# ---------------------------------------------------------------------------
def ablock3x3_forward(x_nchw, params):
    N, cin0, H, W = x_nchw.shape
    HW = H * W
    x = x_nchw.reshape(N, cin0, HW).astype(jnp.float32)   # NCHW -> (N, C, H*W), free
    masks = _border_masks(H, W)

    operands = [masks, x]
    in_specs = [
        pl.BlockSpec((9, 1, HW), lambda n: (0, 0, 0)),     # resident masks
        pl.BlockSpec((1, cin0, HW), lambda n: (n, 0, 0)),  # per-batch input
    ]

    def add_param(p):                                      # resident VMEM operand
        operands.append(p)
        in_specs.append(pl.BlockSpec(p.shape, lambda n: (0, 0)))

    for block in params["res_blocks"]:
        for (w, b, a) in block:
            kh, kw, ci, co = w.shape
            # (kh,kw,Cin,Cout) -> (Cout, kh*kw*Cin), K-order = (ky, kx, ci)
            wt = jnp.transpose(w, (3, 0, 1, 2)).reshape(co, kh * kw * ci)
            add_param(wt)
            add_param(b.reshape(co, 1))
            add_param(a.reshape(co, 1))

    w1, b1, a1 = params["head1"]                           # w1: (1,1,3*Depth,SubDepth)
    co1 = w1.shape[-1]
    add_param(jnp.transpose(w1[0, 0], (1, 0)))             # (SubDepth, 3*Depth)
    add_param(b1.reshape(co1, 1))
    add_param(a1.reshape(co1, 1))

    w2, b2 = params["head2"]                               # w2: (1,1,SubDepth,Out_D)
    out_d = w2.shape[-1]
    add_param(jnp.transpose(w2[0, 0], (1, 0)))             # (Out_D, SubDepth)
    add_param(b2.reshape(out_d, 1))

    kernel = _build_ablock_kernel(len(params["res_blocks"]), H, W)
    out = pl.pallas_call(
        kernel,
        out_shape=jax.ShapeDtypeStruct((N, out_d, HW), jnp.float32),
        grid=(N,),
        in_specs=in_specs,
        out_specs=pl.BlockSpec((1, out_d, HW), lambda n: (n, 0, 0)),
        compiler_params=pltpu.CompilerParams(
            dimension_semantics=("parallel",),
            vmem_limit_bytes=32 * 1024 * 1024,
        ),
    )(*operands)
    return out.reshape(N, out_d, H, W)                     # (N, Out_D, H, W), free


# ---------------------------------------------------------------------------
# Parameter init (matches ABlock3x3.weight_init: conv weight ~ N(0, sqrt(2/(k*k*Cout))),
# conv bias keeps PyTorch default uniform, PReLU slopes = 0.25)
# ---------------------------------------------------------------------------
def _conv_init(key, cin, cout, k):
    n = k * k * cout
    std = math.sqrt(2.0 / n)
    kw_, kb_ = jax.random.split(key)
    w = std * jax.random.normal(kw_, (k, k, cin, cout), jnp.float32)
    bound = 1.0 / math.sqrt(cin * k * k)
    b = jax.random.uniform(kb_, (cout,), jnp.float32, minval=-bound, maxval=bound)
    return w, b


def init_ablock_params(key, In_D, Out_D, Depth, SubDepth, C):
    params = {"res_blocks": []}
    n_res = 1 + C
    keys = jax.random.split(key, n_res * 3 + 2)
    ki = 0
    for blk in range(n_res):
        cin = In_D if blk == 0 else Depth * 3
        layers = []
        for li in range(3):
            lin = cin if li == 0 else Depth
            w, b = _conv_init(keys[ki], lin, Depth, 3)
            ki += 1
            layers.append((w, b, jnp.full((Depth,), 0.25, jnp.float32)))
        params["res_blocks"].append(layers)
    w1, b1 = _conv_init(keys[ki], Depth * 3, SubDepth, 1); ki += 1
    params["head1"] = (w1, b1, jnp.full((SubDepth,), 0.25, jnp.float32))
    w2, b2 = _conv_init(keys[ki], SubDepth, Out_D, 1); ki += 1
    params["head2"] = (w2, b2)
    return params


# ---------------------------------------------------------------------------
# Pure-JAX reference (XLA convs) for correctness checking
# ---------------------------------------------------------------------------
def _conv2d_ref(x, w, b):
    dn = jax.lax.conv_dimension_numbers(x.shape, w.shape, ("NCHW", "HWIO", "NCHW"))
    y = jax.lax.conv_general_dilated(x, w, (1, 1), "SAME", dimension_numbers=dn,
                                     precision=jax.lax.Precision.HIGHEST)
    return y + b[None, :, None, None]


def _prelu_ref(x, a):
    return jnp.where(x > 0, x, a[None, :, None, None] * x)


def ablock3x3_reference(x_nchw, params):
    x = x_nchw.astype(jnp.float32)
    for block in params["res_blocks"]:
        outs = []
        h = x
        for (w, b, a) in block:
            h = _prelu_ref(_conv2d_ref(h, w, b), a)
            outs.append(h)
        x = jnp.concatenate(outs, axis=1)
    w1, b1, a1 = params["head1"]
    x = _prelu_ref(_conv2d_ref(x, w1, b1), a1)
    w2, b2 = params["head2"]
    return _conv2d_ref(x, w2, b2)


if __name__ == "__main__":
    # Small config consistent with ABlock3x3(In_D, Out_D, Depth, SubDepth, C)
    In_D, Out_D, Depth, SubDepth, C = 4, 4, 8, 16, 2
    N, H, W = 2, 16, 16

    key = jax.random.PRNGKey(0)
    pkey, xkey = jax.random.split(key)
    params = init_ablock_params(pkey, In_D, Out_D, Depth, SubDepth, C)
    x = jax.random.normal(xkey, (N, In_D, H, W), jnp.float32)

    fwd = jax.jit(ablock3x3_forward)
    y = fwd(x, params)
    jax.block_until_ready(y)
    assert y.shape == (N, Out_D, H, W), y.shape
    assert bool(jnp.all(jnp.isfinite(y)))

    # Correctness check vs. XLA reference.  Loose tolerance only to absorb
    # possible MXU pass-count / accumulation-order differences across 11 conv
    # layers; structural bugs would produce O(1) relative error.
    y_ref = ablock3x3_reference(x, params)
    err = float(jnp.max(jnp.abs(y - y_ref)))
    scale = float(jnp.max(jnp.abs(y_ref))) + 1e-6
    assert err / scale < 5e-2, (err, scale)

    print("KERNEL_OK")
</pallas_src>

<mosaic_0001>
module attributes {stable_mosaic.version = 11 : i64} {
  func.func @kernel(%arg0: i32, %arg1: memref<9x1x256xf32, #tpu.memory_space<vmem>>, %arg2: memref<1x4x256xf32, #tpu.memory_space<vmem>>, %arg3: memref<8x36xf32, #tpu.memory_space<vmem>>, %arg4: memref<8x1xf32, #tpu.memory_space<vmem>>, %arg5: memref<8x1xf32, #tpu.memory_space<vmem>>, %arg6: memref<8x72xf32, #tpu.memory_space<vmem>>, %arg7: memref<8x1xf32, #tpu.memory_space<vmem>>, %arg8: memref<8x1xf32, #tpu.memory_space<vmem>>, %arg9: memref<8x72xf32, #tpu.memory_space<vmem>>, %arg10: memref<8x1xf32, #tpu.memory_space<vmem>>, %arg11: memref<8x1xf32, #tpu.memory_space<vmem>>, %arg12: memref<8x216xf32, #tpu.memory_space<vmem>>, %arg13: memref<8x1xf32, #tpu.memory_space<vmem>>, %arg14: memref<8x1xf32, #tpu.memory_space<vmem>>, %arg15: memref<8x72xf32, #tpu.memory_space<vmem>>, %arg16: memref<8x1xf32, #tpu.memory_space<vmem>>, %arg17: memref<8x1xf32, #tpu.memory_space<vmem>>, %arg18: memref<8x72xf32, #tpu.memory_space<vmem>>, %arg19: memref<8x1xf32, #tpu.memory_space<vmem>>, %arg20: memref<8x1xf32, #tpu.memory_space<vmem>>, %arg21: memref<8x216xf32, #tpu.memory_space<vmem>>, %arg22: memref<8x1xf32, #tpu.memory_space<vmem>>, %arg23: memref<8x1xf32, #tpu.memory_space<vmem>>, %arg24: memref<8x72xf32, #tpu.memory_space<vmem>>, %arg25: memref<8x1xf32, #tpu.memory_space<vmem>>, %arg26: memref<8x1xf32, #tpu.memory_space<vmem>>, %arg27: memref<8x72xf32, #tpu.memory_space<vmem>>, %arg28: memref<8x1xf32, #tpu.memory_space<vmem>>, %arg29: memref<8x1xf32, #tpu.memory_space<vmem>>, %arg30: memref<16x24xf32, #tpu.memory_space<vmem>>, %arg31: memref<16x1xf32, #tpu.memory_space<vmem>>, %arg32: memref<16x1xf32, #tpu.memory_space<vmem>>, %arg33: memref<4x16xf32, #tpu.memory_space<vmem>>, %arg34: memref<4x1xf32, #tpu.memory_space<vmem>>, %arg35: memref<1x4x256xf32, #tpu.memory_space<vmem>>) attributes {dimension_semantics = [#tpu.dimension_semantics<parallel>], iteration_bounds = array<i64: 2>, scalar_prefetch = 0 : i64, scratch_operands = 0 : i64, tpu.core_type = #tpu.core_type<tc>, window_params = [{pipeline_mode = #tpu.pipeline_mode<synchronous>, transform_indices = @transform_0, window_bounds = array<i64: 9, 1, 256>}, {transform_indices = @transform_1, window_bounds = array<i64: 1, 4, 256>}, {pipeline_mode = #tpu.pipeline_mode<synchronous>, transform_indices = @transform_2, window_bounds = array<i64: 8, 36>}, {pipeline_mode = #tpu.pipeline_mode<synchronous>, transform_indices = @transform_3, window_bounds = array<i64: 8, 1>}, {pipeline_mode = #tpu.pipeline_mode<synchronous>, transform_indices = @transform_4, window_bounds = array<i64: 8, 1>}, {pipeline_mode = #tpu.pipeline_mode<synchronous>, transform_indices = @transform_5, window_bounds = array<i64: 8, 72>}, {pipeline_mode = #tpu.pipeline_mode<synchronous>, transform_indices = @transform_6, window_bounds = array<i64: 8, 1>}, {pipeline_mode = #tpu.pipeline_mode<synchronous>, transform_indices = @transform_7, window_bounds = array<i64: 8, 1>}, {pipeline_mode = #tpu.pipeline_mode<synchronous>, transform_indices = @transform_8, window_bounds = array<i64: 8, 72>}, {pipeline_mode = #tpu.pipeline_mode<synchronous>, transform_indices = @transform_9, window_bounds = array<i64: 8, 1>}, {pipeline_mode = #tpu.pipeline_mode<synchronous>, transform_indices = @transform_10, window_bounds = array<i64: 8, 1>}, {pipeline_mode = #tpu.pipeline_mode<synchronous>, transform_indices = @transform_11, window_bounds = array<i64: 8, 216>}, {pipeline_mode = #tpu.pipeline_mode<synchronous>, transform_indices = @transform_12, window_bounds = array<i64: 8, 1>}, {pipeline_mode = #tpu.pipeline_mode<synchronous>, transform_indices = @transform_13, window_bounds = array<i64: 8, 1>}, {pipeline_mode = #tpu.pipeline_mode<synchronous>, transform_indices = @transform_14, window_bounds = array<i64: 8, 72>}, {pipeline_mode = #tpu.pipeline_mode<synchronous>, transform_indices = @transform_15, window_bounds = array<i64: 8, 1>}, {pipeline_mode = #tpu.pipeline_mode<synchronous>, transform_indices = @transform_16, window_bounds = array<i64: 8, 1>}, {pipeline_mode = #tpu.pipeline_mode<synchronous>, transform_indices = @transform_17, window_bounds = array<i64: 8, 72>}, {pipeline_mode = #tpu.pipeline_mode<synchronous>, transform_indices = @transform_18, window_bounds = array<i64: 8, 1>}, {pipeline_mode = #tpu.pipeline_mode<synchronous>, transform_indices = @transform_19, window_bounds = array<i64: 8, 1>}, {pipeline_mode = #tpu.pipeline_mode<synchronous>, transform_indices = @transform_20, window_bounds = array<i64: 8, 216>}, {pipeline_mode = #tpu.pipeline_mode<synchronous>, transform_indices = @transform_21, window_bounds = array<i64: 8, 1>}, {pipeline_mode = #tpu.pipeline_mode<synchronous>, transform_indices = @transform_22, window_bounds = array<i64: 8, 1>}, {pipeline_mode = #tpu.pipeline_mode<synchronous>, transform_indices = @transform_23, window_bounds = array<i64: 8, 72>}, {pipeline_mode = #tpu.pipeline_mode<synchronous>, transform_indices = @transform_24, window_bounds = array<i64: 8, 1>}, {pipeline_mode = #tpu.pipeline_mode<synchronous>, transform_indices = @transform_25, window_bounds = array<i64: 8, 1>}, {pipeline_mode = #tpu.pipeline_mode<synchronous>, transform_indices = @transform_26, window_bounds = array<i64: 8, 72>}, {pipeline_mode = #tpu.pipeline_mode<synchronous>, transform_indices = @transform_27, window_bounds = array<i64: 8, 1>}, {pipeline_mode = #tpu.pipeline_mode<synchronous>, transform_indices = @transform_28, window_bounds = array<i64: 8, 1>}, {pipeline_mode = #tpu.pipeline_mode<synchronous>, transform_indices = @transform_29, window_bounds = array<i64: 16, 24>}, {pipeline_mode = #tpu.pipeline_mode<synchronous>, transform_indices = @transform_30, window_bounds = array<i64: 16, 1>}, {pipeline_mode = #tpu.pipeline_mode<synchronous>, transform_indices = @transform_31, window_bounds = array<i64: 16, 1>}, {pipeline_mode = #tpu.pipeline_mode<synchronous>, transform_indices = @transform_32, window_bounds = array<i64: 4, 16>}, {pipeline_mode = #tpu.pipeline_mode<synchronous>, transform_indices = @transform_33, window_bounds = array<i64: 4, 1>}, {transform_indices = @transform_34, window_bounds = array<i64: 1, 4, 256>}]} {
    %c0 = arith.constant 0 : index
    %c0_0 = arith.constant 0 : index
    %c0_1 = arith.constant 0 : index
    %0 = vector.load %arg1[%c0, %c0_0, %c0_1] : memref<9x1x256xf32, #tpu.memory_space<vmem>>, vector<1x1x256xf32>
    %1 = vector.shape_cast %0 : vector<1x1x256xf32> to vector<1x256xf32>
    %c1 = arith.constant 1 : index
    %c0_2 = arith.constant 0 : index
    %c0_3 = arith.constant 0 : index
    %2 = vector.load %arg1[%c1, %c0_2, %c0_3] : memref<9x1x256xf32, #tpu.memory_space<vmem>>, vector<1x1x256xf32>
    %3 = vector.shape_cast %2 : vector<1x1x256xf32> to vector<1x256xf32>
    %c2 = arith.constant 2 : index
    %c0_4 = arith.constant 0 : index
    %c0_5 = arith.constant 0 : index
    %4 = vector.load %arg1[%c2, %c0_4, %c0_5] : memref<9x1x256xf32, #tpu.memory_space<vmem>>, vector<1x1x256xf32>
    %5 = vector.shape_cast %4 : vector<1x1x256xf32> to vector<1x256xf32>
    %c3 = arith.constant 3 : index
    %c0_6 = arith.constant 0 : index
    %c0_7 = arith.constant 0 : index
    %6 = vector.load %arg1[%c3, %c0_6, %c0_7] : memref<9x1x256xf32, #tpu.memory_space<vmem>>, vector<1x1x256xf32>
    %7 = vector.shape_cast %6 : vector<1x1x256xf32> to vector<1x256xf32>
    %c5 = arith.constant 5 : index
    %c0_8 = arith.constant 0 : index
    %c0_9 = arith.constant 0 : index
    %8 = vector.load %arg1[%c5, %c0_8, %c0_9] : memref<9x1x256xf32, #tpu.memory_space<vmem>>, vector<1x1x256xf32>
    %9 = vector.shape_cast %8 : vector<1x1x256xf32> to vector<1x256xf32>
    %c6 = arith.constant 6 : index
    %c0_10 = arith.constant 0 : index
    %c0_11 = arith.constant 0 : index
    %10 = vector.load %arg1[%c6, %c0_10, %c0_11] : memref<9x1x256xf32, #tpu.memory_space<vmem>>, vector<1x1x256xf32>
    %11 = vector.shape_cast %10 : vector<1x1x256xf32> to vector<1x256xf32>
    %c7 = arith.constant 7 : index
    %c0_12 = arith.constant 0 : index
    %c0_13 = arith.constant 0 : index
    %12 = vector.load %arg1[%c7, %c0_12, %c0_13] : memref<9x1x256xf32, #tpu.memory_space<vmem>>, vector<1x1x256xf32>
    %13 = vector.shape_cast %12 : vector<1x1x256xf32> to vector<1x256xf32>
    %c8 = arith.constant 8 : index
    %c0_14 = arith.constant 0 : index
    %c0_15 = arith.constant 0 : index
    %14 = vector.load %arg1[%c8, %c0_14, %c0_15] : memref<9x1x256xf32, #tpu.memory_space<vmem>>, vector<1x1x256xf32>
    %15 = vector.shape_cast %14 : vector<1x1x256xf32> to vector<1x256xf32>
    %c0_16 = arith.constant 0 : index
    %c0_17 = arith.constant 0 : index
    %c0_18 = arith.constant 0 : index
    %16 = vector.load %arg2[%c0_16, %c0_17, %c0_18] : memref<1x4x256xf32, #tpu.memory_space<vmem>>, vector<1x4x256xf32>
    %17 = vector.shape_cast %16 : vector<1x4x256xf32> to vector<4x256xf32>
    %c17_i32 = arith.constant 17 : i32
    %18 = tpu.dynamic_rotate %17 by %c17_i32 dim 1 : vector<4x256xf32>, i32 -> vector<4x256xf32>
    %19 = vector.broadcast %1 : vector<1x256xf32> to vector<4x256xf32>
    %20 = arith.mulf %18, %19 : vector<4x256xf32>
    %c16_i32 = arith.constant 16 : i32
    %21 = tpu.dynamic_rotate %17 by %c16_i32 dim 1 : vector<4x256xf32>, i32 -> vector<4x256xf32>
    %22 = vector.broadcast %3 : vector<1x256xf32> to vector<4x256xf32>
    %23 = arith.mulf %21, %22 : vector<4x256xf32>
    %c15_i32 = arith.constant 15 : i32
    %24 = tpu.dynamic_rotate %17 by %c15_i32 dim 1 : vector<4x256xf32>, i32 -> vector<4x256xf32>
    %25 = vector.broadcast %5 : vector<1x256xf32> to vector<4x256xf32>
    %26 = arith.mulf %24, %25 : vector<4x256xf32>
    %c1_i32 = arith.constant 1 : i32
    %27 = tpu.dynamic_rotate %17 by %c1_i32 dim 1 : vector<4x256xf32>, i32 -> vector<4x256xf32>
    %28 = vector.broadcast %7 : vector<1x256xf32> to vector<4x256xf32>
    %29 = arith.mulf %27, %28 : vector<4x256xf32>
    %c255_i32 = arith.constant 255 : i32
    %30 = tpu.dynamic_rotate %17 by %c255_i32 dim 1 : vector<4x256xf32>, i32 -> vector<4x256xf32>
    %31 = vector.broadcast %9 : vector<1x256xf32> to vector<4x256xf32>
    %32 = arith.mulf %30, %31 : vector<4x256xf32>
    %c241_i32 = arith.constant 241 : i32
    %33 = tpu.dynamic_rotate %17 by %c241_i32 dim 1 : vector<4x256xf32>, i32 -> vector<4x256xf32>
    %34 = vector.broadcast %11 : vector<1x256xf32> to vector<4x256xf32>
    %35 = arith.mulf %33, %34 : vector<4x256xf32>
    %c240_i32 = arith.constant 240 : i32
    %36 = tpu.dynamic_rotate %17 by %c240_i32 dim 1 : vector<4x256xf32>, i32 -> vector<4x256xf32>
    %37 = vector.broadcast %13 : vector<1x256xf32> to vector<4x256xf32>
    %38 = arith.mulf %36, %37 : vector<4x256xf32>
    %c239_i32 = arith.constant 239 : i32
    %39 = tpu.dynamic_rotate %17 by %c239_i32 dim 1 : vector<4x256xf32>, i32 -> vector<4x256xf32>
    %40 = vector.broadcast %15 : vector<1x256xf32> to vector<4x256xf32>
    %41 = arith.mulf %39, %40 : vector<4x256xf32>
    %42 = tpu.concatenate %20, %23, %26, %29, %17, %32, %35, %38, %41 in 0 : vector<4x256xf32>, vector<4x256xf32>, vector<4x256xf32>, vector<4x256xf32>, vector<4x256xf32>, vector<4x256xf32>, vector<4x256xf32>, vector<4x256xf32>, vector<4x256xf32> -> vector<36x256xf32>
    %c0_19 = arith.constant 0 : index
    %c0_20 = arith.constant 0 : index
    %43 = vector.load %arg3[%c0_19, %c0_20] : memref<8x36xf32, #tpu.memory_space<vmem>>, vector<8x36xf32>
    %cst = arith.constant dense<0.000000e+00> : vector<8x256xf32>
    %44 = tpu.matmul %43, %42, %cst {dimension_numbers = #tpu.dot_dimension_numbers<[1], [0], [0], [1], [0, 0, 1, 1], [], []>} : vector<8x36xf32>, vector<36x256xf32>, vector<8x256xf32> -> vector<8x256xf32>
    %c0_21 = arith.constant 0 : index
    %c0_22 = arith.constant 0 : index
    %45 = vector.load %arg4[%c0_21, %c0_22] : memref<8x1xf32, #tpu.memory_space<vmem>>, vector<8x1xf32>
    %46 = vector.broadcast %45 : vector<8x1xf32> to vector<8x256xf32>
    %47 = arith.addf %44, %46 : vector<8x256xf32>
    %cst_23 = arith.constant 0.000000e+00 : f32
    %48 = vector.broadcast %cst_23 : f32 to vector<8x256xf32>
    %49 = arith.cmpf ogt, %47, %48 : vector<8x256xf32>
    %c0_24 = arith.constant 0 : index
    %c0_25 = arith.constant 0 : index
    %50 = vector.load %arg5[%c0_24, %c0_25] : memref<8x1xf32, #tpu.memory_space<vmem>>, vector<8x1xf32>
    %51 = vector.broadcast %50 : vector<8x1xf32> to vector<8x256xf32>
    %52 = arith.mulf %51, %47 : vector<8x256xf32>
    %53 = arith.select %49, %47, %52 : vector<8x256xi1>, vector<8x256xf32>
    %c17_i32_26 = arith.constant 17 : i32
    %54 = tpu.dynamic_rotate %53 by %c17_i32_26 dim 1 : vector<8x256xf32>, i32 -> vector<8x256xf32>
    %55 = vector.broadcast %1 : vector<1x256xf32> to vector<8x256xf32>
    %56 = arith.mulf %54, %55 : vector<8x256xf32>
    %c16_i32_27 = arith.constant 16 : i32
    %57 = tpu.dynamic_rotate %53 by %c16_i32_27 dim 1 : vector<8x256xf32>, i32 -> vector<8x256xf32>
    %58 = vector.broadcast %3 : vector<1x256xf32> to vector<8x256xf32>
    %59 = arith.mulf %57, %58 : vector<8x256xf32>
    %c15_i32_28 = arith.constant 15 : i32
    %60 = tpu.dynamic_rotate %53 by %c15_i32_28 dim 1 : vector<8x256xf32>, i32 -> vector<8x256xf32>
    %61 = vector.broadcast %5 : vector<1x256xf32> to vector<8x256xf32>
    %62 = arith.mulf %60, %61 : vector<8x256xf32>
    %c1_i32_29 = arith.constant 1 : i32
    %63 = tpu.dynamic_rotate %53 by %c1_i32_29 dim 1 : vector<8x256xf32>, i32 -> vector<8x256xf32>
    %64 = vector.broadcast %7 : vector<1x256xf32> to vector<8x256xf32>
    %65 = arith.mulf %63, %64 : vector<8x256xf32>
    %c255_i32_30 = arith.constant 255 : i32
    %66 = tpu.dynamic_rotate %53 by %c255_i32_30 dim 1 : vector<8x256xf32>, i32 -> vector<8x256xf32>
    %67 = vector.broadcast %9 : vector<1x256xf32> to vector<8x256xf32>
    %68 = arith.mulf %66, %67 : vector<8x256xf32>
    %c241_i32_31 = arith.constant 241 : i32
    %69 = tpu.dynamic_rotate %53 by %c241_i32_31 dim 1 : vector<8x256xf32>, i32 -> vector<8x256xf32>
    %70 = vector.broadcast %11 : vector<1x256xf32> to vector<8x256xf32>
    %71 = arith.mulf %69, %70 : vector<8x256xf32>
    %c240_i32_32 = arith.constant 240 : i32
    %72 = tpu.dynamic_rotate %53 by %c240_i32_32 dim 1 : vector<8x256xf32>, i32 -> vector<8x256xf32>
    %73 = vector.broadcast %13 : vector<1x256xf32> to vector<8x256xf32>
    %74 = arith.mulf %72, %73 : vector<8x256xf32>
    %c239_i32_33 = arith.constant 239 : i32
    %75 = tpu.dynamic_rotate %53 by %c239_i32_33 dim 1 : vector<8x256xf32>, i32 -> vector<8x256xf32>
    %76 = vector.broadcast %15 : vector<1x256xf32> to vector<8x256xf32>
    %77 = arith.mulf %75, %76 : vector<8x256xf32>
    %78 = tpu.concatenate %56, %59, %62, %65, %53, %68, %71, %74, %77 in 0 : vector<8x256xf32>, vector<8x256xf32>, vector<8x256xf32>, vector<8x256xf32>, vector<8x256xf32>, vector<8x256xf32>, vector<8x256xf32>, vector<8x256xf32>, vector<8x256xf32> -> vector<72x256xf32>
    %c0_34 = arith.constant 0 : index
    %c0_35 = arith.constant 0 : index
    %79 = vector.load %arg6[%c0_34, %c0_35] : memref<8x72xf32, #tpu.memory_space<vmem>>, vector<8x72xf32>
    %cst_36 = arith.constant dense<0.000000e+00> : vector<8x256xf32>
    %80 = tpu.matmul %79, %78, %cst_36 {dimension_numbers = #tpu.dot_dimension_numbers<[1], [0], [0], [1], [0, 0, 1, 1], [], []>} : vector<8x72xf32>, vector<72x256xf32>, vector<8x256xf32> -> vector<8x256xf32>
    %c0_37 = arith.constant 0 : index
    %c0_38 = arith.constant 0 : index
    %81 = vector.load %arg7[%c0_37, %c0_38] : memref<8x1xf32, #tpu.memory_space<vmem>>, vector<8x1xf32>
    %82 = vector.broadcast %81 : vector<8x1xf32> to vector<8x256xf32>
    %83 = arith.addf %80, %82 : vector<8x256xf32>
    %cst_39 = arith.constant 0.000000e+00 : f32
    %84 = vector.broadcast %cst_39 : f32 to vector<8x256xf32>
    %85 = arith.cmpf ogt, %83, %84 : vector<8x256xf32>
    %c0_40 = arith.constant 0 : index
    %c0_41 = arith.constant 0 : index
    %86 = vector.load %arg8[%c0_40, %c0_41] : memref<8x1xf32, #tpu.memory_space<vmem>>, vector<8x1xf32>
    %87 = vector.broadcast %86 : vector<8x1xf32> to vector<8x256xf32>
    %88 = arith.mulf %87, %83 : vector<8x256xf32>
    %89 = arith.select %85, %83, %88 : vector<8x256xi1>, vector<8x256xf32>
    %c17_i32_42 = arith.constant 17 : i32
    %90 = tpu.dynamic_rotate %89 by %c17_i32_42 dim 1 : vector<8x256xf32>, i32 -> vector<8x256xf32>
    %91 = vector.broadcast %1 : vector<1x256xf32> to vector<8x256xf32>
    %92 = arith.mulf %90, %91 : vector<8x256xf32>
    %c16_i32_43 = arith.constant 16 : i32
    %93 = tpu.dynamic_rotate %89 by %c16_i32_43 dim 1 : vector<8x256xf32>, i32 -> vector<8x256xf32>
    %94 = vector.broadcast %3 : vector<1x256xf32> to vector<8x256xf32>
    %95 = arith.mulf %93, %94 : vector<8x256xf32>
    %c15_i32_44 = arith.constant 15 : i32
    %96 = tpu.dynamic_rotate %89 by %c15_i32_44 dim 1 : vector<8x256xf32>, i32 -> vector<8x256xf32>
    %97 = vector.broadcast %5 : vector<1x256xf32> to vector<8x256xf32>
    %98 = arith.mulf %96, %97 : vector<8x256xf32>
    %c1_i32_45 = arith.constant 1 : i32
    %99 = tpu.dynamic_rotate %89 by %c1_i32_45 dim 1 : vector<8x256xf32>, i32 -> vector<8x256xf32>
    %100 = vector.broadcast %7 : vector<1x256xf32> to vector<8x256xf32>
    %101 = arith.mulf %99, %100 : vector<8x256xf32>
    %c255_i32_46 = arith.constant 255 : i32
    %102 = tpu.dynamic_rotate %89 by %c255_i32_46 dim 1 : vector<8x256xf32>, i32 -> vector<8x256xf32>
    %103 = vector.broadcast %9 : vector<1x256xf32> to vector<8x256xf32>
    %104 = arith.mulf %102, %103 : vector<8x256xf32>
    %c241_i32_47 = arith.constant 241 : i32
    %105 = tpu.dynamic_rotate %89 by %c241_i32_47 dim 1 : vector<8x256xf32>, i32 -> vector<8x256xf32>
    %106 = vector.broadcast %11 : vector<1x256xf32> to vector<8x256xf32>
    %107 = arith.mulf %105, %106 : vector<8x256xf32>
    %c240_i32_48 = arith.constant 240 : i32
    %108 = tpu.dynamic_rotate %89 by %c240_i32_48 dim 1 : vector<8x256xf32>, i32 -> vector<8x256xf32>
    %109 = vector.broadcast %13 : vector<1x256xf32> to vector<8x256xf32>
    %110 = arith.mulf %108, %109 : vector<8x256xf32>
    %c239_i32_49 = arith.constant 239 : i32
    %111 = tpu.dynamic_rotate %89 by %c239_i32_49 dim 1 : vector<8x256xf32>, i32 -> vector<8x256xf32>
    %112 = vector.broadcast %15 : vector<1x256xf32> to vector<8x256xf32>
    %113 = arith.mulf %111, %112 : vector<8x256xf32>
    %114 = tpu.concatenate %92, %95, %98, %101, %89, %104, %107, %110, %113 in 0 : vector<8x256xf32>, vector<8x256xf32>, vector<8x256xf32>, vector<8x256xf32>, vector<8x256xf32>, vector<8x256xf32>, vector<8x256xf32>, vector<8x256xf32>, vector<8x256xf32> -> vector<72x256xf32>
    %c0_50 = arith.constant 0 : index
    %c0_51 = arith.constant 0 : index
    %115 = vector.load %arg9[%c0_50, %c0_51] : memref<8x72xf32, #tpu.memory_space<vmem>>, vector<8x72xf32>
    %cst_52 = arith.constant dense<0.000000e+00> : vector<8x256xf32>
    %116 = tpu.matmul %115, %114, %cst_52 {dimension_numbers = #tpu.dot_dimension_numbers<[1], [0], [0], [1], [0, 0, 1, 1], [], []>} : vector<8x72xf32>, vector<72x256xf32>, vector<8x256xf32> -> vector<8x256xf32>
    %c0_53 = arith.constant 0 : index
    %c0_54 = arith.constant 0 : index
    %117 = vector.load %arg10[%c0_53, %c0_54] : memref<8x1xf32, #tpu.memory_space<vmem>>, vector<8x1xf32>
    %118 = vector.broadcast %117 : vector<8x1xf32> to vector<8x256xf32>
    %119 = arith.addf %116, %118 : vector<8x256xf32>
    %cst_55 = arith.constant 0.000000e+00 : f32
    %120 = vector.broadcast %cst_55 : f32 to vector<8x256xf32>
    %121 = arith.cmpf ogt, %119, %120 : vector<8x256xf32>
    %c0_56 = arith.constant 0 : index
    %c0_57 = arith.constant 0 : index
    %122 = vector.load %arg11[%c0_56, %c0_57] : memref<8x1xf32, #tpu.memory_space<vmem>>, vector<8x1xf32>
    %123 = vector.broadcast %122 : vector<8x1xf32> to vector<8x256xf32>
    %124 = arith.mulf %123, %119 : vector<8x256xf32>
    %125 = arith.select %121, %119, %124 : vector<8x256xi1>, vector<8x256xf32>
    %126 = tpu.concatenate %53, %89, %125 in 0 : vector<8x256xf32>, vector<8x256xf32>, vector<8x256xf32> -> vector<24x256xf32>
    %c17_i32_58 = arith.constant 17 : i32
    %127 = tpu.dynamic_rotate %126 by %c17_i32_58 dim 1 : vector<24x256xf32>, i32 -> vector<24x256xf32>
    %128 = vector.broadcast %1 : vector<1x256xf32> to vector<24x256xf32>
    %129 = arith.mulf %127, %128 : vector<24x256xf32>
    %c16_i32_59 = arith.constant 16 : i32
    %130 = tpu.dynamic_rotate %126 by %c16_i32_59 dim 1 : vector<24x256xf32>, i32 -> vector<24x256xf32>
    %131 = vector.broadcast %3 : vector<1x256xf32> to vector<24x256xf32>
    %132 = arith.mulf %130, %131 : vector<24x256xf32>
    %c15_i32_60 = arith.constant 15 : i32
    %133 = tpu.dynamic_rotate %126 by %c15_i32_60 dim 1 : vector<24x256xf32>, i32 -> vector<24x256xf32>
    %134 = vector.broadcast %5 : vector<1x256xf32> to vector<24x256xf32>
    %135 = arith.mulf %133, %134 : vector<24x256xf32>
    %c1_i32_61 = arith.constant 1 : i32
    %136 = tpu.dynamic_rotate %126 by %c1_i32_61 dim 1 : vector<24x256xf32>, i32 -> vector<24x256xf32>
    %137 = vector.broadcast %7 : vector<1x256xf32> to vector<24x256xf32>
    %138 = arith.mulf %136, %137 : vector<24x256xf32>
    %c255_i32_62 = arith.constant 255 : i32
    %139 = tpu.dynamic_rotate %126 by %c255_i32_62 dim 1 : vector<24x256xf32>, i32 -> vector<24x256xf32>
    %140 = vector.broadcast %9 : vector<1x256xf32> to vector<24x256xf32>
    %141 = arith.mulf %139, %140 : vector<24x256xf32>
    %c241_i32_63 = arith.constant 241 : i32
    %142 = tpu.dynamic_rotate %126 by %c241_i32_63 dim 1 : vector<24x256xf32>, i32 -> vector<24x256xf32>
    %143 = vector.broadcast %11 : vector<1x256xf32> to vector<24x256xf32>
    %144 = arith.mulf %142, %143 : vector<24x256xf32>
    %c240_i32_64 = arith.constant 240 : i32
    %145 = tpu.dynamic_rotate %126 by %c240_i32_64 dim 1 : vector<24x256xf32>, i32 -> vector<24x256xf32>
    %146 = vector.broadcast %13 : vector<1x256xf32> to vector<24x256xf32>
    %147 = arith.mulf %145, %146 : vector<24x256xf32>
    %c239_i32_65 = arith.constant 239 : i32
    %148 = tpu.dynamic_rotate %126 by %c239_i32_65 dim 1 : vector<24x256xf32>, i32 -> vector<24x256xf32>
    %149 = vector.broadcast %15 : vector<1x256xf32> to vector<24x256xf32>
    %150 = arith.mulf %148, %149 : vector<24x256xf32>
    %151 = tpu.concatenate %129, %132, %135, %138, %126, %141, %144, %147, %150 in 0 : vector<24x256xf32>, vector<24x256xf32>, vector<24x256xf32>, vector<24x256xf32>, vector<24x256xf32>, vector<24x256xf32>, vector<24x256xf32>, vector<24x256xf32>, vector<24x256xf32> -> vector<216x256xf32>
    %c0_66 = arith.constant 0 : index
    %c0_67 = arith.constant 0 : index
    %152 = vector.load %arg12[%c0_66, %c0_67] : memref<8x216xf32, #tpu.memory_space<vmem>>, vector<8x216xf32>
    %cst_68 = arith.constant dense<0.000000e+00> : vector<8x256xf32>
    %153 = tpu.matmul %152, %151, %cst_68 {dimension_numbers = #tpu.dot_dimension_numbers<[1], [0], [0], [1], [0, 0, 1, 1], [], []>} : vector<8x216xf32>, vector<216x256xf32>, vector<8x256xf32> -> vector<8x256xf32>
    %c0_69 = arith.constant 0 : index
    %c0_70 = arith.constant 0 : index
    %154 = vector.load %arg13[%c0_69, %c0_70] : memref<8x1xf32, #tpu.memory_space<vmem>>, vector<8x1xf32>
    %155 = vector.broadcast %154 : vector<8x1xf32> to vector<8x256xf32>
    %156 = arith.addf %153, %155 : vector<8x256xf32>
    %cst_71 = arith.constant 0.000000e+00 : f32
    %157 = vector.broadcast %cst_71 : f32 to vector<8x256xf32>
    %158 = arith.cmpf ogt, %156, %157 : vector<8x256xf32>
    %c0_72 = arith.constant 0 : index
    %c0_73 = arith.constant 0 : index
    %159 = vector.load %arg14[%c0_72, %c0_73] : memref<8x1xf32, #tpu.memory_space<vmem>>, vector<8x1xf32>
    %160 = vector.broadcast %159 : vector<8x1xf32> to vector<8x256xf32>
    %161 = arith.mulf %160, %156 : vector<8x256xf32>
    %162 = arith.select %158, %156, %161 : vector<8x256xi1>, vector<8x256xf32>
    %c17_i32_74 = arith.constant 17 : i32
    %163 = tpu.dynamic_rotate %162 by %c17_i32_74 dim 1 : vector<8x256xf32>, i32 -> vector<8x256xf32>
    %164 = vector.broadcast %1 : vector<1x256xf32> to vector<8x256xf32>
    %165 = arith.mulf %163, %164 : vector<8x256xf32>
    %c16_i32_75 = arith.constant 16 : i32
    %166 = tpu.dynamic_rotate %162 by %c16_i32_75 dim 1 : vector<8x256xf32>, i32 -> vector<8x256xf32>
    %167 = vector.broadcast %3 : vector<1x256xf32> to vector<8x256xf32>
    %168 = arith.mulf %166, %167 : vector<8x256xf32>
    %c15_i32_76 = arith.constant 15 : i32
    %169 = tpu.dynamic_rotate %162 by %c15_i32_76 dim 1 : vector<8x256xf32>, i32 -> vector<8x256xf32>
    %170 = vector.broadcast %5 : vector<1x256xf32> to vector<8x256xf32>
    %171 = arith.mulf %169, %170 : vector<8x256xf32>
    %c1_i32_77 = arith.constant 1 : i32
    %172 = tpu.dynamic_rotate %162 by %c1_i32_77 dim 1 : vector<8x256xf32>, i32 -> vector<8x256xf32>
    %173 = vector.broadcast %7 : vector<1x256xf32> to vector<8x256xf32>
    %174 = arith.mulf %172, %173 : vector<8x256xf32>
    %c255_i32_78 = arith.constant 255 : i32
    %175 = tpu.dynamic_rotate %162 by %c255_i32_78 dim 1 : vector<8x256xf32>, i32 -> vector<8x256xf32>
    %176 = vector.broadcast %9 : vector<1x256xf32> to vector<8x256xf32>
    %177 = arith.mulf %175, %176 : vector<8x256xf32>
    %c241_i32_79 = arith.constant 241 : i32
    %178 = tpu.dynamic_rotate %162 by %c241_i32_79 dim 1 : vector<8x256xf32>, i32 -> vector<8x256xf32>
    %179 = vector.broadcast %11 : vector<1x256xf32> to vector<8x256xf32>
    %180 = arith.mulf %178, %179 : vector<8x256xf32>
    %c240_i32_80 = arith.constant 240 : i32
    %181 = tpu.dynamic_rotate %162 by %c240_i32_80 dim 1 : vector<8x256xf32>, i32 -> vector<8x256xf32>
    %182 = vector.broadcast %13 : vector<1x256xf32> to vector<8x256xf32>
    %183 = arith.mulf %181, %182 : vector<8x256xf32>
    %c239_i32_81 = arith.constant 239 : i32
    %184 = tpu.dynamic_rotate %162 by %c239_i32_81 dim 1 : vector<8x256xf32>, i32 -> vector<8x256xf32>
    %185 = vector.broadcast %15 : vector<1x256xf32> to vector<8x256xf32>
    %186 = arith.mulf %184, %185 : vector<8x256xf32>
    %187 = tpu.concatenate %165, %168, %171, %174, %162, %177, %180, %183, %186 in 0 : vector<8x256xf32>, vector<8x256xf32>, vector<8x256xf32>, vector<8x256xf32>, vector<8x256xf32>, vector<8x256xf32>, vector<8x256xf32>, vector<8x256xf32>, vector<8x256xf32> -> vector<72x256xf32>
    %c0_82 = arith.constant 0 : index
    %c0_83 = arith.constant 0 : index
    %188 = vector.load %arg15[%c0_82, %c0_83] : memref<8x72xf32, #tpu.memory_space<vmem>>, vector<8x72xf32>
    %cst_84 = arith.constant dense<0.000000e+00> : vector<8x256xf32>
    %189 = tpu.matmul %188, %187, %cst_84 {dimension_numbers = #tpu.dot_dimension_numbers<[1], [0], [0], [1], [0, 0, 1, 1], [], []>} : vector<8x72xf32>, vector<72x256xf32>, vector<8x256xf32> -> vector<8x256xf32>
    %c0_85 = arith.constant 0 : index
    %c0_86 = arith.constant 0 : index
    %190 = vector.load %arg16[%c0_85, %c0_86] : memref<8x1xf32, #tpu.memory_space<vmem>>, vector<8x1xf32>
    %191 = vector.broadcast %190 : vector<8x1xf32> to vector<8x256xf32>
    %192 = arith.addf %189, %191 : vector<8x256xf32>
    %cst_87 = arith.constant 0.000000e+00 : f32
    %193 = vector.broadcast %cst_87 : f32 to vector<8x256xf32>
    %194 = arith.cmpf ogt, %192, %193 : vector<8x256xf32>
    %c0_88 = arith.constant 0 : index
    %c0_89 = arith.constant 0 : index
    %195 = vector.load %arg17[%c0_88, %c0_89] : memref<8x1xf32, #tpu.memory_space<vmem>>, vector<8x1xf32>
    %196 = vector.broadcast %195 : vector<8x1xf32> to vector<8x256xf32>
    %197 = arith.mulf %196, %192 : vector<8x256xf32>
    %198 = arith.select %194, %192, %197 : vector<8x256xi1>, vector<8x256xf32>
    %c17_i32_90 = arith.constant 17 : i32
    %199 = tpu.dynamic_rotate %198 by %c17_i32_90 dim 1 : vector<8x256xf32>, i32 -> vector<8x256xf32>
    %200 = vector.broadcast %1 : vector<1x256xf32> to vector<8x256xf32>
    %201 = arith.mulf %199, %200 : vector<8x256xf32>
    %c16_i32_91 = arith.constant 16 : i32
    %202 = tpu.dynamic_rotate %198 by %c16_i32_91 dim 1 : vector<8x256xf32>, i32 -> vector<8x256xf32>
    %203 = vector.broadcast %3 : vector<1x256xf32> to vector<8x256xf32>
    %204 = arith.mulf %202, %203 : vector<8x256xf32>
    %c15_i32_92 = arith.constant 15 : i32
    %205 = tpu.dynamic_rotate %198 by %c15_i32_92 dim 1 : vector<8x256xf32>, i32 -> vector<8x256xf32>
    %206 = vector.broadcast %5 : vector<1x256xf32> to vector<8x256xf32>
    %207 = arith.mulf %205, %206 : vector<8x256xf32>
    %c1_i32_93 = arith.constant 1 : i32
    %208 = tpu.dynamic_rotate %198 by %c1_i32_93 dim 1 : vector<8x256xf32>, i32 -> vector<8x256xf32>
    %209 = vector.broadcast %7 : vector<1x256xf32> to vector<8x256xf32>
    %210 = arith.mulf %208, %209 : vector<8x256xf32>
    %c255_i32_94 = arith.constant 255 : i32
    %211 = tpu.dynamic_rotate %198 by %c255_i32_94 dim 1 : vector<8x256xf32>, i32 -> vector<8x256xf32>
    %212 = vector.broadcast %9 : vector<1x256xf32> to vector<8x256xf32>
    %213 = arith.mulf %211, %212 : vector<8x256xf32>
    %c241_i32_95 = arith.constant 241 : i32
    %214 = tpu.dynamic_rotate %198 by %c241_i32_95 dim 1 : vector<8x256xf32>, i32 -> vector<8x256xf32>
    %215 = vector.broadcast %11 : vector<1x256xf32> to vector<8x256xf32>
    %216 = arith.mulf %214, %215 : vector<8x256xf32>
    %c240_i32_96 = arith.constant 240 : i32
    %217 = tpu.dynamic_rotate %198 by %c240_i32_96 dim 1 : vector<8x256xf32>, i32 -> vector<8x256xf32>
    %218 = vector.broadcast %13 : vector<1x256xf32> to vector<8x256xf32>
    %219 = arith.mulf %217, %218 : vector<8x256xf32>
    %c239_i32_97 = arith.constant 239 : i32
    %220 = tpu.dynamic_rotate %198 by %c239_i32_97 dim 1 : vector<8x256xf32>, i32 -> vector<8x256xf32>
    %221 = vector.broadcast %15 : vector<1x256xf32> to vector<8x256xf32>
    %222 = arith.mulf %220, %221 : vector<8x256xf32>
    %223 = tpu.concatenate %201, %204, %207, %210, %198, %213, %216, %219, %222 in 0 : vector<8x256xf32>, vector<8x256xf32>, vector<8x256xf32>, vector<8x256xf32>, vector<8x256xf32>, vector<8x256xf32>, vector<8x256xf32>, vector<8x256xf32>, vector<8x256xf32> -> vector<72x256xf32>
    %c0_98 = arith.constant 0 : index
    %c0_99 = arith.constant 0 : index
    %224 = vector.load %arg18[%c0_98, %c0_99] : memref<8x72xf32, #tpu.memory_space<vmem>>, vector<8x72xf32>
    %cst_100 = arith.constant dense<0.000000e+00> : vector<8x256xf32>
    %225 = tpu.matmul %224, %223, %cst_100 {dimension_numbers = #tpu.dot_dimension_numbers<[1], [0], [0], [1], [0, 0, 1, 1], [], []>} : vector<8x72xf32>, vector<72x256xf32>, vector<8x256xf32> -> vector<8x256xf32>
    %c0_101 = arith.constant 0 : index
    %c0_102 = arith.constant 0 : index
    %226 = vector.load %arg19[%c0_101, %c0_102] : memref<8x1xf32, #tpu.memory_space<vmem>>, vector<8x1xf32>
    %227 = vector.broadcast %226 : vector<8x1xf32> to vector<8x256xf32>
    %228 = arith.addf %225, %227 : vector<8x256xf32>
    %cst_103 = arith.constant 0.000000e+00 : f32
    %229 = vector.broadcast %cst_103 : f32 to vector<8x256xf32>
    %230 = arith.cmpf ogt, %228, %229 : vector<8x256xf32>
    %c0_104 = arith.constant 0 : index
    %c0_105 = arith.constant 0 : index
    %231 = vector.load %arg20[%c0_104, %c0_105] : memref<8x1xf32, #tpu.memory_space<vmem>>, vector<8x1xf32>
    %232 = vector.broadcast %231 : vector<8x1xf32> to vector<8x256xf32>
    %233 = arith.mulf %232, %228 : vector<8x256xf32>
    %234 = arith.select %230, %228, %233 : vector<8x256xi1>, vector<8x256xf32>
    %235 = tpu.concatenate %162, %198, %234 in 0 : vector<8x256xf32>, vector<8x256xf32>, vector<8x256xf32> -> vector<24x256xf32>
    %c17_i32_106 = arith.constant 17 : i32
    %236 = tpu.dynamic_rotate %235 by %c17_i32_106 dim 1 : vector<24x256xf32>, i32 -> vector<24x256xf32>
    %237 = vector.broadcast %1 : vector<1x256xf32> to vector<24x256xf32>
    %238 = arith.mulf %236, %237 : vector<24x256xf32>
    %c16_i32_107 = arith.constant 16 : i32
    %239 = tpu.dynamic_rotate %235 by %c16_i32_107 dim 1 : vector<24x256xf32>, i32 -> vector<24x256xf32>
    %240 = vector.broadcast %3 : vector<1x256xf32> to vector<24x256xf32>
    %241 = arith.mulf %239, %240 : vector<24x256xf32>
    %c15_i32_108 = arith.constant 15 : i32
    %242 = tpu.dynamic_rotate %235 by %c15_i32_108 dim 1 : vector<24x256xf32>, i32 -> vector<24x256xf32>
    %243 = vector.broadcast %5 : vector<1x256xf32> to vector<24x256xf32>
    %244 = arith.mulf %242, %243 : vector<24x256xf32>
    %c1_i32_109 = arith.constant 1 : i32
    %245 = tpu.dynamic_rotate %235 by %c1_i32_109 dim 1 : vector<24x256xf32>, i32 -> vector<24x256xf32>
    %246 = vector.broadcast %7 : vector<1x256xf32> to vector<24x256xf32>
    %247 = arith.mulf %245, %246 : vector<24x256xf32>
    %c255_i32_110 = arith.constant 255 : i32
    %248 = tpu.dynamic_rotate %235 by %c255_i32_110 dim 1 : vector<24x256xf32>, i32 -> vector<24x256xf32>
    %249 = vector.broadcast %9 : vector<1x256xf32> to vector<24x256xf32>
    %250 = arith.mulf %248, %249 : vector<24x256xf32>
    %c241_i32_111 = arith.constant 241 : i32
    %251 = tpu.dynamic_rotate %235 by %c241_i32_111 dim 1 : vector<24x256xf32>, i32 -> vector<24x256xf32>
    %252 = vector.broadcast %11 : vector<1x256xf32> to vector<24x256xf32>
    %253 = arith.mulf %251, %252 : vector<24x256xf32>
    %c240_i32_112 = arith.constant 240 : i32
    %254 = tpu.dynamic_rotate %235 by %c240_i32_112 dim 1 : vector<24x256xf32>, i32 -> vector<24x256xf32>
    %255 = vector.broadcast %13 : vector<1x256xf32> to vector<24x256xf32>
    %256 = arith.mulf %254, %255 : vector<24x256xf32>
    %c239_i32_113 = arith.constant 239 : i32
    %257 = tpu.dynamic_rotate %235 by %c239_i32_113 dim 1 : vector<24x256xf32>, i32 -> vector<24x256xf32>
    %258 = vector.broadcast %15 : vector<1x256xf32> to vector<24x256xf32>
    %259 = arith.mulf %257, %258 : vector<24x256xf32>
    %260 = tpu.concatenate %238, %241, %244, %247, %235, %250, %253, %256, %259 in 0 : vector<24x256xf32>, vector<24x256xf32>, vector<24x256xf32>, vector<24x256xf32>, vector<24x256xf32>, vector<24x256xf32>, vector<24x256xf32>, vector<24x256xf32>, vector<24x256xf32> -> vector<216x256xf32>
    %c0_114 = arith.constant 0 : index
    %c0_115 = arith.constant 0 : index
    %261 = vector.load %arg21[%c0_114, %c0_115] : memref<8x216xf32, #tpu.memory_space<vmem>>, vector<8x216xf32>
    %cst_116 = arith.constant dense<0.000000e+00> : vector<8x256xf32>
    %262 = tpu.matmul %261, %260, %cst_116 {dimension_numbers = #tpu.dot_dimension_numbers<[1], [0], [0], [1], [0, 0, 1, 1], [], []>} : vector<8x216xf32>, vector<216x256xf32>, vector<8x256xf32> -> vector<8x256xf32>
    %c0_117 = arith.constant 0 : index
    %c0_118 = arith.constant 0 : index
    %263 = vector.load %arg22[%c0_117, %c0_118] : memref<8x1xf32, #tpu.memory_space<vmem>>, vector<8x1xf32>
    %264 = vector.broadcast %263 : vector<8x1xf32> to vector<8x256xf32>
    %265 = arith.addf %262, %264 : vector<8x256xf32>
    %cst_119 = arith.constant 0.000000e+00 : f32
    %266 = vector.broadcast %cst_119 : f32 to vector<8x256xf32>
    %267 = arith.cmpf ogt, %265, %266 : vector<8x256xf32>
    %c0_120 = arith.constant 0 : index
    %c0_121 = arith.constant 0 : index
    %268 = vector.load %arg23[%c0_120, %c0_121] : memref<8x1xf32, #tpu.memory_space<vmem>>, vector<8x1xf32>
    %269 = vector.broadcast %268 : vector<8x1xf32> to vector<8x256xf32>
    %270 = arith.mulf %269, %265 : vector<8x256xf32>
    %271 = arith.select %267, %265, %270 : vector<8x256xi1>, vector<8x256xf32>
    %c17_i32_122 = arith.constant 17 : i32
    %272 = tpu.dynamic_rotate %271 by %c17_i32_122 dim 1 : vector<8x256xf32>, i32 -> vector<8x256xf32>
    %273 = vector.broadcast %1 : vector<1x256xf32> to vector<8x256xf32>
    %274 = arith.mulf %272, %273 : vector<8x256xf32>
    %c16_i32_123 = arith.constant 16 : i32
    %275 = tpu.dynamic_rotate %271 by %c16_i32_123 dim 1 : vector<8x256xf32>, i32 -> vector<8x256xf32>
    %276 = vector.broadcast %3 : vector<1x256xf32> to vector<8x256xf32>
    %277 = arith.mulf %275, %276 : vector<8x256xf32>
    %c15_i32_124 = arith.constant 15 : i32
    %278 = tpu.dynamic_rotate %271 by %c15_i32_124 dim 1 : vector<8x256xf32>, i32 -> vector<8x256xf32>
    %279 = vector.broadcast %5 : vector<1x256xf32> to vector<8x256xf32>
    %280 = arith.mulf %278, %279 : vector<8x256xf32>
    %c1_i32_125 = arith.constant 1 : i32
    %281 = tpu.dynamic_rotate %271 by %c1_i32_125 dim 1 : vector<8x256xf32>, i32 -> vector<8x256xf32>
    %282 = vector.broadcast %7 : vector<1x256xf32> to vector<8x256xf32>
    %283 = arith.mulf %281, %282 : vector<8x256xf32>
    %c255_i32_126 = arith.constant 255 : i32
    %284 = tpu.dynamic_rotate %271 by %c255_i32_126 dim 1 : vector<8x256xf32>, i32 -> vector<8x256xf32>
    %285 = vector.broadcast %9 : vector<1x256xf32> to vector<8x256xf32>
    %286 = arith.mulf %284, %285 : vector<8x256xf32>
    %c241_i32_127 = arith.constant 241 : i32
    %287 = tpu.dynamic_rotate %271 by %c241_i32_127 dim 1 : vector<8x256xf32>, i32 -> vector<8x256xf32>
    %288 = vector.broadcast %11 : vector<1x256xf32> to vector<8x256xf32>
    %289 = arith.mulf %287, %288 : vector<8x256xf32>
    %c240_i32_128 = arith.constant 240 : i32
    %290 = tpu.dynamic_rotate %271 by %c240_i32_128 dim 1 : vector<8x256xf32>, i32 -> vector<8x256xf32>
    %291 = vector.broadcast %13 : vector<1x256xf32> to vector<8x256xf32>
    %292 = arith.mulf %290, %291 : vector<8x256xf32>
    %c239_i32_129 = arith.constant 239 : i32
    %293 = tpu.dynamic_rotate %271 by %c239_i32_129 dim 1 : vector<8x256xf32>, i32 -> vector<8x256xf32>
    %294 = vector.broadcast %15 : vector<1x256xf32> to vector<8x256xf32>
    %295 = arith.mulf %293, %294 : vector<8x256xf32>
    %296 = tpu.concatenate %274, %277, %280, %283, %271, %286, %289, %292, %295 in 0 : vector<8x256xf32>, vector<8x256xf32>, vector<8x256xf32>, vector<8x256xf32>, vector<8x256xf32>, vector<8x256xf32>, vector<8x256xf32>, vector<8x256xf32>, vector<8x256xf32> -> vector<72x256xf32>
    %c0_130 = arith.constant 0 : index
    %c0_131 = arith.constant 0 : index
    %297 = vector.load %arg24[%c0_130, %c0_131] : memref<8x72xf32, #tpu.memory_space<vmem>>, vector<8x72xf32>
    %cst_132 = arith.constant dense<0.000000e+00> : vector<8x256xf32>
    %298 = tpu.matmul %297, %296, %cst_132 {dimension_numbers = #tpu.dot_dimension_numbers<[1], [0], [0], [1], [0, 0, 1, 1], [], []>} : vector<8x72xf32>, vector<72x256xf32>, vector<8x256xf32> -> vector<8x256xf32>
    %c0_133 = arith.constant 0 : index
    %c0_134 = arith.constant 0 : index
    %299 = vector.load %arg25[%c0_133, %c0_134] : memref<8x1xf32, #tpu.memory_space<vmem>>, vector<8x1xf32>
    %300 = vector.broadcast %299 : vector<8x1xf32> to vector<8x256xf32>
    %301 = arith.addf %298, %300 : vector<8x256xf32>
    %cst_135 = arith.constant 0.000000e+00 : f32
    %302 = vector.broadcast %cst_135 : f32 to vector<8x256xf32>
    %303 = arith.cmpf ogt, %301, %302 : vector<8x256xf32>
    %c0_136 = arith.constant 0 : index
    %c0_137 = arith.constant 0 : index
    %304 = vector.load %arg26[%c0_136, %c0_137] : memref<8x1xf32, #tpu.memory_space<vmem>>, vector<8x1xf32>
    %305 = vector.broadcast %304 : vector<8x1xf32> to vector<8x256xf32>
    %306 = arith.mulf %305, %301 : vector<8x256xf32>
    %307 = arith.select %303, %301, %306 : vector<8x256xi1>, vector<8x256xf32>
    %c17_i32_138 = arith.constant 17 : i32
    %308 = tpu.dynamic_rotate %307 by %c17_i32_138 dim 1 : vector<8x256xf32>, i32 -> vector<8x256xf32>
    %309 = vector.broadcast %1 : vector<1x256xf32> to vector<8x256xf32>
    %310 = arith.mulf %308, %309 : vector<8x256xf32>
    %c16_i32_139 = arith.constant 16 : i32
    %311 = tpu.dynamic_rotate %307 by %c16_i32_139 dim 1 : vector<8x256xf32>, i32 -> vector<8x256xf32>
    %312 = vector.broadcast %3 : vector<1x256xf32> to vector<8x256xf32>
    %313 = arith.mulf %311, %312 : vector<8x256xf32>
    %c15_i32_140 = arith.constant 15 : i32
    %314 = tpu.dynamic_rotate %307 by %c15_i32_140 dim 1 : vector<8x256xf32>, i32 -> vector<8x256xf32>
    %315 = vector.broadcast %5 : vector<1x256xf32> to vector<8x256xf32>
    %316 = arith.mulf %314, %315 : vector<8x256xf32>
    %c1_i32_141 = arith.constant 1 : i32
    %317 = tpu.dynamic_rotate %307 by %c1_i32_141 dim 1 : vector<8x256xf32>, i32 -> vector<8x256xf32>
    %318 = vector.broadcast %7 : vector<1x256xf32> to vector<8x256xf32>
    %319 = arith.mulf %317, %318 : vector<8x256xf32>
    %c255_i32_142 = arith.constant 255 : i32
    %320 = tpu.dynamic_rotate %307 by %c255_i32_142 dim 1 : vector<8x256xf32>, i32 -> vector<8x256xf32>
    %321 = vector.broadcast %9 : vector<1x256xf32> to vector<8x256xf32>
    %322 = arith.mulf %320, %321 : vector<8x256xf32>
    %c241_i32_143 = arith.constant 241 : i32
    %323 = tpu.dynamic_rotate %307 by %c241_i32_143 dim 1 : vector<8x256xf32>, i32 -> vector<8x256xf32>
    %324 = vector.broadcast %11 : vector<1x256xf32> to vector<8x256xf32>
    %325 = arith.mulf %323, %324 : vector<8x256xf32>
    %c240_i32_144 = arith.constant 240 : i32
    %326 = tpu.dynamic_rotate %307 by %c240_i32_144 dim 1 : vector<8x256xf32>, i32 -> vector<8x256xf32>
    %327 = vector.broadcast %13 : vector<1x256xf32> to vector<8x256xf32>
    %328 = arith.mulf %326, %327 : vector<8x256xf32>
    %c239_i32_145 = arith.constant 239 : i32
    %329 = tpu.dynamic_rotate %307 by %c239_i32_145 dim 1 : vector<8x256xf32>, i32 -> vector<8x256xf32>
    %330 = vector.broadcast %15 : vector<1x256xf32> to vector<8x256xf32>
    %331 = arith.mulf %329, %330 : vector<8x256xf32>
    %332 = tpu.concatenate %310, %313, %316, %319, %307, %322, %325, %328, %331 in 0 : vector<8x256xf32>, vector<8x256xf32>, vector<8x256xf32>, vector<8x256xf32>, vector<8x256xf32>, vector<8x256xf32>, vector<8x256xf32>, vector<8x256xf32>, vector<8x256xf32> -> vector<72x256xf32>
    %c0_146 = arith.constant 0 : index
    %c0_147 = arith.constant 0 : index
    %333 = vector.load %arg27[%c0_146, %c0_147] : memref<8x72xf32, #tpu.memory_space<vmem>>, vector<8x72xf32>
    %cst_148 = arith.constant dense<0.000000e+00> : vector<8x256xf32>
    %334 = tpu.matmul %333, %332, %cst_148 {dimension_numbers = #tpu.dot_dimension_numbers<[1], [0], [0], [1], [0, 0, 1, 1], [], []>} : vector<8x72xf32>, vector<72x256xf32>, vector<8x256xf32> -> vector<8x256xf32>
    %c0_149 = arith.constant 0 : index
    %c0_150 = arith.constant 0 : index
    %335 = vector.load %arg28[%c0_149, %c0_150] : memref<8x1xf32, #tpu.memory_space<vmem>>, vector<8x1xf32>
    %336 = vector.broadcast %335 : vector<8x1xf32> to vector<8x256xf32>
    %337 = arith.addf %334, %336 : vector<8x256xf32>
    %cst_151 = arith.constant 0.000000e+00 : f32
    %338 = vector.broadcast %cst_151 : f32 to vector<8x256xf32>
    %339 = arith.cmpf ogt, %337, %338 : vector<8x256xf32>
    %c0_152 = arith.constant 0 : index
    %c0_153 = arith.constant 0 : index
    %340 = vector.load %arg29[%c0_152, %c0_153] : memref<8x1xf32, #tpu.memory_space<vmem>>, vector<8x1xf32>
    %341 = vector.broadcast %340 : vector<8x1xf32> to vector<8x256xf32>
    %342 = arith.mulf %341, %337 : vector<8x256xf32>
    %343 = arith.select %339, %337, %342 : vector<8x256xi1>, vector<8x256xf32>
    %344 = tpu.concatenate %271, %307, %343 in 0 : vector<8x256xf32>, vector<8x256xf32>, vector<8x256xf32> -> vector<24x256xf32>
    %c0_154 = arith.constant 0 : index
    %c0_155 = arith.constant 0 : index
    %345 = vector.load %arg30[%c0_154, %c0_155] : memref<16x24xf32, #tpu.memory_space<vmem>>, vector<16x24xf32>
    %cst_156 = arith.constant dense<0.000000e+00> : vector<16x256xf32>
    %346 = tpu.matmul %345, %344, %cst_156 {dimension_numbers = #tpu.dot_dimension_numbers<[1], [0], [0], [1], [0, 0, 1, 1], [], []>} : vector<16x24xf32>, vector<24x256xf32>, vector<16x256xf32> -> vector<16x256xf32>
    %c0_157 = arith.constant 0 : index
    %c0_158 = arith.constant 0 : index
    %347 = vector.load %arg31[%c0_157, %c0_158] : memref<16x1xf32, #tpu.memory_space<vmem>>, vector<16x1xf32>
    %348 = vector.broadcast %347 : vector<16x1xf32> to vector<16x256xf32>
    %349 = arith.addf %346, %348 : vector<16x256xf32>
    %cst_159 = arith.constant 0.000000e+00 : f32
    %350 = vector.broadcast %cst_159 : f32 to vector<16x256xf32>
    %351 = arith.cmpf ogt, %349, %350 : vector<16x256xf32>
    %c0_160 = arith.constant 0 : index
    %c0_161 = arith.constant 0 : index
    %352 = vector.load %arg32[%c0_160, %c0_161] : memref<16x1xf32, #tpu.memory_space<vmem>>, vector<16x1xf32>
    %353 = vector.broadcast %352 : vector<16x1xf32> to vector<16x256xf32>
    %354 = arith.mulf %353, %349 : vector<16x256xf32>
    %355 = arith.select %351, %349, %354 : vector<16x256xi1>, vector<16x256xf32>
    %c0_162 = arith.constant 0 : index
    %c0_163 = arith.constant 0 : index
    %356 = vector.load %arg33[%c0_162, %c0_163] : memref<4x16xf32, #tpu.memory_space<vmem>>, vector<4x16xf32>
    %cst_164 = arith.constant dense<0.000000e+00> : vector<4x256xf32>
    %357 = tpu.matmul %356, %355, %cst_164 {dimension_numbers = #tpu.dot_dimension_numbers<[1], [0], [0], [1], [0, 0, 1, 1], [], []>} : vector<4x16xf32>, vector<16x256xf32>, vector<4x256xf32> -> vector<4x256xf32>
    %c0_165 = arith.constant 0 : index
    %c0_166 = arith.constant 0 : index
    %358 = vector.load %arg34[%c0_165, %c0_166] : memref<4x1xf32, #tpu.memory_space<vmem>>, vector<4x1xf32>
    %359 = vector.broadcast %358 : vector<4x1xf32> to vector<4x256xf32>
    %360 = arith.addf %357, %359 : vector<4x256xf32>
    %c0_167 = arith.constant 0 : index
    %c0_168 = arith.constant 0 : index
    %c0_169 = arith.constant 0 : index
    %361 = vector.load %arg35[%c0_167, %c0_168, %c0_169] : memref<1x4x256xf32, #tpu.memory_space<vmem>>, vector<1x4x256xf32>
    %362 = vector.shape_cast %361 : vector<1x4x256xf32> to vector<4x256xf32>
    %363 = vector.shape_cast %360 : vector<4x256xf32> to vector<1x4x256xf32>
    tpu.vector_store %arg35[%c0_167, %c0_168, %c0_169], %363 {strides = array<i32>} : memref<1x4x256xf32, #tpu.memory_space<vmem>>, vector<1x4x256xf32>,
    return
  }
  func.func @transform_0(%arg0: i32) -> (i32, i32, i32) {
    %c0_i32 = arith.constant 0 : i32
    %c0_i32_0 = arith.constant 0 : i32
    %c0_i32_1 = arith.constant 0 : i32
    %c0_i32_2 = arith.constant 0 : i32
    return %c0_i32, %c0_i32_0, %c0_i32_1 : i32, i32, i32
  }
  func.func @transform_1(%arg0: i32) -> (i32, i32, i32) {
    %c0_i32 = arith.constant 0 : i32
    %c0_i32_0 = arith.constant 0 : i32
    %c0_i32_1 = arith.constant 0 : i32
    return %arg0, %c0_i32, %c0_i32_0 : i32, i32, i32
  }
  func.func @transform_2(%arg0: i32) -> (i32, i32) {
    %c0_i32 = arith.constant 0 : i32
    %c0_i32_0 = arith.constant 0 : i32
    %c0_i32_1 = arith.constant 0 : i32
    return %c0_i32, %c0_i32_0 : i32, i32
  }
  func.func @transform_3(%arg0: i32) -> (i32, i32) {
    %c0_i32 = arith.constant 0 : i32
    %c0_i32_0 = arith.constant 0 : i32
    %c0_i32_1 = arith.constant 0 : i32
    return %c0_i32, %c0_i32_0 : i32, i32
  }
  func.func @transform_4(%arg0: i32) -> (i32, i32) {
    %c0_i32 = arith.constant 0 : i32
    %c0_i32_0 = arith.constant 0 : i32
    %c0_i32_1 = arith.constant 0 : i32
    return %c0_i32, %c0_i32_0 : i32, i32
  }
  func.func @transform_5(%arg0: i32) -> (i32, i32) {
    %c0_i32 = arith.constant 0 : i32
    %c0_i32_0 = arith.constant 0 : i32
    %c0_i32_1 = arith.constant 0 : i32
    return %c0_i32, %c0_i32_0 : i32, i32
  }
  func.func @transform_6(%arg0: i32) -> (i32, i32) {
    %c0_i32 = arith.constant 0 : i32
    %c0_i32_0 = arith.constant 0 : i32
    %c0_i32_1 = arith.constant 0 : i32
    return %c0_i32, %c0_i32_0 : i32, i32
  }
  func.func @transform_7(%arg0: i32) -> (i32, i32) {
    %c0_i32 = arith.constant 0 : i32
    %c0_i32_0 = arith.constant 0 : i32
    %c0_i32_1 = arith.constant 0 : i32
    return %c0_i32, %c0_i32_0 : i32, i32
  }
  func.func @transform_8(%arg0: i32) -> (i32, i32) {
    %c0_i32 = arith.constant 0 : i32
    %c0_i32_0 = arith.constant 0 : i32
    %c0_i32_1 = arith.constant 0 : i32
    return %c0_i32, %c0_i32_0 : i32, i32
  }
  func.func @transform_9(%arg0: i32) -> (i32, i32) {
    %c0_i32 = arith.constant 0 : i32
    %c0_i32_0 = arith.constant 0 : i32
    %c0_i32_1 = arith.constant 0 : i32
    return %c0_i32, %c0_i32_0 : i32, i32
  }
  func.func @transform_10(%arg0: i32) -> (i32, i32) {
    %c0_i32 = arith.constant 0 : i32
    %c0_i32_0 = arith.constant 0 : i32
    %c0_i32_1 = arith.constant 0 : i32
    return %c0_i32, %c0_i32_0 : i32, i32
  }
  func.func @transform_11(%arg0: i32) -> (i32, i32) {
    %c0_i32 = arith.constant 0 : i32
    %c0_i32_0 = arith.constant 0 : i32
    %c0_i32_1 = arith.constant 0 : i32
    return %c0_i32, %c0_i32_0 : i32, i32
  }
  func.func @transform_12(%arg0: i32) -> (i32, i32) {
    %c0_i32 = arith.constant 0 : i32
    %c0_i32_0 = arith.constant 0 : i32
    %c0_i32_1 = arith.constant 0 : i32
    return %c0_i32, %c0_i32_0 : i32, i32
  }
  func.func @transform_13(%arg0: i32) -> (i32, i32) {
    %c0_i32 = arith.constant 0 : i32
    %c0_i32_0 = arith.constant 0 : i32
    %c0_i32_1 = arith.constant 0 : i32
    return %c0_i32, %c0_i32_0 : i32, i32
  }
  func.func @transform_14(%arg0: i32) -> (i32, i32) {
    %c0_i32 = arith.constant 0 : i32
    %c0_i32_0 = arith.constant 0 : i32
    %c0_i32_1 = arith.constant 0 : i32
    return %c0_i32, %c0_i32_0 : i32, i32
  }
  func.func @transform_15(%arg0: i32) -> (i32, i32) {
    %c0_i32 = arith.constant 0 : i32
    %c0_i32_0 = arith.constant 0 : i32
    %c0_i32_1 = arith.constant 0 : i32
    return %c0_i32, %c0_i32_0 : i32, i32
  }
  func.func @transform_16(%arg0: i32) -> (i32, i32) {
    %c0_i32 = arith.constant 0 : i32
    %c0_i32_0 = arith.constant 0 : i32
    %c0_i32_1 = arith.constant 0 : i32
    return %c0_i32, %c0_i32_0 : i32, i32
  }
  func.func @transform_17(%arg0: i32) -> (i32, i32) {
    %c0_i32 = arith.constant 0 : i32
    %c0_i32_0 = arith.constant 0 : i32
    %c0_i32_1 = arith.constant 0 : i32
    return %c0_i32, %c0_i32_0 : i32, i32
  }
  func.func @transform_18(%arg0: i32) -> (i32, i32) {
    %c0_i32 = arith.constant 0 : i32
    %c0_i32_0 = arith.constant 0 : i32
    %c0_i32_1 = arith.constant 0 : i32
    return %c0_i32, %c0_i32_0 : i32, i32
  }
  func.func @transform_19(%arg0: i32) -> (i32, i32) {
    %c0_i32 = arith.constant 0 : i32
    %c0_i32_0 = arith.constant 0 : i32
    %c0_i32_1 = arith.constant 0 : i32
    return %c0_i32, %c0_i32_0 : i32, i32
  }
  func.func @transform_20(%arg0: i32) -> (i32, i32) {
    %c0_i32 = arith.constant 0 : i32
    %c0_i32_0 = arith.constant 0 : i32
    %c0_i32_1 = arith.constant 0 : i32
    return %c0_i32, %c0_i32_0 : i32, i32
  }
  func.func @transform_21(%arg0: i32) -> (i32, i32) {
    %c0_i32 = arith.constant 0 : i32
    %c0_i32_0 = arith.constant 0 : i32
    %c0_i32_1 = arith.constant 0 : i32
    return %c0_i32, %c0_i32_0 : i32, i32
  }
  func.func @transform_22(%arg0: i32) -> (i32, i32) {
    %c0_i32 = arith.constant 0 : i32
    %c0_i32_0 = arith.constant 0 : i32
    %c0_i32_1 = arith.constant 0 : i32
    return %c0_i32, %c0_i32_0 : i32, i32
  }
  func.func @transform_23(%arg0: i32) -> (i32, i32) {
    %c0_i32 = arith.constant 0 : i32
    %c0_i32_0 = arith.constant 0 : i32
    %c0_i32_1 = arith.constant 0 : i32
    return %c0_i32, %c0_i32_0 : i32, i32
  }
  func.func @transform_24(%arg0: i32) -> (i32, i32) {
    %c0_i32 = arith.constant 0 : i32
    %c0_i32_0 = arith.constant 0 : i32
    %c0_i32_1 = arith.constant 0 : i32
    return %c0_i32, %c0_i32_0 : i32, i32
  }
  func.func @transform_25(%arg0: i32) -> (i32, i32) {
    %c0_i32 = arith.constant 0 : i32
    %c0_i32_0 = arith.constant 0 : i32
    %c0_i32_1 = arith.constant 0 : i32
    return %c0_i32, %c0_i32_0 : i32, i32
  }
  func.func @transform_26(%arg0: i32) -> (i32, i32) {
    %c0_i32 = arith.constant 0 : i32
    %c0_i32_0 = arith.constant 0 : i32
    %c0_i32_1 = arith.constant 0 : i32
    return %c0_i32, %c0_i32_0 : i32, i32
  }
  func.func @transform_27(%arg0: i32) -> (i32, i32) {
    %c0_i32 = arith.constant 0 : i32
    %c0_i32_0 = arith.constant 0 : i32
    %c0_i32_1 = arith.constant 0 : i32
    return %c0_i32, %c0_i32_0 : i32, i32
  }
  func.func @transform_28(%arg0: i32) -> (i32, i32) {
    %c0_i32 = arith.constant 0 : i32
    %c0_i32_0 = arith.constant 0 : i32
    %c0_i32_1 = arith.constant 0 : i32
    return %c0_i32, %c0_i32_0 : i32, i32
  }
  func.func @transform_29(%arg0: i32) -> (i32, i32) {
    %c0_i32 = arith.constant 0 : i32
    %c0_i32_0 = arith.constant 0 : i32
    %c0_i32_1 = arith.constant 0 : i32
    return %c0_i32, %c0_i32_0 : i32, i32
  }
  func.func @transform_30(%arg0: i32) -> (i32, i32) {
    %c0_i32 = arith.constant 0 : i32
    %c0_i32_0 = arith.constant 0 : i32
    %c0_i32_1 = arith.constant 0 : i32
    return %c0_i32, %c0_i32_0 : i32, i32
  }
  func.func @transform_31(%arg0: i32) -> (i32, i32) {
    %c0_i32 = arith.constant 0 : i32
    %c0_i32_0 = arith.constant 0 : i32
    %c0_i32_1 = arith.constant 0 : i32
    return %c0_i32, %c0_i32_0 : i32, i32
  }
  func.func @transform_32(%arg0: i32) -> (i32, i32) {
    %c0_i32 = arith.constant 0 : i32
    %c0_i32_0 = arith.constant 0 : i32
    %c0_i32_1 = arith.constant 0 : i32
    return %c0_i32, %c0_i32_0 : i32, i32
  }
  func.func @transform_33(%arg0: i32) -> (i32, i32) {
    %c0_i32 = arith.constant 0 : i32
    %c0_i32_0 = arith.constant 0 : i32
    %c0_i32_1 = arith.constant 0 : i32
    return %c0_i32, %c0_i32_0 : i32, i32
  }
  func.func @transform_34(%arg0: i32) -> (i32, i32, i32) {
    %c0_i32 = arith.constant 0 : i32
    %c0_i32_0 = arith.constant 0 : i32
    %c0_i32_1 = arith.constant 0 : i32
    return %arg0, %c0_i32, %c0_i32_0 : i32, i32, i32
  }
}

</mosaic_0001>

<llo_original>
// kernel: ablock3x3_forward.1
$region0: #{ablock3x3_forward.1}
  #allocation0 [shape = 'u32[]', space=smem, size = 0x4, offset = 0x4, fixed_abs, tag = 'smem constant byte address 0x4 - core index']
  #allocation1 [shape = 'u32[144,128]{1,0:T(1,128)}', space=vmem, size = 0x12000, scoped, tag = 'internal scratch']
  %s0 = inlined_call_operand.smem [shape: u32[35], index: -1, kind: input, shape index: {}]
  %s1 = sld [smem:[%s0]]
  %s2 = scalar_lea.smem %s0, 1
  %s3 = sld [smem:[%s2]]
  %s4 = scalar_lea.smem %s0, 2
  %s5 = sld [smem:[%s4]]
  %s6 = scalar_lea.smem %s0, 3
  %s7 = sld [smem:[%s6]]
  %s8 = scalar_lea.smem %s0, 4
  %s9 = sld [smem:[%s8]]
  %s10 = scalar_lea.smem %s0, 5
  %s11 = sld [smem:[%s10]]
  %s12 = scalar_lea.smem %s0, 6
  %s13 = sld [smem:[%s12]]
  %s14 = scalar_lea.smem %s0, 7
  %s15 = sld [smem:[%s14]]
  %s16 = scalar_lea.smem %s0, 8
  %s17 = sld [smem:[%s16]]
  %s18 = scalar_lea.smem %s0, 9
  %s19 = sld [smem:[%s18]]
  %s20 = scalar_lea.smem %s0, 10
  %s21 = sld [smem:[%s20]]
  %s22 = scalar_lea.smem %s0, 11
  %s23 = sld [smem:[%s22]]
  %s24 = scalar_lea.smem %s0, 12
  %s25 = sld [smem:[%s24]]
  %s26 = scalar_lea.smem %s0, 13
  %s27 = sld [smem:[%s26]]
  %s28 = scalar_lea.smem %s0, 14
  %s29 = sld [smem:[%s28]]
  %s30 = scalar_lea.smem %s0, 15
  %s31 = sld [smem:[%s30]]
  %s32 = scalar_lea.smem %s0, 16
  %s33 = sld [smem:[%s32]]
  %s34 = scalar_lea.smem %s0, 17
  %s35 = sld [smem:[%s34]]
  %s36 = scalar_lea.smem %s0, 18
  %s37 = sld [smem:[%s36]]
  %s38 = scalar_lea.smem %s0, 19
  %s39 = sld [smem:[%s38]]
  %s40 = scalar_lea.smem %s0, 20
  %s41 = sld [smem:[%s40]]
  %s42 = scalar_lea.smem %s0, 21
  %s43 = sld [smem:[%s42]]
  %s44 = scalar_lea.smem %s0, 22
  %s45 = sld [smem:[%s44]]
  %s46 = scalar_lea.smem %s0, 23
  %s47 = sld [smem:[%s46]]
  %s48 = scalar_lea.smem %s0, 24
  %s49 = sld [smem:[%s48]]
  %s50 = scalar_lea.smem %s0, 25
  %s51 = sld [smem:[%s50]]
  %s52 = scalar_lea.smem %s0, 26
  %s53 = sld [smem:[%s52]]
  %s54 = scalar_lea.smem %s0, 27
  %s55 = sld [smem:[%s54]]
  %s56 = scalar_lea.smem %s0, 28
  %s57 = sld [smem:[%s56]]
  %s58 = scalar_lea.smem %s0, 29
  %s59 = sld [smem:[%s58]]
  %s60 = scalar_lea.smem %s0, 30
  %s61 = sld [smem:[%s60]]
  %s62 = scalar_lea.smem %s0, 31
  %s63 = sld [smem:[%s62]]
  %s64 = scalar_lea.smem %s0, 32
  %s65 = sld [smem:[%s64]]
  %s66 = scalar_lea.smem %s0, 33
  %s67 = sld [smem:[%s66]]
  %s68 = scalar_lea.smem %s0, 34
  %s69 = sld [smem:[%s68]]
  %s70 = sld [smem:[#allocation0]]
  $region169: #{ablock3x3_forward.1} parent=0
    _
  %s72 = ssub.s32 1, %s70
  %s73 = scalar_select 0, %s72, %s70
  loop: start=0, step=1, limit=4
  $region2: #{ablock3x3_forward.1} parent=0 // loop_pre_header
    _
  $region3: #{ablock3x3_forward.1} parent=0 // loop_header
    %s75 = sphi 0, %s79
    %p76 = scmp.ge.s32.totalorder %s75, 4
    %s83 = sphi 0, %s83
    %s85 = sphi 0, %s83
    %s86 = sphi 0, %s85
    %s100 = sphi 0, %s86
    %s106 = sphi 0, %s108
    %s109 = sphi 0, %s106
    %s110 = sphi 0, %s109
    %s126 = sphi 0, %s110
    %s130 = sphi 0, %s130
    %s132 = sphi 0, %s130
    %s133 = sphi 0, %s132
    %s147 = sphi 0, %s133
    %s151 = sphi 0, %s151
    %s153 = sphi 0, %s151
    %s154 = sphi 0, %s153
    %s168 = sphi 0, %s154
    %s172 = sphi 0, %s172
    %s174 = sphi 0, %s172
    %s175 = sphi 0, %s174
    %s189 = sphi 0, %s175
    %s193 = sphi 0, %s193
    %s195 = sphi 0, %s193
    %s196 = sphi 0, %s195
    %s210 = sphi 0, %s196
    %s214 = sphi 0, %s214
    %s216 = sphi 0, %s214
    %s217 = sphi 0, %s216
    %s231 = sphi 0, %s217
    %s235 = sphi 0, %s235
    %s237 = sphi 0, %s235
    %s238 = sphi 0, %s237
    %s252 = sphi 0, %s238
    %s256 = sphi 0, %s256
    %s258 = sphi 0, %s256
    %s259 = sphi 0, %s258
    %s273 = sphi 0, %s259
    %s277 = sphi 0, %s277
    %s279 = sphi 0, %s277
    %s280 = sphi 0, %s279
    %s294 = sphi 0, %s280
    %s298 = sphi 0, %s298
    %s300 = sphi 0, %s298
    %s301 = sphi 0, %s300
    %s315 = sphi 0, %s301
    %s319 = sphi 0, %s319
    %s321 = sphi 0, %s319
    %s322 = sphi 0, %s321
    %s336 = sphi 0, %s322
    %s340 = sphi 0, %s340
    %s342 = sphi 0, %s340
    %s343 = sphi 0, %s342
    %s357 = sphi 0, %s343
    %s361 = sphi 0, %s361
    %s363 = sphi 0, %s361
    %s364 = sphi 0, %s363
    %s378 = sphi 0, %s364
    %s382 = sphi 0, %s382
    %s384 = sphi 0, %s382
    %s385 = sphi 0, %s384
    %s399 = sphi 0, %s385
    %s403 = sphi 0, %s403
    %s405 = sphi 0, %s403
    %s406 = sphi 0, %s405
    %s420 = sphi 0, %s406
    %s424 = sphi 0, %s424
    %s426 = sphi 0, %s424
    %s427 = sphi 0, %s426
    %s441 = sphi 0, %s427
    %s445 = sphi 0, %s445
    %s447 = sphi 0, %s445
    %s448 = sphi 0, %s447
    %s462 = sphi 0, %s448
    %s466 = sphi 0, %s466
    %s468 = sphi 0, %s466
    %s469 = sphi 0, %s468
    %s483 = sphi 0, %s469
    %s487 = sphi 0, %s487
    %s489 = sphi 0, %s487
    %s490 = sphi 0, %s489
    %s504 = sphi 0, %s490
    %s508 = sphi 0, %s508
    %s510 = sphi 0, %s508
    %s511 = sphi 0, %s510
    %s525 = sphi 0, %s511
    %s529 = sphi 0, %s529
    %s531 = sphi 0, %s529
    %s532 = sphi 0, %s531
    %s546 = sphi 0, %s532
    %s550 = sphi 0, %s550
    %s552 = sphi 0, %s550
    %s553 = sphi 0, %s552
    %s567 = sphi 0, %s553
    %s571 = sphi 0, %s571
    %s573 = sphi 0, %s571
    %s574 = sphi 0, %s573
    %s588 = sphi 0, %s574
    %s592 = sphi 0, %s592
    %s594 = sphi 0, %s592
    %s595 = sphi 0, %s594
    %s609 = sphi 0, %s595
    %s613 = sphi 0, %s613
    %s615 = sphi 0, %s613
    %s616 = sphi 0, %s615
    %s630 = sphi 0, %s616
    %s634 = sphi 0, %s634
    %s636 = sphi 0, %s634
    %s637 = sphi 0, %s636
    %s651 = sphi 0, %s637
    %s655 = sphi 0, %s655
    %s657 = sphi 0, %s655
    %s658 = sphi 0, %s657
    %s672 = sphi 0, %s658
    %s676 = sphi 0, %s676
    %s678 = sphi 0, %s676
    %s679 = sphi 0, %s678
    %s693 = sphi 0, %s679
    %s697 = sphi 0, %s697
    %s699 = sphi 0, %s697
    %s700 = sphi 0, %s699
    %s714 = sphi 0, %s700
    %s718 = sphi 0, %s718
    %s720 = sphi 0, %s718
    %s721 = sphi 0, %s720
    %s735 = sphi 0, %s721
    %s739 = sphi 0, %s739
    %s741 = sphi 0, %s739
    %s742 = sphi 0, %s741
    %s756 = sphi 0, %s742
    %s760 = sphi 0, %s760
    %s762 = sphi 0, %s760
    %s763 = sphi 0, %s762
    %s777 = sphi 0, %s763
    %s781 = sphi 0, %s781
    %s783 = sphi 0, %s781
    %s784 = sphi 0, %s783
    %s798 = sphi 0, %s784
    %s804 = sphi 0, %s806
    %s807 = sphi 0, %s804
    %s808 = sphi 0, %s807
    %s824 = sphi 0, %s808
  $region4: #{ablock3x3_forward.1} parent=0 // loop_header_branch
    %78 = sbr.rel (%p76) target = $region8
  $region5: #{ablock3x3_forward.1} parent=0 // loop_body
    %s80 = ssub.s32 %s75, 1
    %s81 = ssub.s32 %s75, 2
    %s82 = sadd.s32 %s75, 1
    %s84 = sadd.s32 %s83, 1
    %p87 = scmp.eq.s32.totalorder %s75, 1
    %p88 = scmp.ne.s32.totalorder %s83, %s85
    %p89 = scmp.eq.s32.totalorder %s75, 0
    %p90 = por %p88, %p89
    %p91 = scmp.ne.s32.totalorder %s83, %s85
    %p92 = scmp.eq.s32.totalorder %s80, 1
    %p93 = por %p91, %p92
    %p94 = scmp.ne.s32.totalorder %s85, %s86
    %p95 = scmp.eq.s32.totalorder %s80, 0
    %p96 = por %p94, %p95
    %p97 = scmp.ne.s32.totalorder %s85, %s86
    %p98 = scmp.eq.s32.totalorder %s81, 1
    %p99 = por %p97, %p98
    %p101 = scmp.ne.s32.totalorder %s86, %s100
    %p102 = scmp.eq.s32.totalorder %s81, 0
    %p103 = por %p101, %p102
    %s104 = ssub.s32 %s75, %s82
    %p105 = scmp.eq.s32.totalorder %s104, 0
    %s107 = sadd.s32 %s106, 1
    %s108 = scalar_select %p105, %s106, %s107
    %p111 = pneg %p105
    %p112 = scmp.eq.s32.totalorder %s75, 1
    %p113 = por %p111, %p112
    %p114 = scmp.ne.s32.totalorder %s106, %s109
    %p115 = scmp.eq.s32.totalorder %s75, 0
    %p116 = por %p114, %p115
    %p117 = scmp.ne.s32.totalorder %s106, %s109
    %p118 = scmp.eq.s32.totalorder %s80, 1
    %p119 = por %p117, %p118
    %p120 = scmp.ne.s32.totalorder %s109, %s110
    %p121 = scmp.eq.s32.totalorder %s80, 0
    %p122 = por %p120, %p121
    %p123 = scmp.ne.s32.totalorder %s109, %s110
    %p124 = scmp.eq.s32.totalorder %s81, 1
    %p125 = por %p123, %p124
    %p127 = scmp.ne.s32.totalorder %s110, %s126
    %p128 = scmp.eq.s32.totalorder %s81, 0
    %p129 = por %p127, %p128
    %s131 = sadd.s32 %s130, 1
    %p134 = scmp.eq.s32.totalorder %s75, 1
    %p135 = scmp.ne.s32.totalorder %s130, %s132
    %p136 = scmp.eq.s32.totalorder %s75, 0
    %p137 = por %p135, %p136
    %p138 = scmp.ne.s32.totalorder %s130, %s132
    %p139 = scmp.eq.s32.totalorder %s80, 1
    %p140 = por %p138, %p139
    %p141 = scmp.ne.s32.totalorder %s132, %s133
    %p142 = scmp.eq.s32.totalorder %s80, 0
    %p143 = por %p141, %p142
    %p144 = scmp.ne.s32.totalorder %s132, %s133
    %p145 = scmp.eq.s32.totalorder %s81, 1
    %p146 = por %p144, %p145
    %p148 = scmp.ne.s32.totalorder %s133, %s147
    %p149 = scmp.eq.s32.totalorder %s81, 0
    %p150 = por %p148, %p149
    %s152 = sadd.s32 %s151, 1
    %p155 = scmp.eq.s32.totalorder %s75, 1
    %p156 = scmp.ne.s32.totalorder %s151, %s153
    %p157 = scmp.eq.s32.totalorder %s75, 0
    %p158 = por %p156, %p157
    %p159 = scmp.ne.s32.totalorder %s151, %s153
    %p160 = scmp.eq.s32.totalorder %s80, 1
    %p161 = por %p159, %p160
    %p162 = scmp.ne.s32.totalorder %s153, %s154
    %p163 = scmp.eq.s32.totalorder %s80, 0
    %p164 = por %p162, %p163
    %p165 = scmp.ne.s32.totalorder %s153, %s154
    %p166 = scmp.eq.s32.totalorder %s81, 1
    %p167 = por %p165, %p166
    %p169 = scmp.ne.s32.totalorder %s154, %s168
    %p170 = scmp.eq.s32.totalorder %s81, 0
    %p171 = por %p169, %p170
    %s173 = sadd.s32 %s172, 1
    %p176 = scmp.eq.s32.totalorder %s75, 1
    %p177 = scmp.ne.s32.totalorder %s172, %s174
    %p178 = scmp.eq.s32.totalorder %s75, 0
    %p179 = por %p177, %p178
    %p180 = scmp.ne.s32.totalorder %s172, %s174
    %p181 = scmp.eq.s32.totalorder %s80, 1
    %p182 = por %p180, %p181
    %p183 = scmp.ne.s32.totalorder %s174, %s175
    %p184 = scmp.eq.s32.totalorder %s80, 0
    %p185 = por %p183, %p184
    %p186 = scmp.ne.s32.totalorder %s174, %s175
    %p187 = scmp.eq.s32.totalorder %s81, 1
    %p188 = por %p186, %p187
    %p190 = scmp.ne.s32.totalorder %s175, %s189
    %p191 = scmp.eq.s32.totalorder %s81, 0
    %p192 = por %p190, %p191
    %s194 = sadd.s32 %s193, 1
    %p197 = scmp.eq.s32.totalorder %s75, 1
    %p198 = scmp.ne.s32.totalorder %s193, %s195
    %p199 = scmp.eq.s32.totalorder %s75, 0
    %p200 = por %p198, %p199
    %p201 = scmp.ne.s32.totalorder %s193, %s195
    %p202 = scmp.eq.s32.totalorder %s80, 1
    %p203 = por %p201, %p202
    %p204 = scmp.ne.s32.totalorder %s195, %s196
    %p205 = scmp.eq.s32.totalorder %s80, 0
    %p206 = por %p204, %p205
    %p207 = scmp.ne.s32.totalorder %s195, %s196
    %p208 = scmp.eq.s32.totalorder %s81, 1
    %p209 = por %p207, %p208
    %p211 = scmp.ne.s32.totalorder %s196, %s210
    %p212 = scmp.eq.s32.totalorder %s81, 0
    %p213 = por %p211, %p212
    %s215 = sadd.s32 %s214, 1
    %p218 = scmp.eq.s32.totalorder %s75, 1
    %p219 = scmp.ne.s32.totalorder %s214, %s216
    %p220 = scmp.eq.s32.totalorder %s75, 0
    %p221 = por %p219, %p220
    %p222 = scmp.ne.s32.totalorder %s214, %s216
    %p223 = scmp.eq.s32.totalorder %s80, 1
    %p224 = por %p222, %p223
    %p225 = scmp.ne.s32.totalorder %s216, %s217
    %p226 = scmp.eq.s32.totalorder %s80, 0
    %p227 = por %p225, %p226
    %p228 = scmp.ne.s32.totalorder %s216, %s217
    %p229 = scmp.eq.s32.totalorder %s81, 1
    %p230 = por %p228, %p229
    %p232 = scmp.ne.s32.totalorder %s217, %s231
    %p233 = scmp.eq.s32.totalorder %s81, 0
    %p234 = por %p232, %p233
    %s236 = sadd.s32 %s235, 1
    %p239 = scmp.eq.s32.totalorder %s75, 1
    %p240 = scmp.ne.s32.totalorder %s235, %s237
    %p241 = scmp.eq.s32.totalorder %s75, 0
    %p242 = por %p240, %p241
    %p243 = scmp.ne.s32.totalorder %s235, %s237
    %p244 = scmp.eq.s32.totalorder %s80, 1
    %p245 = por %p243, %p244
    %p246 = scmp.ne.s32.totalorder %s237, %s238
    %p247 = scmp.eq.s32.totalorder %s80, 0
    %p248 = por %p246, %p247
    %p249 = scmp.ne.s32.totalorder %s237, %s238
    %p250 = scmp.eq.s32.totalorder %s81, 1
    %p251 = por %p249, %p250
    %p253 = scmp.ne.s32.totalorder %s238, %s252
    %p254 = scmp.eq.s32.totalorder %s81, 0
    %p255 = por %p253, %p254
    %s257 = sadd.s32 %s256, 1
    %p260 = scmp.eq.s32.totalorder %s75, 1
    %p261 = scmp.ne.s32.totalorder %s256, %s258
    %p262 = scmp.eq.s32.totalorder %s75, 0
    %p263 = por %p261, %p262
    %p264 = scmp.ne.s32.totalorder %s256, %s258
    %p265 = scmp.eq.s32.totalorder %s80, 1
    %p266 = por %p264, %p265
    %p267 = scmp.ne.s32.totalorder %s258, %s259
    %p268 = scmp.eq.s32.totalorder %s80, 0
    %p269 = por %p267, %p268
    %p270 = scmp.ne.s32.totalorder %s258, %s259
    %p271 = scmp.eq.s32.totalorder %s81, 1
    %p272 = por %p270, %p271
    %p274 = scmp.ne.s32.totalorder %s259, %s273
    %p275 = scmp.eq.s32.totalorder %s81, 0
    %p276 = por %p274, %p275
    %s278 = sadd.s32 %s277, 1
    %p281 = scmp.eq.s32.totalorder %s75, 1
    %p282 = scmp.ne.s32.totalorder %s277, %s279
    %p283 = scmp.eq.s32.totalorder %s75, 0
    %p284 = por %p282, %p283
    %p285 = scmp.ne.s32.totalorder %s277, %s279
    %p286 = scmp.eq.s32.totalorder %s80, 1
    %p287 = por %p285, %p286
    %p288 = scmp.ne.s32.totalorder %s279, %s280
    %p289 = scmp.eq.s32.totalorder %s80, 0
    %p290 = por %p288, %p289
    %p291 = scmp.ne.s32.totalorder %s279, %s280
    %p292 = scmp.eq.s32.totalorder %s81, 1
    %p293 = por %p291, %p292
    %p295 = scmp.ne.s32.totalorder %s280, %s294
    %p296 = scmp.eq.s32.totalorder %s81, 0
    %p297 = por %p295, %p296
    %s299 = sadd.s32 %s298, 1
    %p302 = scmp.eq.s32.totalorder %s75, 1
    %p303 = scmp.ne.s32.totalorder %s298, %s300
    %p304 = scmp.eq.s32.totalorder %s75, 0
    %p305 = por %p303, %p304
    %p306 = scmp.ne.s32.totalorder %s298, %s300
    %p307 = scmp.eq.s32.totalorder %s80, 1
    %p308 = por %p306, %p307
    %p309 = scmp.ne.s32.totalorder %s300, %s301
    %p310 = scmp.eq.s32.totalorder %s80, 0
    %p311 = por %p309, %p310
    %p312 = scmp.ne.s32.totalorder %s300, %s301
    %p313 = scmp.eq.s32.totalorder %s81, 1
    %p314 = por %p312, %p313
    %p316 = scmp.ne.s32.totalorder %s301, %s315
    %p317 = scmp.eq.s32.totalorder %s81, 0
    %p318 = por %p316, %p317
    %s320 = sadd.s32 %s319, 1
    %p323 = scmp.eq.s32.totalorder %s75, 1
    %p324 = scmp.ne.s32.totalorder %s319, %s321
    %p325 = scmp.eq.s32.totalorder %s75, 0
    %p326 = por %p324, %p325
    %p327 = scmp.ne.s32.totalorder %s319, %s321
    %p328 = scmp.eq.s32.totalorder %s80, 1
    %p329 = por %p327, %p328
    %p330 = scmp.ne.s32.totalorder %s321, %s322
    %p331 = scmp.eq.s32.totalorder %s80, 0
    %p332 = por %p330, %p331
    %p333 = scmp.ne.s32.totalorder %s321, %s322
    %p334 = scmp.eq.s32.totalorder %s81, 1
    %p335 = por %p333, %p334
    %p337 = scmp.ne.s32.totalorder %s322, %s336
    %p338 = scmp.eq.s32.totalorder %s81, 0
    %p339 = por %p337, %p338
    %s341 = sadd.s32 %s340, 1
    %p344 = scmp.eq.s32.totalorder %s75, 1
    %p345 = scmp.ne.s32.totalorder %s340, %s342
    %p346 = scmp.eq.s32.totalorder %s75, 0
    %p347 = por %p345, %p346
    %p348 = scmp.ne.s32.totalorder %s340, %s342
    %p349 = scmp.eq.s32.totalorder %s80, 1
    %p350 = por %p348, %p349
    %p351 = scmp.ne.s32.totalorder %s342, %s343
    %p352 = scmp.eq.s32.totalorder %s80, 0
    %p353 = por %p351, %p352
    %p354 = scmp.ne.s32.totalorder %s342, %s343
    %p355 = scmp.eq.s32.totalorder %s81, 1
    %p356 = por %p354, %p355
    %p358 = scmp.ne.s32.totalorder %s343, %s357
    %p359 = scmp.eq.s32.totalorder %s81, 0
    %p360 = por %p358, %p359
    %s362 = sadd.s32 %s361, 1
    %p365 = scmp.eq.s32.totalorder %s75, 1
    %p366 = scmp.ne.s32.totalorder %s361, %s363
    %p367 = scmp.eq.s32.totalorder %s75, 0
    %p368 = por %p366, %p367
    %p369 = scmp.ne.s32.totalorder %s361, %s363
    %p370 = scmp.eq.s32.totalorder %s80, 1
    %p371 = por %p369, %p370
    %p372 = scmp.ne.s32.totalorder %s363, %s364
    %p373 = scmp.eq.s32.totalorder %s80, 0
    %p374 = por %p372, %p373
    %p375 = scmp.ne.s32.totalorder %s363, %s364
    %p376 = scmp.eq.s32.totalorder %s81, 1
    %p377 = por %p375, %p376
    %p379 = scmp.ne.s32.totalorder %s364, %s378
    %p380 = scmp.eq.s32.totalorder %s81, 0
    %p381 = por %p379, %p380
    %s383 = sadd.s32 %s382, 1
    %p386 = scmp.eq.s32.totalorder %s75, 1
    %p387 = scmp.ne.s32.totalorder %s382, %s384
    %p388 = scmp.eq.s32.totalorder %s75, 0
    %p389 = por %p387, %p388
    %p390 = scmp.ne.s32.totalorder %s382, %s384
    %p391 = scmp.eq.s32.totalorder %s80, 1
    %p392 = por %p390, %p391
    %p393 = scmp.ne.s32.totalorder %s384, %s385
    %p394 = scmp.eq.s32.totalorder %s80, 0
    %p395 = por %p393, %p394
    %p396 = scmp.ne.s32.totalorder %s384, %s385
    %p397 = scmp.eq.s32.totalorder %s81, 1
    %p398 = por %p396, %p397
    %p400 = scmp.ne.s32.totalorder %s385, %s399
    %p401 = scmp.eq.s32.totalorder %s81, 0
    %p402 = por %p400, %p401
    %s404 = sadd.s32 %s403, 1
    %p407 = scmp.eq.s32.totalorder %s75, 1
    %p408 = scmp.ne.s32.totalorder %s403, %s405
    %p409 = scmp.eq.s32.totalorder %s75, 0
    %p410 = por %p408, %p409
    %p411 = scmp.ne.s32.totalorder %s403, %s405
    %p412 = scmp.eq.s32.totalorder %s80, 1
    %p413 = por %p411, %p412
    %p414 = scmp.ne.s32.totalorder %s405, %s406
    %p415 = scmp.eq.s32.totalorder %s80, 0
    %p416 = por %p414, %p415
    %p417 = scmp.ne.s32.totalorder %s405, %s406
    %p418 = scmp.eq.s32.totalorder %s81, 1
    %p419 = por %p417, %p418
    %p421 = scmp.ne.s32.totalorder %s406, %s420
    %p422 = scmp.eq.s32.totalorder %s81, 0
    %p423 = por %p421, %p422
    %s425 = sadd.s32 %s424, 1
    %p428 = scmp.eq.s32.totalorder %s75, 1
    %p429 = scmp.ne.s32.totalorder %s424, %s426
    %p430 = scmp.eq.s32.totalorder %s75, 0
    %p431 = por %p429, %p430
    %p432 = scmp.ne.s32.totalorder %s424, %s426
    %p433 = scmp.eq.s32.totalorder %s80, 1
    %p434 = por %p432, %p433
    %p435 = scmp.ne.s32.totalorder %s426, %s427
    %p436 = scmp.eq.s32.totalorder %s80, 0
    %p437 = por %p435, %p436
    %p438 = scmp.ne.s32.totalorder %s426, %s427
    %p439 = scmp.eq.s32.totalorder %s81, 1
    %p440 = por %p438, %p439
    %p442 = scmp.ne.s32.totalorder %s427, %s441
    %p443 = scmp.eq.s32.totalorder %s81, 0
    %p444 = por %p442, %p443
    %s446 = sadd.s32 %s445, 1
    %p449 = scmp.eq.s32.totalorder %s75, 1
    %p450 = scmp.ne.s32.totalorder %s445, %s447
    %p451 = scmp.eq.s32.totalorder %s75, 0
    %p452 = por %p450, %p451
    %p453 = scmp.ne.s32.totalorder %s445, %s447
    %p454 = scmp.eq.s32.totalorder %s80, 1
    %p455 = por %p453, %p454
    %p456 = scmp.ne.s32.totalorder %s447, %s448
    %p457 = scmp.eq.s32.totalorder %s80, 0
    %p458 = por %p456, %p457
    %p459 = scmp.ne.s32.totalorder %s447, %s448
    %p460 = scmp.eq.s32.totalorder %s81, 1
    %p461 = por %p459, %p460
    %p463 = scmp.ne.s32.totalorder %s448, %s462
    %p464 = scmp.eq.s32.totalorder %s81, 0
    %p465 = por %p463, %p464
    %s467 = sadd.s32 %s466, 1
    %p470 = scmp.eq.s32.totalorder %s75, 1
    %p471 = scmp.ne.s32.totalorder %s466, %s468
    %p472 = scmp.eq.s32.totalorder %s75, 0
    %p473 = por %p471, %p472
    %p474 = scmp.ne.s32.totalorder %s466, %s468
    %p475 = scmp.eq.s32.totalorder %s80, 1
    %p476 = por %p474, %p475
    %p477 = scmp.ne.s32.totalorder %s468, %s469
    %p478 = scmp.eq.s32.totalorder %s80, 0
    %p479 = por %p477, %p478
    %p480 = scmp.ne.s32.totalorder %s468, %s469
    %p481 = scmp.eq.s32.totalorder %s81, 1
    %p482 = por %p480, %p481
    %p484 = scmp.ne.s32.totalorder %s469, %s483
    %p485 = scmp.eq.s32.totalorder %s81, 0
    %p486 = por %p484, %p485
    %s488 = sadd.s32 %s487, 1
    %p491 = scmp.eq.s32.totalorder %s75, 1
    %p492 = scmp.ne.s32.totalorder %s487, %s489
    %p493 = scmp.eq.s32.totalorder %s75, 0
    %p494 = por %p492, %p493
    %p495 = scmp.ne.s32.totalorder %s487, %s489
    %p496 = scmp.eq.s32.totalorder %s80, 1
    %p497 = por %p495, %p496
    %p498 = scmp.ne.s32.totalorder %s489, %s490
    %p499 = scmp.eq.s32.totalorder %s80, 0
    %p500 = por %p498, %p499
    %p501 = scmp.ne.s32.totalorder %s489, %s490
    %p502 = scmp.eq.s32.totalorder %s81, 1
    %p503 = por %p501, %p502
    %p505 = scmp.ne.s32.totalorder %s490, %s504
    %p506 = scmp.eq.s32.totalorder %s81, 0
    %p507 = por %p505, %p506
    %s509 = sadd.s32 %s508, 1
    %p512 = scmp.eq.s32.totalorder %s75, 1
    %p513 = scmp.ne.s32.totalorder %s508, %s510
    %p514 = scmp.eq.s32.totalorder %s75, 0
    %p515 = por %p513, %p514
    %p516 = scmp.ne.s32.totalorder %s508, %s510
    %p517 = scmp.eq.s32.totalorder %s80, 1
    %p518 = por %p516, %p517
    %p519 = scmp.ne.s32.totalorder %s510, %s511
    %p520 = scmp.eq.s32.totalorder %s80, 0
    %p521 = por %p519, %p520
    %p522 = scmp.ne.s32.totalorder %s510, %s511
    %p523 = scmp.eq.s32.totalorder %s81, 1
    %p524 = por %p522, %p523
    %p526 = scmp.ne.s32.totalorder %s511, %s525
    %p527 = scmp.eq.s32.totalorder %s81, 0
    %p528 = por %p526, %p527
    %s530 = sadd.s32 %s529, 1
    %p533 = scmp.eq.s32.totalorder %s75, 1
    %p534 = scmp.ne.s32.totalorder %s529, %s531
    %p535 = scmp.eq.s32.totalorder %s75, 0
    %p536 = por %p534, %p535
    %p537 = scmp.ne.s32.totalorder %s529, %s531
    %p538 = scmp.eq.s32.totalorder %s80, 1
    %p539 = por %p537, %p538
    %p540 = scmp.ne.s32.totalorder %s531, %s532
    %p541 = scmp.eq.s32.totalorder %s80, 0
    %p542 = por %p540, %p541
    %p543 = scmp.ne.s32.totalorder %s531, %s532
    %p544 = scmp.eq.s32.totalorder %s81, 1
    %p545 = por %p543, %p544
    %p547 = scmp.ne.s32.totalorder %s532, %s546
    %p548 = scmp.eq.s32.totalorder %s81, 0
    %p549 = por %p547, %p548
    %s551 = sadd.s32 %s550, 1
    %p554 = scmp.eq.s32.totalorder %s75, 1
    %p555 = scmp.ne.s32.totalorder %s550, %s552
    %p556 = scmp.eq.s32.totalorder %s75, 0
    %p557 = por %p555, %p556
    %p558 = scmp.ne.s32.totalorder %s550, %s552
    %p559 = scmp.eq.s32.totalorder %s80, 1
    %p560 = por %p558, %p559
    %p561 = scmp.ne.s32.totalorder %s552, %s553
    %p562 = scmp.eq.s32.totalorder %s80, 0
    %p563 = por %p561, %p562
    %p564 = scmp.ne.s32.totalorder %s552, %s553
    %p565 = scmp.eq.s32.totalorder %s81, 1
    %p566 = por %p564, %p565
    %p568 = scmp.ne.s32.totalorder %s553, %s567
    %p569 = scmp.eq.s32.totalorder %s81, 0
    %p570 = por %p568, %p569
    %s572 = sadd.s32 %s571, 1
    %p575 = scmp.eq.s32.totalorder %s75, 1
    %p576 = scmp.ne.s32.totalorder %s571, %s573
    %p577 = scmp.eq.s32.totalorder %s75, 0
    %p578 = por %p576, %p577
    %p579 = scmp.ne.s32.totalorder %s571, %s573
    %p580 = scmp.eq.s32.totalorder %s80, 1
    %p581 = por %p579, %p580
    %p582 = scmp.ne.s32.totalorder %s573, %s574
    %p583 = scmp.eq.s32.totalorder %s80, 0
    %p584 = por %p582, %p583
    %p585 = scmp.ne.s32.totalorder %s573, %s574
    %p586 = scmp.eq.s32.totalorder %s81, 1
    %p587 = por %p585, %p586
    %p589 = scmp.ne.s32.totalorder %s574, %s588
    %p590 = scmp.eq.s32.totalorder %s81, 0
    %p591 = por %p589, %p590
    %s593 = sadd.s32 %s592, 1
    %p596 = scmp.eq.s32.totalorder %s75, 1
    %p597 = scmp.ne.s32.totalorder %s592, %s594
    %p598 = scmp.eq.s32.totalorder %s75, 0
    %p599 = por %p597, %p598
    %p600 = scmp.ne.s32.totalorder %s592, %s594
    %p601 = scmp.eq.s32.totalorder %s80, 1
    %p602 = por %p600, %p601
    %p603 = scmp.ne.s32.totalorder %s594, %s595
    %p604 = scmp.eq.s32.totalorder %s80, 0
    %p605 = por %p603, %p604
    %p606 = scmp.ne.s32.totalorder %s594, %s595
    %p607 = scmp.eq.s32.totalorder %s81, 1
    %p608 = por %p606, %p607
    %p610 = scmp.ne.s32.totalorder %s595, %s609
    %p611 = scmp.eq.s32.totalorder %s81, 0
    %p612 = por %p610, %p611
    %s614 = sadd.s32 %s613, 1
    %p617 = scmp.eq.s32.totalorder %s75, 1
    %p618 = scmp.ne.s32.totalorder %s613, %s615
    %p619 = scmp.eq.s32.totalorder %s75, 0
    %p620 = por %p618, %p619
    %p621 = scmp.ne.s32.totalorder %s613, %s615
    %p622 = scmp.eq.s32.totalorder %s80, 1
    %p623 = por %p621, %p622
    %p624 = scmp.ne.s32.totalorder %s615, %s616
    %p625 = scmp.eq.s32.totalorder %s80, 0
    %p626 = por %p624, %p625
    %p627 = scmp.ne.s32.totalorder %s615, %s616
    %p628 = scmp.eq.s32.totalorder %s81, 1
    %p629 = por %p627, %p628
    %p631 = scmp.ne.s32.totalorder %s616, %s630
    %p632 = scmp.eq.s32.totalorder %s81, 0
    %p633 = por %p631, %p632
    %s635 = sadd.s32 %s634, 1
    %p638 = scmp.eq.s32.totalorder %s75, 1
    %p639 = scmp.ne.s32.totalorder %s634, %s636
    %p640 = scmp.eq.s32.totalorder %s75, 0
    %p641 = por %p639, %p640
    %p642 = scmp.ne.s32.totalorder %s634, %s636
    %p643 = scmp.eq.s32.totalorder %s80, 1
    %p644 = por %p642, %p643
    %p645 = scmp.ne.s32.totalorder %s636, %s637
    %p646 = scmp.eq.s32.totalorder %s80, 0
    %p647 = por %p645, %p646
    %p648 = scmp.ne.s32.totalorder %s636, %s637
    %p649 = scmp.eq.s32.totalorder %s81, 1
    %p650 = por %p648, %p649
    %p652 = scmp.ne.s32.totalorder %s637, %s651
    %p653 = scmp.eq.s32.totalorder %s81, 0
    %p654 = por %p652, %p653
    %s656 = sadd.s32 %s655, 1
    %p659 = scmp.eq.s32.totalorder %s75, 1
    %p660 = scmp.ne.s32.totalorder %s655, %s657
    %p661 = scmp.eq.s32.totalorder %s75, 0
    %p662 = por %p660, %p661
    %p663 = scmp.ne.s32.totalorder %s655, %s657
    %p664 = scmp.eq.s32.totalorder %s80, 1
    %p665 = por %p663, %p664
    %p666 = scmp.ne.s32.totalorder %s657, %s658
    %p667 = scmp.eq.s32.totalorder %s80, 0
    %p668 = por %p666, %p667
    %p669 = scmp.ne.s32.totalorder %s657, %s658
    %p670 = scmp.eq.s32.totalorder %s81, 1
    %p671 = por %p669, %p670
    %p673 = scmp.ne.s32.totalorder %s658, %s672
    %p674 = scmp.eq.s32.totalorder %s81, 0
    %p675 = por %p673, %p674
    %s677 = sadd.s32 %s676, 1
    %p680 = scmp.eq.s32.totalorder %s75, 1
    %p681 = scmp.ne.s32.totalorder %s676, %s678
    %p682 = scmp.eq.s32.totalorder %s75, 0
    %p683 = por %p681, %p682
    %p684 = scmp.ne.s32.totalorder %s676, %s678
    %p685 = scmp.eq.s32.totalorder %s80, 1
    %p686 = por %p684, %p685
    %p687 = scmp.ne.s32.totalorder %s678, %s679
    %p688 = scmp.eq.s32.totalorder %s80, 0
    %p689 = por %p687, %p688
    %p690 = scmp.ne.s32.totalorder %s678, %s679
    %p691 = scmp.eq.s32.totalorder %s81, 1
    %p692 = por %p690, %p691
    %p694 = scmp.ne.s32.totalorder %s679, %s693
    %p695 = scmp.eq.s32.totalorder %s81, 0
    %p696 = por %p694, %p695
    %s698 = sadd.s32 %s697, 1
    %p701 = scmp.eq.s32.totalorder %s75, 1
    %p702 = scmp.ne.s32.totalorder %s697, %s699
    %p703 = scmp.eq.s32.totalorder %s75, 0
    %p704 = por %p702, %p703
    %p705 = scmp.ne.s32.totalorder %s697, %s699
    %p706 = scmp.eq.s32.totalorder %s80, 1
    %p707 = por %p705, %p706
    %p708 = scmp.ne.s32.totalorder %s699, %s700
    %p709 = scmp.eq.s32.totalorder %s80, 0
    %p710 = por %p708, %p709
    %p711 = scmp.ne.s32.totalorder %s699, %s700
    %p712 = scmp.eq.s32.totalorder %s81, 1
    %p713 = por %p711, %p712
    %p715 = scmp.ne.s32.totalorder %s700, %s714
    %p716 = scmp.eq.s32.totalorder %s81, 0
    %p717 = por %p715, %p716
    %s719 = sadd.s32 %s718, 1
    %p722 = scmp.eq.s32.totalorder %s75, 1
    %p723 = scmp.ne.s32.totalorder %s718, %s720
    %p724 = scmp.eq.s32.totalorder %s75, 0
    %p725 = por %p723, %p724
    %p726 = scmp.ne.s32.totalorder %s718, %s720
    %p727 = scmp.eq.s32.totalorder %s80, 1
    %p728 = por %p726, %p727
    %p729 = scmp.ne.s32.totalorder %s720, %s721
    %p730 = scmp.eq.s32.totalorder %s80, 0
    %p731 = por %p729, %p730
    %p732 = scmp.ne.s32.totalorder %s720, %s721
    %p733 = scmp.eq.s32.totalorder %s81, 1
    %p734 = por %p732, %p733
    %p736 = scmp.ne.s32.totalorder %s721, %s735
    %p737 = scmp.eq.s32.totalorder %s81, 0
    %p738 = por %p736, %p737
    %s740 = sadd.s32 %s739, 1
    %p743 = scmp.eq.s32.totalorder %s75, 1
    %p744 = scmp.ne.s32.totalorder %s739, %s741
    %p745 = scmp.eq.s32.totalorder %s75, 0
    %p746 = por %p744, %p745
    %p747 = scmp.ne.s32.totalorder %s739, %s741
    %p748 = scmp.eq.s32.totalorder %s80, 1
    %p749 = por %p747, %p748
    %p750 = scmp.ne.s32.totalorder %s741, %s742
    %p751 = scmp.eq.s32.totalorder %s80, 0
    %p752 = por %p750, %p751
    %p753 = scmp.ne.s32.totalorder %s741, %s742
    %p754 = scmp.eq.s32.totalorder %s81, 1
    %p755 = por %p753, %p754
    %p757 = scmp.ne.s32.totalorder %s742, %s756
    %p758 = scmp.eq.s32.totalorder %s81, 0
    %p759 = por %p757, %p758
    %s761 = sadd.s32 %s760, 1
    %p764 = scmp.eq.s32.totalorder %s75, 1
    %p765 = scmp.ne.s32.totalorder %s760, %s762
    %p766 = scmp.eq.s32.totalorder %s75, 0
    %p767 = por %p765, %p766
    %p768 = scmp.ne.s32.totalorder %s760, %s762
    %p769 = scmp.eq.s32.totalorder %s80, 1
    %p770 = por %p768, %p769
    %p771 = scmp.ne.s32.totalorder %s762, %s763
    %p772 = scmp.eq.s32.totalorder %s80, 0
    %p773 = por %p771, %p772
    %p774 = scmp.ne.s32.totalorder %s762, %s763
    %p775 = scmp.eq.s32.totalorder %s81, 1
    %p776 = por %p774, %p775
    %p778 = scmp.ne.s32.totalorder %s763, %s777
    %p779 = scmp.eq.s32.totalorder %s81, 0
    %p780 = por %p778, %p779
    %s782 = sadd.s32 %s781, 1
    %p785 = scmp.eq.s32.totalorder %s75, 1
    %p786 = scmp.ne.s32.totalorder %s781, %s783
    %p787 = scmp.eq.s32.totalorder %s75, 0
    %p788 = por %p786, %p787
    %p789 = scmp.ne.s32.totalorder %s781, %s783
    %p790 = scmp.eq.s32.totalorder %s80, 1
    %p791 = por %p789, %p790
    %p792 = scmp.ne.s32.totalorder %s783, %s784
    %p793 = scmp.eq.s32.totalorder %s80, 0
    %p794 = por %p792, %p793
    %p795 = scmp.ne.s32.totalorder %s783, %s784
    %p796 = scmp.eq.s32.totalorder %s81, 1
    %p797 = por %p795, %p796
    %p799 = scmp.ne.s32.totalorder %s784, %s798
    %p800 = scmp.eq.s32.totalorder %s81, 0
    %p801 = por %p799, %p800
    %s802 = ssub.s32 %s75, %s82
    %p803 = scmp.eq.s32.totalorder %s802, 0
    %s805 = sadd.s32 %s804, 1
    %s806 = scalar_select %p803, %s804, %s805
    %p809 = pneg %p803
    %p810 = scmp.eq.s32.totalorder %s75, 1
    %p811 = por %p809, %p810
    %p812 = scmp.ne.s32.totalorder %s804, %s807
    %p813 = scmp.eq.s32.totalorder %s75, 0
    %p814 = por %p812, %p813
    %p815 = scmp.ne.s32.totalorder %s804, %s807
    %p816 = scmp.eq.s32.totalorder %s80, 1
    %p817 = por %p815, %p816
    %p818 = scmp.ne.s32.totalorder %s807, %s808
    %p819 = scmp.eq.s32.totalorder %s80, 0
    %p820 = por %p818, %p819
    %p821 = scmp.ne.s32.totalorder %s807, %s808
    %p822 = scmp.eq.s32.totalorder %s81, 1
    %p823 = por %p821, %p822
    %p825 = scmp.ne.s32.totalorder %s808, %s824
    %p826 = scmp.eq.s32.totalorder %s81, 0
    %p827 = por %p825, %p826
    %p828 = scmp.le.s32.totalorder 1, %s75
    %p829 = scmp.lt.s32.totalorder %s75, 3
    %p830 = pnand %p828, %p829
    %p831 = pneg %p830
    // Predicated region
    $region9: #{ablock3x3_forward.1} parent=5 // pred_check
      _
    $region10: #{ablock3x3_forward.1} parent=5 // pred_check_branch
      %833 = sbr.rel (%p830) target = $region12
    $region11: #{ablock3x3_forward.1} parent=5 // pred_region
      %s834 = ssub.s32 %s75, 1
      // Predicated region
      $region13: #{ablock3x3_forward.1} parent=11 // pred_check
        %p835 = pneg %p96
      $region14: #{ablock3x3_forward.1} parent=11 // pred_check_branch
        %837 = sbr.rel (%p835) target = $region16
      $region15: #{ablock3x3_forward.1} parent=11 // pred_region
        _
      $region16: #{ablock3x3_forward.1} parent=11 // pred_fallthru
        _
      // Predicated region
      $region17: #{ablock3x3_forward.1} parent=11 // pred_check
        %p838 = pneg %p143
      $region18: #{ablock3x3_forward.1} parent=11 // pred_check_branch
        %840 = sbr.rel (%p838) target = $region20
      $region19: #{ablock3x3_forward.1} parent=11 // pred_region
        _
      $region20: #{ablock3x3_forward.1} parent=11 // pred_fallthru
        _
      // Predicated region
      $region21: #{ablock3x3_forward.1} parent=11 // pred_check
        %p841 = pneg %p164
      $region22: #{ablock3x3_forward.1} parent=11 // pred_check_branch
        %843 = sbr.rel (%p841) target = $region24
      $region23: #{ablock3x3_forward.1} parent=11 // pred_region
        _
      $region24: #{ablock3x3_forward.1} parent=11 // pred_fallthru
        _
      // Predicated region
      $region25: #{ablock3x3_forward.1} parent=11 // pred_check
        %p844 = pneg %p185
      $region26: #{ablock3x3_forward.1} parent=11 // pred_check_branch
        %846 = sbr.rel (%p844) target = $region28
      $region27: #{ablock3x3_forward.1} parent=11 // pred_region
        _
      $region28: #{ablock3x3_forward.1} parent=11 // pred_fallthru
        _
      // Predicated region
      $region29: #{ablock3x3_forward.1} parent=11 // pred_check
        %p847 = pneg %p206
      $region30: #{ablock3x3_forward.1} parent=11 // pred_check_branch
        %849 = sbr.rel (%p847) target = $region32
      $region31: #{ablock3x3_forward.1} parent=11 // pred_region
        _
      $region32: #{ablock3x3_forward.1} parent=11 // pred_fallthru
        _
      // Predicated region
      $region33: #{ablock3x3_forward.1} parent=11 // pred_check
        %p850 = pneg %p227
      $region34: #{ablock3x3_forward.1} parent=11 // pred_check_branch
        %852 = sbr.rel (%p850) target = $region36
      $region35: #{ablock3x3_forward.1} parent=11 // pred_region
        _
      $region36: #{ablock3x3_forward.1} parent=11 // pred_fallthru
        _
      // Predicated region
      $region37: #{ablock3x3_forward.1} parent=11 // pred_check
        %p853 = pneg %p248
      $region38: #{ablock3x3_forward.1} parent=11 // pred_check_branch
        %855 = sbr.rel (%p853) target = $region40
      $region39: #{ablock3x3_forward.1} parent=11 // pred_region
        _
      $region40: #{ablock3x3_forward.1} parent=11 // pred_fallthru
        _
      // Predicated region
      $region41: #{ablock3x3_forward.1} parent=11 // pred_check
        %p856 = pneg %p269
      $region42: #{ablock3x3_forward.1} parent=11 // pred_check_branch
        %858 = sbr.rel (%p856) target = $region44
      $region43: #{ablock3x3_forward.1} parent=11 // pred_region
        _
      $region44: #{ablock3x3_forward.1} parent=11 // pred_fallthru
        _
      // Predicated region
      $region45: #{ablock3x3_forward.1} parent=11 // pred_check
        %p859 = pneg %p290
      $region46: #{ablock3x3_forward.1} parent=11 // pred_check_branch
        %861 = sbr.rel (%p859) target = $region48
      $region47: #{ablock3x3_forward.1} parent=11 // pred_region
        _
      $region48: #{ablock3x3_forward.1} parent=11 // pred_fallthru
        _
      // Predicated region
      $region49: #{ablock3x3_forward.1} parent=11 // pred_check
        %p862 = pneg %p311
      $region50: #{ablock3x3_forward.1} parent=11 // pred_check_branch
        %864 = sbr.rel (%p862) target = $region52
      $region51: #{ablock3x3_forward.1} parent=11 // pred_region
        _
      $region52: #{ablock3x3_forward.1} parent=11 // pred_fallthru
        _
      // Predicated region
      $region53: #{ablock3x3_forward.1} parent=11 // pred_check
        %p865 = pneg %p332
      $region54: #{ablock3x3_forward.1} parent=11 // pred_check_branch
        %867 = sbr.rel (%p865) target = $region56
      $region55: #{ablock3x3_forward.1} parent=11 // pred_region
        _
      $region56: #{ablock3x3_forward.1} parent=11 // pred_fallthru
        _
      // Predicated region
      $region57: #{ablock3x3_forward.1} parent=11 // pred_check
        %p868 = pneg %p353
      $region58: #{ablock3x3_forward.1} parent=11 // pred_check_branch
        %870 = sbr.rel (%p868) target = $region60
      $region59: #{ablock3x3_forward.1} parent=11 // pred_region
        _
      $region60: #{ablock3x3_forward.1} parent=11 // pred_fallthru
        _
      // Predicated region
      $region61: #{ablock3x3_forward.1} parent=11 // pred_check
        %p871 = pneg %p374
      $region62: #{ablock3x3_forward.1} parent=11 // pred_check_branch
        %873 = sbr.rel (%p871) target = $region64
      $region63: #{ablock3x3_forward.1} parent=11 // pred_region
        _
      $region64: #{ablock3x3_forward.1} parent=11 // pred_fallthru
        _
      // Predicated region
      $region65: #{ablock3x3_forward.1} parent=11 // pred_check
        %p874 = pneg %p395
      $region66: #{ablock3x3_forward.1} parent=11 // pred_check_branch
        %876 = sbr.rel (%p874) target = $region68
      $region67: #{ablock3x3_forward.1} parent=11 // pred_region
        _
      $region68: #{ablock3x3_forward.1} parent=11 // pred_fallthru
        _
      // Predicated region
      $region69: #{ablock3x3_forward.1} parent=11 // pred_check
        %p877 = pneg %p416
      $region70: #{ablock3x3_forward.1} parent=11 // pred_check_branch
        %879 = sbr.rel (%p877) target = $region72
      $region71: #{ablock3x3_forward.1} parent=11 // pred_region
        _
      $region72: #{ablock3x3_forward.1} parent=11 // pred_fallthru
        _
      // Predicated region
      $region73: #{ablock3x3_forward.1} parent=11 // pred_check
        %p880 = pneg %p437
      $region74: #{ablock3x3_forward.1} parent=11 // pred_check_branch
        %882 = sbr.rel (%p880) target = $region76
      $region75: #{ablock3x3_forward.1} parent=11 // pred_region
        _
      $region76: #{ablock3x3_forward.1} parent=11 // pred_fallthru
        _
      // Predicated region
      $region77: #{ablock3x3_forward.1} parent=11 // pred_check
        %p883 = pneg %p458
      $region78: #{ablock3x3_forward.1} parent=11 // pred_check_branch
        %885 = sbr.rel (%p883) target = $region80
      $region79: #{ablock3x3_forward.1} parent=11 // pred_region
        _
      $region80: #{ablock3x3_forward.1} parent=11 // pred_fallthru
        _
      // Predicated region
      $region81: #{ablock3x3_forward.1} parent=11 // pred_check
        %p886 = pneg %p479
      $region82: #{ablock3x3_forward.1} parent=11 // pred_check_branch
        %888 = sbr.rel (%p886) target = $region84
      $region83: #{ablock3x3_forward.1} parent=11 // pred_region
        _
      $region84: #{ablock3x3_forward.1} parent=11 // pred_fallthru
        _
      // Predicated region
      $region85: #{ablock3x3_forward.1} parent=11 // pred_check
        %p889 = pneg %p500
      $region86: #{ablock3x3_forward.1} parent=11 // pred_check_branch
        %891 = sbr.rel (%p889) target = $region88
      $region87: #{ablock3x3_forward.1} parent=11 // pred_region
        _
      $region88: #{ablock3x3_forward.1} parent=11 // pred_fallthru
        _
      // Predicated region
      $region89: #{ablock3x3_forward.1} parent=11 // pred_check
        %p892 = pneg %p521
      $region90: #{ablock3x3_forward.1} parent=11 // pred_check_branch
        %894 = sbr.rel (%p892) target = $region92
      $region91: #{ablock3x3_forward.1} parent=11 // pred_region
        _
      $region92: #{ablock3x3_forward.1} parent=11 // pred_fallthru
        _
      // Predicated region
      $region93: #{ablock3x3_forward.1} parent=11 // pred_check
        %p895 = pneg %p542
      $region94: #{ablock3x3_forward.1} parent=11 // pred_check_branch
        %897 = sbr.rel (%p895) target = $region96
      $region95: #{ablock3x3_forward.1} parent=11 // pred_region
        _
      $region96: #{ablock3x3_forward.1} parent=11 // pred_fallthru
        _
      // Predicated region
      $region97: #{ablock3x3_forward.1} parent=11 // pred_check
        %p898 = pneg %p563
      $region98: #{ablock3x3_forward.1} parent=11 // pred_check_branch
        %900 = sbr.rel (%p898) target = $region100
      $region99: #{ablock3x3_forward.1} parent=11 // pred_region
        _
      $region100: #{ablock3x3_forward.1} parent=11 // pred_fallthru
        _
      // Predicated region
      $region101: #{ablock3x3_forward.1} parent=11 // pred_check
        %p901 = pneg %p584
      $region102: #{ablock3x3_forward.1} parent=11 // pred_check_branch
        %903 = sbr.rel (%p901) target = $region104
      $region103: #{ablock3x3_forward.1} parent=11 // pred_region
        _
      $region104: #{ablock3x3_forward.1} parent=11 // pred_fallthru
        _
      // Predicated region
      $region105: #{ablock3x3_forward.1} parent=11 // pred_check
        %p904 = pneg %p605
      $region106: #{ablock3x3_forward.1} parent=11 // pred_check_branch
        %906 = sbr.rel (%p904) target = $region108
      $region107: #{ablock3x3_forward.1} parent=11 // pred_region
        _
      $region108: #{ablock3x3_forward.1} parent=11 // pred_fallthru
        _
      // Predicated region
      $region109: #{ablock3x3_forward.1} parent=11 // pred_check
        %p907 = pneg %p626
      $region110: #{ablock3x3_forward.1} parent=11 // pred_check_branch
        %909 = sbr.rel (%p907) target = $region112
      $region111: #{ablock3x3_forward.1} parent=11 // pred_region
        _
      $region112: #{ablock3x3_forward.1} parent=11 // pred_fallthru
        _
      // Predicated region
      $region113: #{ablock3x3_forward.1} parent=11 // pred_check
        %p910 = pneg %p647
      $region114: #{ablock3x3_forward.1} parent=11 // pred_check_branch
        %912 = sbr.rel (%p910) target = $region116
      $region115: #{ablock3x3_forward.1} parent=11 // pred_region
        _
      $region116: #{ablock3x3_forward.1} parent=11 // pred_fallthru
        _
      // Predicated region
      $region117: #{ablock3x3_forward.1} parent=11 // pred_check
        %p913 = pneg %p668
      $region118: #{ablock3x3_forward.1} parent=11 // pred_check_branch
        %915 = sbr.rel (%p913) target = $region120
      $region119: #{ablock3x3_forward.1} parent=11 // pred_region
        _
      $region120: #{ablock3x3_forward.1} parent=11 // pred_fallthru
        _
      // Predicated region
      $region121: #{ablock3x3_forward.1} parent=11 // pred_check
        %p916 = pneg %p689
      $region122: #{ablock3x3_forward.1} parent=11 // pred_check_branch
        %918 = sbr.rel (%p916) target = $region124
      $region123: #{ablock3x3_forward.1} parent=11 // pred_region
        _
      $region124: #{ablock3x3_forward.1} parent=11 // pred_fallthru
        _
      // Predicated region
      $region125: #{ablock3x3_forward.1} parent=11 // pred_check
        %p919 = pneg %p710
      $region126: #{ablock3x3_forward.1} parent=11 // pred_check_branch
        %921 = sbr.rel (%p919) target = $region128
      $region127: #{ablock3x3_forward.1} parent=11 // pred_region
        _
      $region128: #{ablock3x3_forward.1} parent=11 // pred_fallthru
        _
      // Predicated region
      $region129: #{ablock3x3_forward.1} parent=11 // pred_check
        %p922 = pneg %p731
      $region130: #{ablock3x3_forward.1} parent=11 // pred_check_branch
        %924 = sbr.rel (%p922) target = $region132
      $region131: #{ablock3x3_forward.1} parent=11 // pred_region
        _
      $region132: #{ablock3x3_forward.1} parent=11 // pred_fallthru
        _
      // Predicated region
      $region133: #{ablock3x3_forward.1} parent=11 // pred_check
        %p925 = pneg %p752
      $region134: #{ablock3x3_forward.1} parent=11 // pred_check_branch
        %927 = sbr.rel (%p925) target = $region136
      $region135: #{ablock3x3_forward.1} parent=11 // pred_region
        _
      $region136: #{ablock3x3_forward.1} parent=11 // pred_fallthru
        _
      // Predicated region
      $region137: #{ablock3x3_forward.1} parent=11 // pred_check
        %p928 = pneg %p773
      $region138: #{ablock3x3_forward.1} parent=11 // pred_check_branch
        %930 = sbr.rel (%p928) target = $region140
      $region139: #{ablock3x3_forward.1} parent=11 // pred_region
        _
      $region140: #{ablock3x3_forward.1} parent=11 // pred_fallthru
        _
      // Predicated region
      $region141: #{ablock3x3_forward.1} parent=11 // pred_check
        %p931 = pneg %p794
      $region142: #{ablock3x3_forward.1} parent=11 // pred_check_branch
        %933 = sbr.rel (%p931) target = $region144
      $region143: #{ablock3x3_forward.1} parent=11 // pred_region
        _
      $region144: #{ablock3x3_forward.1} parent=11 // pred_fallthru
        _
    $region12: #{ablock3x3_forward.1} parent=5 // pred_fallthru
      _
    %p934 = scmp.lt.s32.totalorder %s75, 2
    // Predicated region
    $region145: #{ablock3x3_forward.1} parent=5 // pred_check
      %p935 = pneg %p934
    $region146: #{ablock3x3_forward.1} parent=5 // pred_check_branch
      %937 = sbr.rel (%p935) target = $region148
    $region147: #{ablock3x3_forward.1} parent=5 // pred_region
      // Predicated region
      $region149: #{ablock3x3_forward.1} parent=147 // pred_check
        %p938 = pneg %p116
      $region150: #{ablock3x3_forward.1} parent=147 // pred_check_branch
        %940 = sbr.rel (%p938) target = $region152
      $region151: #{ablock3x3_forward.1} parent=147 // pred_region
        %p941 = scmp.lt.s32.totalorder %s75, 1
        %s942 = scalar_select %p941, %s75, 1
        %s943 = smul.addr %s942, 2
        %s944 = smul.addr %s943, 4
        %s945 = scalar_lea.vmem %s3, %s944
      $region152: #{ablock3x3_forward.1} parent=147 // pred_fallthru
        _
    $region148: #{ablock3x3_forward.1} parent=5 // pred_fallthru
      _
    %p946 = scmp.le.s32.totalorder 1, %s75
    %p947 = scmp.lt.s32.totalorder %s75, 3
    %p948 = pnand %p946, %p947
    %p949 = pneg %p948
    // Predicated region
    $region153: #{ablock3x3_forward.1} parent=5 // pred_check
      _
    $region154: #{ablock3x3_forward.1} parent=5 // pred_check_branch
      %951 = sbr.rel (%p948) target = $region156
    $region155: #{ablock3x3_forward.1} parent=5 // pred_region
      %s952 = ssub.s32 %s75, 1
      %p953 = pneg %p96
      %p954 = pneg %p93
      %p955 = scmp.lt.s32.totalorder %s80, 1
      %s956 = scalar_select %p955, %s80, 1
      %s957 = smul.addr %s956, 2
      %s958 = smul.addr %s957, 4
      %s959 = scalar_lea.vmem %s3, %s958
      %p960 = pneg %p122
      %p961 = pneg %p119
      %p962 = pneg %p143
      %p963 = pneg %p140
      %p964 = pneg %p164
      %p965 = pneg %p161
      %p966 = pneg %p185
      %p967 = pneg %p182
      %p968 = pneg %p206
      %p969 = pneg %p203
      %p970 = pneg %p227
      %p971 = pneg %p224
      %p972 = pneg %p248
      %p973 = pneg %p245
      %p974 = pneg %p269
      %p975 = pneg %p266
      %p976 = pneg %p290
      %p977 = pneg %p287
      %p978 = pneg %p311
      %p979 = pneg %p308
      %p980 = pneg %p332
      %p981 = pneg %p329
      %p982 = pneg %p353
      %p983 = pneg %p350
      %p984 = pneg %p374
      %p985 = pneg %p371
      %p986 = pneg %p395
      %p987 = pneg %p392
      %p988 = pneg %p416
      %p989 = pneg %p413
      %p990 = pneg %p437
      %p991 = pneg %p434
      %p992 = pneg %p458
      %p993 = pneg %p455
      %p994 = pneg %p479
      %p995 = pneg %p476
      %p996 = pneg %p500
      %p997 = pneg %p497
      %p998 = pneg %p521
      %p999 = pneg %p518
      %p1000 = pneg %p542
      %p1001 = pneg %p539
      %p1002 = pneg %p563
      %p1003 = pneg %p560
      %p1004 = pneg %p584
      %p1005 = pneg %p581
      %p1006 = pneg %p605
      %p1007 = pneg %p602
      %p1008 = pneg %p626
      %p1009 = pneg %p623
      %p1010 = pneg %p647
      %p1011 = pneg %p644
      %p1012 = pneg %p668
      %p1013 = pneg %p665
      %p1014 = pneg %p689
      %p1015 = pneg %p686
      %p1016 = pneg %p710
      %p1017 = pneg %p707
      %p1018 = pneg %p731
      %p1019 = pneg %p728
      %p1020 = pneg %p752
      %p1021 = pneg %p749
      %p1022 = pneg %p773
      %p1023 = pneg %p770
      %p1024 = pneg %p794
      %p1025 = pneg %p791
      %p1026 = pneg %p820
      %p1027 = pneg %p817
      %p1028 = scmp.lt.s32.totalorder %s80, 1
      %s1029 = scalar_select %p1028, %s80, 1
      %s1030 = smul.addr %s1029, 2
      %s1031 = smul.addr %s1030, 4
      %s1032 = scalar_lea.vmem %s69, %s1031
      %p1033 = scmp.lt.s32.totalorder %s80, 1
      %s1034 = scalar_select %p1033, %s80, 1
      %s1035 = smul.addr %s1034, 2
      %s1036 = smul.addr %s1035, 4
      %s1037 = scalar_lea.vmem %s3, %s1036
      %p1038 = scmp.lt.s32.totalorder %s80, 1
      %s1039 = scalar_select %p1038, %s80, 1
      %s1040 = smul.addr %s1039, 2
      %s1041 = smul.addr %s1040, 4
      %s1042 = scalar_lea.vmem %s69, %s1041
      %v1043 = vld [vmem:[%s1] sm:$0x3]
      %s1044 = scalar_lea.vmem %s1, 2
      %v1045 = vld [vmem:[%s1044] sm:$0x3]
      %s1046 = scalar_lea.vmem %s1, 4
      %v1047 = vld [vmem:[%s1046] sm:$0x3]
      %s1048 = scalar_lea.vmem %s1, 6
      %v1049 = vld [vmem:[%s1048] sm:$0x3]
      %s1050 = scalar_lea.vmem %s1, 10
      %v1051 = vld [vmem:[%s1050] sm:$0x3]
      %s1052 = scalar_lea.vmem %s1, 12
      %v1053 = vld [vmem:[%s1052] sm:$0x3]
      %s1054 = scalar_lea.vmem %s1, 14
      %v1055 = vld [vmem:[%s1054] sm:$0x3]
      %s1056 = scalar_lea.vmem %s1, 16
      %v1057 = vld [vmem:[%s1056] sm:$0x3]
      %v1058 = vld [vmem:[%s1037] sm:$0xff]
      %v1060 = vcombine.high %v1058, %v1058
      %1062 = vrot.lane.b32.xlu0 %v1058, 17
      %v1063 = vpop.permute.xlu0 %1062
      %1064 = vrot.lane.b32.xlu0 %v1060, 17
      %v1065 = vpop.permute.xlu0 %1064
      %v1066 = vlaneseq
      %v1067 = vand.u32 %v1066, 127
      %vm1068 = vcmp.lt.s32.totalorder %v1067, 17
      %v1069 = vsel %vm1068, %v1063, %v1065
      %v1070 = vsel %vm1068, %v1065, %v1063
      %v1072 = vlaneseq
      %v1073 = vshrl.u32 %v1072, 7
      %v1074 = vsub.s32 0, %v1073
      %v1075 = vrot.slane %v1043, %v1074
      %v1076 = vlaneseq
      %v1077 = vshrl.u32 %v1076, 7
      %v1078 = vsub.s32 1, %v1077
      %v1079 = vrot.slane %v1043, %v1078
      %v1082 = vmul.f32 %v1070, %v1075
      %v1083 = vmul.f32 %v1069, %v1079
      %1084 = vrot.lane.b32.xlu0 %v1058, 16
      %v1085 = vpop.permute.xlu0 %1084
      %1086 = vrot.lane.b32.xlu0 %v1060, 16
      %v1087 = vpop.permute.xlu0 %1086
      %vm1088 = vcmp.lt.s32.totalorder %v1067, 16
      %v1089 = vsel %vm1088, %v1085, %v1087
      %v1090 = vsel %vm1088, %v1087, %v1085
      %v1092 = vlaneseq
      %v1093 = vshrl.u32 %v1092, 7
      %v1094 = vsub.s32 0, %v1093
      %v1095 = vrot.slane %v1045, %v1094
      %v1096 = vlaneseq
      %v1097 = vshrl.u32 %v1096, 7
      %v1098 = vsub.s32 1, %v1097
      %v1099 = vrot.slane %v1045, %v1098
      %v1102 = vmul.f32 %v1090, %v1095
      %v1103 = vmul.f32 %v1089, %v1099
      %1104 = vrot.lane.b32.xlu0 %v1058, 15
      %v1105 = vpop.permute.xlu0 %1104
      %1106 = vrot.lane.b32.xlu0 %v1060, 15
      %v1107 = vpop.permute.xlu0 %1106
      %vm1108 = vcmp.lt.s32.totalorder %v1067, 15
      %v1109 = vsel %vm1108, %v1105, %v1107
      %v1110 = vsel %vm1108, %v1107, %v1105
      %v1112 = vlaneseq
      %v1113 = vshrl.u32 %v1112, 7
      %v1114 = vsub.s32 0, %v1113
      %v1115 = vrot.slane %v1047, %v1114
      %v1116 = vlaneseq
      %v1117 = vshrl.u32 %v1116, 7
      %v1118 = vsub.s32 1, %v1117
      %v1119 = vrot.slane %v1047, %v1118
      %v1122 = vmul.f32 %v1110, %v1115
      %v1123 = vmul.f32 %v1109, %v1119
      %1124 = vrot.lane.b32.xlu0 %v1058, 1
      %v1125 = vpop.permute.xlu0 %1124
      %1126 = vrot.lane.b32.xlu0 %v1060, 1
      %v1127 = vpop.permute.xlu0 %1126
      %vm1128 = vcmp.lt.s32.totalorder %v1067, 1
      %v1129 = vsel %vm1128, %v1125, %v1127
      %v1130 = vsel %vm1128, %v1127, %v1125
      %v1132 = vlaneseq
      %v1133 = vshrl.u32 %v1132, 7
      %v1134 = vsub.s32 0, %v1133
      %v1135 = vrot.slane %v1049, %v1134
      %v1136 = vlaneseq
      %v1137 = vshrl.u32 %v1136, 7
      %v1138 = vsub.s32 1, %v1137
      %v1139 = vrot.slane %v1049, %v1138
      %v1142 = vmul.f32 %v1130, %v1135
      %v1143 = vmul.f32 %v1129, %v1139
      %1144 = vrot.lane.b32.xlu0 %v1058, 127
      %v1145 = vpop.permute.xlu0 %1144
      %1146 = vrot.lane.b32.xlu0 %v1060, 127
      %v1147 = vpop.permute.xlu0 %1146
      %vm1148 = vcmp.lt.s32.totalorder %v1067, 127
      %v1149 = vsel %vm1148, %v1145, %v1147
      %v1150 = vsel %vm1148, %v1147, %v1145
      %v1152 = vlaneseq
      %v1153 = vshrl.u32 %v1152, 7
      %v1154 = vsub.s32 0, %v1153
      %v1155 = vrot.slane %v1051, %v1154
      %v1156 = vlaneseq
      %v1157 = vshrl.u32 %v1156, 7
      %v1158 = vsub.s32 1, %v1157
      %v1159 = vrot.slane %v1051, %v1158
      %v1162 = vmul.f32 %v1149, %v1155
      %v1163 = vmul.f32 %v1150, %v1159
      %1164 = vrot.lane.b32.xlu0 %v1058, 113
      %v1165 = vpop.permute.xlu0 %1164
      %1166 = vrot.lane.b32.xlu0 %v1060, 113
      %v1167 = vpop.permute.xlu0 %1166
      %vm1168 = vcmp.lt.s32.totalorder %v1067, 113
      %v1169 = vsel %vm1168, %v1165, %v1167
      %v1170 = vsel %vm1168, %v1167, %v1165
      %v1172 = vlaneseq
      %v1173 = vshrl.u32 %v1172, 7
      %v1174 = vsub.s32 0, %v1173
      %v1175 = vrot.slane %v1053, %v1174
      %v1176 = vlaneseq
      %v1177 = vshrl.u32 %v1176, 7
      %v1178 = vsub.s32 1, %v1177
      %v1179 = vrot.slane %v1053, %v1178
      %v1182 = vmul.f32 %v1169, %v1175
      %v1183 = vmul.f32 %v1170, %v1179
      %1184 = vrot.lane.b32.xlu0 %v1058, 112
      %v1185 = vpop.permute.xlu0 %1184
      %1186 = vrot.lane.b32.xlu0 %v1060, 112
      %v1187 = vpop.permute.xlu0 %1186
      %vm1188 = vcmp.lt.s32.totalorder %v1067, 112
      %v1189 = vsel %vm1188, %v1185, %v1187
      %v1190 = vsel %vm1188, %v1187, %v1185
      %v1192 = vlaneseq
      %v1193 = vshrl.u32 %v1192, 7
      %v1194 = vsub.s32 0, %v1193
      %v1195 = vrot.slane %v1055, %v1194
      %v1196 = vlaneseq
      %v1197 = vshrl.u32 %v1196, 7
      %v1198 = vsub.s32 1, %v1197
      %v1199 = vrot.slane %v1055, %v1198
      %v1202 = vmul.f32 %v1189, %v1195
      %v1203 = vmul.f32 %v1190, %v1199
      %1204 = vrot.lane.b32.xlu0 %v1058, 111
      %v1205 = vpop.permute.xlu0 %1204
      %1206 = vrot.lane.b32.xlu0 %v1060, 111
      %v1207 = vpop.permute.xlu0 %1206
      %vm1208 = vcmp.lt.s32.totalorder %v1067, 111
      %v1209 = vsel %vm1208, %v1205, %v1207
      %v1210 = vsel %vm1208, %v1207, %v1205
      %v1212 = vlaneseq
      %v1213 = vshrl.u32 %v1212, 7
      %v1214 = vsub.s32 0, %v1213
      %v1215 = vrot.slane %v1057, %v1214
      %v1216 = vlaneseq
      %v1217 = vshrl.u32 %v1216, 7
      %v1218 = vsub.s32 1, %v1217
      %v1219 = vrot.slane %v1057, %v1218
      %v1222 = vmul.f32 %v1209, %v1215
      %v1223 = vmul.f32 %v1210, %v1219
      %v1226 = vrot.slane %v1102, 4
      %v1227 = vrot.slane %v1103, 4
      %v1232 = vrot.slane %v1142, 4
      %v1233 = vrot.slane %v1143, 4
      %v1238 = vrot.slane %v1162, 4
      %v1239 = vrot.slane %v1163, 4
      %v1244 = vrot.slane %v1202, 4
      %v1245 = vrot.slane %v1203, 4
      %vm1248 = vcmask 1043456
      %v1249 = vsel %vm1248, %v1082, %v1226
      %v1250 = vsel %vm1248, %v1083, %v1227
      %v1251 = vsel %vm1248, %v1122, %v1232
      %v1252 = vsel %vm1248, %v1123, %v1233
      %v1253 = vsel %vm1248, %v1058, %v1238
      %v1254 = vsel %vm1248, %v1060, %v1239
      %v1255 = vsel %vm1248, %v1182, %v1244
      %v1256 = vsel %vm1248, %v1183, %v1245
      %v1257 = vld [vmem:[%s5] sm:$0xff]
      %v1258 = vld [vmem:[%s7] sm:$0xff]
      %1260 = vset.pattern.permute.xlu0 0
      %1261 = vperm.xlu0 %1260, %v1258
      %v1262 = vpop.permute.xlu0 %1261
      %vm1264 = vcmask 293888
      %v1266 = vsel %vm1264, %v1257, 0
      %v1269 = vsel %vm1248, %v1222, 0
      %v1272 = vsel %vm1248, %v1223, 0
      %1274 = vmatprep.subr.mxu0 0.0
      %1275 = vmatpush1.msra.mxu0 0.0
      %1276 = vmatprep.subr.mxu0 0.0
      %1277 = vmatpush1.msra.mxu0 0.0
      %1278 = vmatprep.subr.mxu0 0.0
      %1279 = vmatpush1.msra.mxu0 0.0
      %1280 = vmatprep.subr.mxu0 0.0
      %1281 = vmatpush1.msra.mxu0 0.0
      %1282 = vmatprep.subr.mxu0 0.0
      %1283 = vmatpush1.msra.mxu0 0.0
      %1284 = vmatprep.subr.mxu0 0.0
      %1285 = vmatpush1.msra.mxu0 0.0
      %1286 = vmatprep.subr.mxu0 0.0
      %1287 = vmatpush1.msra.mxu0 0.0
      %1288 = vmatprep.subr.mxu0 0.0
      %1289 = vmatpush1.msra.mxu0 0.0
      %1290 = vmatprep.subr.mxu0 0.0
      %1291 = vmatpush1.msra.mxu0 0.0
      %1292 = vmatprep.subr.mxu0 0.0
      %1293 = vmatpush1.msra.mxu0 0.0
      %1294 = vmatprep.subr.mxu0 0.0
      %1295 = vmatpush1.msra.mxu0 0.0
      %1296 = vmatprep.subr.mxu0 %v1272
      %1297 = vmatpush1.msra.mxu0 %v1269
      %1298 = vmatprep.subr.mxu0 %v1256
      %1299 = vmatpush1.msra.mxu0 %v1255
      %1300 = vmatprep.subr.mxu0 %v1254
      %1301 = vmatpush1.msra.mxu0 %v1253
      %1302 = vmatprep.subr.mxu0 %v1252
      %1303 = vmatpush1.msra.mxu0 %v1251
      %1304 = vmatprep.subr.mxu0 %v1250
      %1305 = vmatpush1.msra.mxu0 %v1249
      %1306 = vmatprep.subr.mxu0 0.0
      %1307 = vmatpush2.msra.mxu0 0.0
      %1308 = vmatprep.subr.mxu0 0.0
      %1309 = vmatpush2.msra.mxu0 0.0
      %1310 = vmatprep.subr.mxu0 0.0
      %1311 = vmatpush2.msra.mxu0 0.0
      %1312 = vmatprep.subr.mxu0 0.0
      %1313 = vmatpush2.msra.mxu0 0.0
      %1314 = vmatprep.subr.mxu0 0.0
      %1315 = vmatpush2.msra.mxu0 0.0
      %1316 = vmatprep.subr.mxu0 0.0
      %1317 = vmatpush2.msra.mxu0 0.0
      %1318 = vmatprep.subr.mxu0 0.0
      %1319 = vmatpush2.msra.mxu0 0.0
      %1320 = vmatprep.subr.mxu0 0.0
      %1321 = vmatpush2.msra.mxu0 0.0
      %1322 = vmatprep.subr.mxu0 0.0
      %1323 = vmatpush2.msra.mxu0 0.0
      %1324 = vmatprep.subr.mxu0 0.0
      %1325 = vmatpush2.msra.mxu0 0.0
      %1326 = vmatprep.subr.mxu0 0.0
      %1327 = vmatpush2.msra.mxu0 0.0
      %1328 = vmatprep.subr.mxu0 0.0
      %1329 = vmatpush2.msra.mxu0 0.0
      %1330 = vmatprep.subr.mxu0 0.0
      %1331 = vmatpush2.msra.mxu0 0.0
      %1332 = vmatprep.subr.mxu0 0.0
      %1333 = vmatpush2.msra.mxu0 0.0
      %1334 = vmatprep.subr.mxu0 0.0
      %1335 = vmatpush2.msra.mxu0 0.0
      %1336 = vmatprep.subr.mxu0 0.0
      %1337 = vmatpush2.msra.mxu0 0.0
      %1338 = vmatprep.mubr.f32.mxu0 0.0
      %1339 = vmatmul.mubr.f32.gmra.mxu0 %v1266
      %v1340 = vpop.f32.mrf.mxu0
      %v1341 = vadd.f32 %v1262, %v1340
      %v1342 = vpop.f32.mrf.mxu0
      %v1343 = vadd.f32 %v1262, %v1342
      %1344 = vdwg.mxu0
      %vm1345 = vcmp.gt.f32.partialorder %v1341, 0.0
      %vm1346 = vcmp.gt.f32.partialorder %v1343, 0.0
      %v1347 = vld [vmem:[%s9] sm:$0xff]
      %1349 = vset.pattern.permute.xlu0 0
      %1350 = vperm.xlu0 %1349, %v1347
      %v1351 = vpop.permute.xlu0 %1350
      %v1353 = vmul.f32 %v1351, %v1341
      %v1354 = vmul.f32 %v1351, %v1343
      %v1355 = vsel %vm1345, %v1341, %v1353
      %v1356 = vsel %vm1346, %v1343, %v1354
      %1357 = vrot.lane.b32.xlu0 %v1355, 17
      %v1358 = vpop.permute.xlu0 %1357
      %1359 = vrot.lane.b32.xlu0 %v1356, 17
      %v1360 = vpop.permute.xlu0 %1359
      %v1361 = vsel %vm1068, %v1358, %v1360
      %v1362 = vsel %vm1068, %v1360, %v1358
      %v1363 = vmul.f32 %v1362, %v1075
      %v1364 = vmul.f32 %v1361, %v1079
      %1365 = vrot.lane.b32.xlu0 %v1355, 16
      %v1366 = vpop.permute.xlu0 %1365
      %1367 = vrot.lane.b32.xlu0 %v1356, 16
      %v1368 = vpop.permute.xlu0 %1367
      %v1369 = vsel %vm1088, %v1366, %v1368
      %v1370 = vsel %vm1088, %v1368, %v1366
      %v1371 = vmul.f32 %v1370, %v1095
      %v1372 = vmul.f32 %v1369, %v1099
      %1373 = vrot.lane.b32.xlu0 %v1355, 15
      %v1374 = vpop.permute.xlu0 %1373
      %1375 = vrot.lane.b32.xlu0 %v1356, 15
      %v1376 = vpop.permute.xlu0 %1375
      %v1377 = vsel %vm1108, %v1374, %v1376
      %v1378 = vsel %vm1108, %v1376, %v1374
      %v1379 = vmul.f32 %v1378, %v1115
      %v1380 = vmul.f32 %v1377, %v1119
      %1381 = vrot.lane.b32.xlu0 %v1355, 1
      %v1382 = vpop.permute.xlu0 %1381
      %1383 = vrot.lane.b32.xlu0 %v1356, 1
      %v1384 = vpop.permute.xlu0 %1383
      %v1385 = vsel %vm1128, %v1382, %v1384
      %v1386 = vsel %vm1128, %v1384, %v1382
      %v1387 = vmul.f32 %v1386, %v1135
      %v1388 = vmul.f32 %v1385, %v1139
      %1389 = vrot.lane.b32.xlu0 %v1355, 127
      %v1390 = vpop.permute.xlu0 %1389
      %1391 = vrot.lane.b32.xlu0 %v1356, 127
      %v1392 = vpop.permute.xlu0 %1391
      %v1393 = vsel %vm1148, %v1390, %v1392
      %v1394 = vsel %vm1148, %v1392, %v1390
      %v1395 = vmul.f32 %v1393, %v1155
      %v1396 = vmul.f32 %v1394, %v1159
      %1397 = vrot.lane.b32.xlu0 %v1355, 113
      %v1398 = vpop.permute.xlu0 %1397
      %1399 = vrot.lane.b32.xlu0 %v1356, 113
      %v1400 = vpop.permute.xlu0 %1399
      %v1401 = vsel %vm1168, %v1398, %v1400
      %v1402 = vsel %vm1168, %v1400, %v1398
      %v1403 = vmul.f32 %v1401, %v1175
      %v1404 = vmul.f32 %v1402, %v1179
      %1405 = vrot.lane.b32.xlu0 %v1355, 112
      %v1406 = vpop.permute.xlu0 %1405
      %1407 = vrot.lane.b32.xlu0 %v1356, 112
      %v1408 = vpop.permute.xlu0 %1407
      %v1409 = vsel %vm1188, %v1406, %v1408
      %v1410 = vsel %vm1188, %v1408, %v1406
      %v1411 = vmul.f32 %v1409, %v1195
      %v1412 = vmul.f32 %v1410, %v1199
      %1413 = vrot.lane.b32.xlu0 %v1355, 111
      %v1414 = vpop.permute.xlu0 %1413
      %1415 = vrot.lane.b32.xlu0 %v1356, 111
      %v1416 = vpop.permute.xlu0 %1415
      %v1417 = vsel %vm1208, %v1414, %v1416
      %v1418 = vsel %vm1208, %v1416, %v1414
      %v1419 = vmul.f32 %v1417, %v1215
      %v1420 = vmul.f32 %v1418, %v1219
      %v1421 = vld [vmem:[%s11] sm:$0xff]
      %v1422 = vld [vmem:[%s13] sm:$0xff]
      %1424 = vset.pattern.permute.xlu0 0
      %1425 = vperm.xlu0 %1424, %v1422
      %v1426 = vpop.permute.xlu0 %1425
      %vm1428 = vcmask 588800
      %v1430 = vsel %vm1428, %v1421, 0
      %1432 = vmatprep.subr.mxu0 0.0
      %1433 = vmatpush1.msra.mxu0 0.0
      %1434 = vmatprep.subr.mxu0 0.0
      %1435 = vmatpush1.msra.mxu0 0.0
      %1436 = vmatprep.subr.mxu0 0.0
      %1437 = vmatpush1.msra.mxu0 0.0
      %1438 = vmatprep.subr.mxu0 0.0
      %1439 = vmatpush1.msra.mxu0 0.0
      %1440 = vmatprep.subr.mxu0 0.0
      %1441 = vmatpush1.msra.mxu0 0.0
      %1442 = vmatprep.subr.mxu0 0.0
      %1443 = vmatpush1.msra.mxu0 0.0
      %1444 = vmatprep.subr.mxu0 0.0
      %1445 = vmatpush1.msra.mxu0 0.0
      %1446 = vmatprep.subr.mxu0 %v1420
      %1447 = vmatpush1.msra.mxu0 %v1419
      %1448 = vmatprep.subr.mxu0 %v1412
      %1449 = vmatpush1.msra.mxu0 %v1411
      %1450 = vmatprep.subr.mxu0 %v1404
      %1451 = vmatpush1.msra.mxu0 %v1403
      %1452 = vmatprep.subr.mxu0 %v1396
      %1453 = vmatpush1.msra.mxu0 %v1395
      %1454 = vmatprep.subr.mxu0 %v1356
      %1455 = vmatpush1.msra.mxu0 %v1355
      %1456 = vmatprep.subr.mxu0 %v1388
      %1457 = vmatpush1.msra.mxu0 %v1387
      %1458 = vmatprep.subr.mxu0 %v1380
      %1459 = vmatpush1.msra.mxu0 %v1379
      %1460 = vmatprep.subr.mxu0 %v1372
      %1461 = vmatpush1.msra.mxu0 %v1371
      %1462 = vmatprep.subr.mxu0 %v1364
      %1463 = vmatpush1.msra.mxu0 %v1363
      %1464 = vmatprep.subr.mxu0 0.0
      %1465 = vmatpush2.msra.mxu0 0.0
      %1466 = vmatprep.subr.mxu0 0.0
      %1467 = vmatpush2.msra.mxu0 0.0
      %1468 = vmatprep.subr.mxu0 0.0
      %1469 = vmatpush2.msra.mxu0 0.0
      %1470 = vmatprep.subr.mxu0 0.0
      %1471 = vmatpush2.msra.mxu0 0.0
      %1472 = vmatprep.subr.mxu0 0.0
      %1473 = vmatpush2.msra.mxu0 0.0
      %1474 = vmatprep.subr.mxu0 0.0
      %1475 = vmatpush2.msra.mxu0 0.0
      %1476 = vmatprep.subr.mxu0 0.0
      %1477 = vmatpush2.msra.mxu0 0.0
      %1478 = vmatprep.subr.mxu0 0.0
      %1479 = vmatpush2.msra.mxu0 0.0
      %1480 = vmatprep.subr.mxu0 0.0
      %1481 = vmatpush2.msra.mxu0 0.0
      %1482 = vmatprep.subr.mxu0 0.0
      %1483 = vmatpush2.msra.mxu0 0.0
      %1484 = vmatprep.subr.mxu0 0.0
      %1485 = vmatpush2.msra.mxu0 0.0
      %1486 = vmatprep.subr.mxu0 0.0
      %1487 = vmatpush2.msra.mxu0 0.0
      %1488 = vmatprep.subr.mxu0 0.0
      %1489 = vmatpush2.msra.mxu0 0.0
      %1490 = vmatprep.subr.mxu0 0.0
      %1491 = vmatpush2.msra.mxu0 0.0
      %1492 = vmatprep.subr.mxu0 0.0
      %1493 = vmatpush2.msra.mxu0 0.0
      %1494 = vmatprep.subr.mxu0 0.0
      %1495 = vmatpush2.msra.mxu0 0.0
      %1496 = vmatprep.mubr.f32.mxu0 0.0
      %1497 = vmatmul.mubr.f32.gmra.mxu0 %v1430
      %v1498 = vpop.f32.mrf.mxu0
      %v1499 = vadd.f32 %v1426, %v1498
      %v1500 = vpop.f32.mrf.mxu0
      %v1501 = vadd.f32 %v1426, %v1500
      %1502 = vdwg.mxu0
      %vm1503 = vcmp.gt.f32.partialorder %v1499, 0.0
      %vm1504 = vcmp.gt.f32.partialorder %v1501, 0.0
      %v1505 = vld [vmem:[%s15] sm:$0xff]
      %1507 = vset.pattern.permute.xlu0 0
      %1508 = vperm.xlu0 %1507, %v1505
      %v1509 = vpop.permute.xlu0 %1508
      %v1511 = vmul.f32 %v1509, %v1499
      %v1512 = vmul.f32 %v1509, %v1501
      %v1513 = vsel %vm1503, %v1499, %v1511
      %v1514 = vsel %vm1504, %v1501, %v1512
      %1515 = vrot.lane.b32.xlu0 %v1513, 17
      %v1516 = vpop.permute.xlu0 %1515
      %1517 = vrot.lane.b32.xlu0 %v1514, 17
      %v1518 = vpop.permute.xlu0 %1517
      %v1519 = vsel %vm1068, %v1516, %v1518
      %v1520 = vsel %vm1068, %v1518, %v1516
      %v1521 = vmul.f32 %v1520, %v1075
      %v1522 = vmul.f32 %v1519, %v1079
      %1523 = vrot.lane.b32.xlu0 %v1513, 16
      %v1524 = vpop.permute.xlu0 %1523
      %1525 = vrot.lane.b32.xlu0 %v1514, 16
      %v1526 = vpop.permute.xlu0 %1525
      %v1527 = vsel %vm1088, %v1524, %v1526
      %v1528 = vsel %vm1088, %v1526, %v1524
      %v1529 = vmul.f32 %v1528, %v1095
      %v1530 = vmul.f32 %v1527, %v1099
      %1531 = vrot.lane.b32.xlu0 %v1513, 15
      %v1532 = vpop.permute.xlu0 %1531
      %1533 = vrot.lane.b32.xlu0 %v1514, 15
      %v1534 = vpop.permute.xlu0 %1533
      %v1535 = vsel %vm1108, %v1532, %v1534
      %v1536 = vsel %vm1108, %v1534, %v1532
      %v1537 = vmul.f32 %v1536, %v1115
      %v1538 = vmul.f32 %v1535, %v1119
      %1539 = vrot.lane.b32.xlu0 %v1513, 1
      %v1540 = vpop.permute.xlu0 %1539
      %1541 = vrot.lane.b32.xlu0 %v1514, 1
      %v1542 = vpop.permute.xlu0 %1541
      %v1543 = vsel %vm1128, %v1540, %v1542
      %v1544 = vsel %vm1128, %v1542, %v1540
      %v1545 = vmul.f32 %v1544, %v1135
      %v1546 = vmul.f32 %v1543, %v1139
      %1547 = vrot.lane.b32.xlu0 %v1513, 127
      %v1548 = vpop.permute.xlu0 %1547
      %1549 = vrot.lane.b32.xlu0 %v1514, 127
      %v1550 = vpop.permute.xlu0 %1549
      %v1551 = vsel %vm1148, %v1548, %v1550
      %v1552 = vsel %vm1148, %v1550, %v1548
      %v1553 = vmul.f32 %v1551, %v1155
      %v1554 = vmul.f32 %v1552, %v1159
      %1555 = vrot.lane.b32.xlu0 %v1513, 113
      %v1556 = vpop.permute.xlu0 %1555
      %1557 = vrot.lane.b32.xlu0 %v1514, 113
      %v1558 = vpop.permute.xlu0 %1557
      %v1559 = vsel %vm1168, %v1556, %v1558
      %v1560 = vsel %vm1168, %v1558, %v1556
      %v1561 = vmul.f32 %v1559, %v1175
      %v1562 = vmul.f32 %v1560, %v1179
      %1563 = vrot.lane.b32.xlu0 %v1513, 112
      %v1564 = vpop.permute.xlu0 %1563
      %1565 = vrot.lane.b32.xlu0 %v1514, 112
      %v1566 = vpop.permute.xlu0 %1565
      %v1567 = vsel %vm1188, %v1564, %v1566
      %v1568 = vsel %vm1188, %v1566, %v1564
      %v1569 = vmul.f32 %v1567, %v1195
      %v1570 = vmul.f32 %v1568, %v1199
      %1571 = vrot.lane.b32.xlu0 %v1513, 111
      %v1572 = vpop.permute.xlu0 %1571
      %1573 = vrot.lane.b32.xlu0 %v1514, 111
      %v1574 = vpop.permute.xlu0 %1573
      %v1575 = vsel %vm1208, %v1572, %v1574
      %v1576 = vsel %vm1208, %v1574, %v1572
      %v1577 = vmul.f32 %v1575, %v1215
      %v1578 = vmul.f32 %v1576, %v1219
      %v1579 = vld [vmem:[%s17] sm:$0xff]
      %v1580 = vld [vmem:[%s19] sm:$0xff]
      %1582 = vset.pattern.permute.xlu0 0
      %1583 = vperm.xlu0 %1582, %v1580
      %v1584 = vpop.permute.xlu0 %1583
      %v1587 = vsel %vm1428, %v1579, 0
      %1589 = vmatprep.subr.mxu0 0.0
      %1590 = vmatpush1.msra.mxu0 0.0
      %1591 = vmatprep.subr.mxu0 0.0
      %1592 = vmatpush1.msra.mxu0 0.0
      %1593 = vmatprep.subr.mxu0 0.0
      %1594 = vmatpush1.msra.mxu0 0.0
      %1595 = vmatprep.subr.mxu0 0.0
      %1596 = vmatpush1.msra.mxu0 0.0
      %1597 = vmatprep.subr.mxu0 0.0
      %1598 = vmatpush1.msra.mxu0 0.0
      %1599 = vmatprep.subr.mxu0 0.0
      %1600 = vmatpush1.msra.mxu0 0.0
      %1601 = vmatprep.subr.mxu0 0.0
      %1602 = vmatpush1.msra.mxu0 0.0
      %1603 = vmatprep.subr.mxu0 %v1578
      %1604 = vmatpush1.msra.mxu0 %v1577
      %1605 = vmatprep.subr.mxu0 %v1570
      %1606 = vmatpush1.msra.mxu0 %v1569
      %1607 = vmatprep.subr.mxu0 %v1562
      %1608 = vmatpush1.msra.mxu0 %v1561
      %1609 = vmatprep.subr.mxu0 %v1554
      %1610 = vmatpush1.msra.mxu0 %v1553
      %1611 = vmatprep.subr.mxu0 %v1514
      %1612 = vmatpush1.msra.mxu0 %v1513
      %1613 = vmatprep.subr.mxu0 %v1546
      %1614 = vmatpush1.msra.mxu0 %v1545
      %1615 = vmatprep.subr.mxu0 %v1538
      %1616 = vmatpush1.msra.mxu0 %v1537
      %1617 = vmatprep.subr.mxu0 %v1530
      %1618 = vmatpush1.msra.mxu0 %v1529
      %1619 = vmatprep.subr.mxu0 %v1522
      %1620 = vmatpush1.msra.mxu0 %v1521
      %1621 = vmatprep.subr.mxu0 0.0
      %1622 = vmatpush2.msra.mxu0 0.0
      %1623 = vmatprep.subr.mxu0 0.0
      %1624 = vmatpush2.msra.mxu0 0.0
      %1625 = vmatprep.subr.mxu0 0.0
      %1626 = vmatpush2.msra.mxu0 0.0
      %1627 = vmatprep.subr.mxu0 0.0
      %1628 = vmatpush2.msra.mxu0 0.0
      %1629 = vmatprep.subr.mxu0 0.0
      %1630 = vmatpush2.msra.mxu0 0.0
      %1631 = vmatprep.subr.mxu0 0.0
      %1632 = vmatpush2.msra.mxu0 0.0
      %1633 = vmatprep.subr.mxu0 0.0
      %1634 = vmatpush2.msra.mxu0 0.0
      %1635 = vmatprep.subr.mxu0 0.0
      %1636 = vmatpush2.msra.mxu0 0.0
      %1637 = vmatprep.subr.mxu0 0.0
      %1638 = vmatpush2.msra.mxu0 0.0
      %1639 = vmatprep.subr.mxu0 0.0
      %1640 = vmatpush2.msra.mxu0 0.0
      %1641 = vmatprep.subr.mxu0 0.0
      %1642 = vmatpush2.msra.mxu0 0.0
      %1643 = vmatprep.subr.mxu0 0.0
      %1644 = vmatpush2.msra.mxu0 0.0
      %1645 = vmatprep.subr.mxu0 0.0
      %1646 = vmatpush2.msra.mxu0 0.0
      %1647 = vmatprep.subr.mxu0 0.0
      %1648 = vmatpush2.msra.mxu0 0.0
      %1649 = vmatprep.subr.mxu0 0.0
      %1650 = vmatpush2.msra.mxu0 0.0
      %1651 = vmatprep.subr.mxu0 0.0
      %1652 = vmatpush2.msra.mxu0 0.0
      %1653 = vmatprep.mubr.f32.mxu0 0.0
      %1654 = vmatmul.mubr.f32.gmra.mxu0 %v1587
      %v1655 = vpop.f32.mrf.mxu0
      %v1656 = vadd.f32 %v1584, %v1655
      %v1657 = vpop.f32.mrf.mxu0
      %v1658 = vadd.f32 %v1584, %v1657
      %1659 = vdwg.mxu0
      %vm1660 = vcmp.gt.f32.partialorder %v1656, 0.0
      %vm1661 = vcmp.gt.f32.partialorder %v1658, 0.0
      %v1662 = vld [vmem:[%s21] sm:$0xff]
      %1664 = vset.pattern.permute.xlu0 0
      %1665 = vperm.xlu0 %1664, %v1662
      %v1666 = vpop.permute.xlu0 %1665
      %v1668 = vmul.f32 %v1666, %v1656
      %v1669 = vmul.f32 %v1666, %v1658
      %v1670 = vsel %vm1660, %v1656, %v1668
      %v1671 = vsel %vm1661, %v1658, %v1669
      %1672 = vrot.lane.b32.xlu0 %v1670, 17
      %v1673 = vpop.permute.xlu0 %1672
      %1674 = vrot.lane.b32.xlu0 %v1671, 17
      %v1675 = vpop.permute.xlu0 %1674
      %v1676 = vsel %vm1068, %v1673, %v1675
      %v1677 = vsel %vm1068, %v1675, %v1673
      %v1678 = vmul.f32 %v1677, %v1075
      %v1679 = vmul.f32 %v1676, %v1079
      %1680 = vrot.lane.b32.xlu0 %v1670, 16
      %v1681 = vpop.permute.xlu0 %1680
      %1682 = vrot.lane.b32.xlu0 %v1671, 16
      %v1683 = vpop.permute.xlu0 %1682
      %v1684 = vsel %vm1088, %v1681, %v1683
      %v1685 = vsel %vm1088, %v1683, %v1681
      %v1686 = vmul.f32 %v1685, %v1095
      %v1687 = vmul.f32 %v1684, %v1099
      %1688 = vrot.lane.b32.xlu0 %v1670, 15
      %v1689 = vpop.permute.xlu0 %1688
      %1690 = vrot.lane.b32.xlu0 %v1671, 15
      %v1691 = vpop.permute.xlu0 %1690
      %v1692 = vsel %vm1108, %v1689, %v1691
      %v1693 = vsel %vm1108, %v1691, %v1689
      %v1694 = vmul.f32 %v1693, %v1115
      %v1695 = vmul.f32 %v1692, %v1119
      %1696 = vrot.lane.b32.xlu0 %v1670, 1
      %v1697 = vpop.permute.xlu0 %1696
      %1698 = vrot.lane.b32.xlu0 %v1671, 1
      %v1699 = vpop.permute.xlu0 %1698
      %v1700 = vsel %vm1128, %v1697, %v1699
      %v1701 = vsel %vm1128, %v1699, %v1697
      %v1702 = vmul.f32 %v1701, %v1135
      %v1703 = vmul.f32 %v1700, %v1139
      %1704 = vrot.lane.b32.xlu0 %v1670, 127
      %v1705 = vpop.permute.xlu0 %1704
      %1706 = vrot.lane.b32.xlu0 %v1671, 127
      %v1707 = vpop.permute.xlu0 %1706
      %v1708 = vsel %vm1148, %v1705, %v1707
      %v1709 = vsel %vm1148, %v1707, %v1705
      %v1710 = vmul.f32 %v1708, %v1155
      %v1711 = vmul.f32 %v1709, %v1159
      %1712 = vrot.lane.b32.xlu0 %v1670, 113
      %v1713 = vpop.permute.xlu0 %1712
      %1714 = vrot.lane.b32.xlu0 %v1671, 113
      %v1715 = vpop.permute.xlu0 %1714
      %v1716 = vsel %vm1168, %v1713, %v1715
      %v1717 = vsel %vm1168, %v1715, %v1713
      %v1718 = vmul.f32 %v1716, %v1175
      %v1719 = vmul.f32 %v1717, %v1179
      %1720 = vrot.lane.b32.xlu0 %v1670, 112
      %v1721 = vpop.permute.xlu0 %1720
      %1722 = vrot.lane.b32.xlu0 %v1671, 112
      %v1723 = vpop.permute.xlu0 %1722
      %v1724 = vsel %vm1188, %v1721, %v1723
      %v1725 = vsel %vm1188, %v1723, %v1721
      %v1726 = vmul.f32 %v1724, %v1195
      %v1727 = vmul.f32 %v1725, %v1199
      %1728 = vrot.lane.b32.xlu0 %v1670, 111
      %v1729 = vpop.permute.xlu0 %1728
      %1730 = vrot.lane.b32.xlu0 %v1671, 111
      %v1731 = vpop.permute.xlu0 %1730
      %v1732 = vsel %vm1208, %v1729, %v1731
      %v1733 = vsel %vm1208, %v1731, %v1729
      %v1734 = vmul.f32 %v1732, %v1215
      %v1735 = vmul.f32 %v1733, %v1219
      %v1736 = vld [vmem:[%s23] sm:$0xff]
      %v1737 = vld [vmem:[%s23 + $0x8] sm:$0xff]
      %v1738 = vld [vmem:[%s25] sm:$0xff]
      %1740 = vset.pattern.permute.xlu0 0
      %1741 = vperm.xlu0 %1740, %v1738
      %v1742 = vpop.permute.xlu0 %1741
      %vm1744 = vcmask 719872
      %v1746 = vsel %vm1744, %v1737, 0
      %1748 = vmatprep.subr.mxu0 %v1396
      %1749 = vmatpush1.msra.mxu0 %v1395
      %1750 = vmatprep.subr.mxu0 %v1671
      %1751 = vmatpush1.msra.mxu0 %v1670
      %1752 = vmatprep.subr.mxu0 %v1514
      %1753 = vmatpush1.msra.mxu0 %v1513
      %1754 = vmatprep.subr.mxu0 %v1356
      %1755 = vmatpush1.msra.mxu0 %v1355
      %1756 = vmatprep.subr.mxu0 %v1703
      %1757 = vmatpush1.msra.mxu0 %v1702
      %1758 = vmatprep.subr.mxu0 %v1546
      %1759 = vmatpush1.msra.mxu0 %v1545
      %1760 = vmatprep.subr.mxu0 %v1388
      %1761 = vmatpush1.msra.mxu0 %v1387
      %1762 = vmatprep.subr.mxu0 %v1695
      %1763 = vmatpush1.msra.mxu0 %v1694
      %1764 = vmatprep.subr.mxu0 %v1538
      %1765 = vmatpush1.msra.mxu0 %v1537
      %1766 = vmatprep.subr.mxu0 %v1380
      %1767 = vmatpush1.msra.mxu0 %v1379
      %1768 = vmatprep.subr.mxu0 %v1687
      %1769 = vmatpush1.msra.mxu0 %v1686
      %1770 = vmatprep.subr.mxu0 %v1530
      %1771 = vmatpush1.msra.mxu0 %v1529
      %1772 = vmatprep.subr.mxu0 %v1372
      %1773 = vmatpush1.msra.mxu0 %v1371
      %1774 = vmatprep.subr.mxu0 %v1679
      %1775 = vmatpush1.msra.mxu0 %v1678
      %1776 = vmatprep.subr.mxu0 %v1522
      %1777 = vmatpush1.msra.mxu0 %v1521
      %1778 = vmatprep.subr.mxu0 %v1364
      %1779 = vmatpush1.msra.mxu0 %v1363
      %1780 = vmatprep.subr.mxu0 0.0
      %1781 = vmatpush2.msra.mxu0 0.0
      %1782 = vmatprep.subr.mxu0 0.0
      %1783 = vmatpush2.msra.mxu0 0.0
      %1784 = vmatprep.subr.mxu0 0.0
      %1785 = vmatpush2.msra.mxu0 0.0
      %1786 = vmatprep.subr.mxu0 0.0
      %1787 = vmatpush2.msra.mxu0 0.0
      %1788 = vmatprep.subr.mxu0 0.0
      %1789 = vmatpush2.msra.mxu0 0.0
      %1790 = vmatprep.subr.mxu0 %v1735
      %1791 = vmatpush2.msra.mxu0 %v1734
      %1792 = vmatprep.subr.mxu0 %v1578
      %1793 = vmatpush2.msra.mxu0 %v1577
      %1794 = vmatprep.subr.mxu0 %v1420
      %1795 = vmatpush2.msra.mxu0 %v1419
      %1796 = vmatprep.subr.mxu0 %v1727
      %1797 = vmatpush2.msra.mxu0 %v1726
      %1798 = vmatprep.subr.mxu0 %v1570
      %1799 = vmatpush2.msra.mxu0 %v1569
      %1800 = vmatprep.subr.mxu0 %v1412
      %1801 = vmatpush2.msra.mxu0 %v1411
      %1802 = vmatprep.subr.mxu0 %v1719
      %1803 = vmatpush2.msra.mxu0 %v1718
      %1804 = vmatprep.subr.mxu0 %v1562
      %1805 = vmatpush2.msra.mxu0 %v1561
      %1806 = vmatprep.subr.mxu0 %v1404
      %1807 = vmatpush2.msra.mxu0 %v1403
      %1808 = vmatprep.subr.mxu0 %v1711
      %1809 = vmatpush2.msra.mxu0 %v1710
      %1810 = vmatprep.subr.mxu0 %v1554
      %1811 = vmatpush2.msra.mxu0 %v1553
      %1812 = vmatprep.mubr.f32.mxu0 %v1746
      %1813 = vmatmul.mubr.f32.gmra.mxu0 %v1736
      %v1814 = vpop.f32.mrf.mxu0
      %v1815 = vadd.f32 %v1742, %v1814
      %v1816 = vpop.f32.mrf.mxu0
      %v1817 = vadd.f32 %v1742, %v1816
      %1818 = vdwg.mxu0
      %vm1819 = vcmp.gt.f32.partialorder %v1815, 0.0
      %vm1820 = vcmp.gt.f32.partialorder %v1817, 0.0
      %v1821 = vld [vmem:[%s27] sm:$0xff]
      %1823 = vset.pattern.permute.xlu0 0
      %1824 = vperm.xlu0 %1823, %v1821
      %v1825 = vpop.permute.xlu0 %1824
      %v1827 = vmul.f32 %v1825, %v1815
      %v1828 = vmul.f32 %v1825, %v1817
      %v1829 = vsel %vm1819, %v1815, %v1827
      %v1830 = vsel %vm1820, %v1817, %v1828
      %1831 = vrot.lane.b32.xlu0 %v1829, 17
      %v1832 = vpop.permute.xlu0 %1831
      %1833 = vrot.lane.b32.xlu0 %v1830, 17
      %v1834 = vpop.permute.xlu0 %1833
      %v1835 = vsel %vm1068, %v1832, %v1834
      %v1836 = vsel %vm1068, %v1834, %v1832
      %v1837 = vmul.f32 %v1836, %v1075
      %v1838 = vmul.f32 %v1835, %v1079
      %1839 = vrot.lane.b32.xlu0 %v1829, 16
      %v1840 = vpop.permute.xlu0 %1839
      %1841 = vrot.lane.b32.xlu0 %v1830, 16
      %v1842 = vpop.permute.xlu0 %1841
      %v1843 = vsel %vm1088, %v1840, %v1842
      %v1844 = vsel %vm1088, %v1842, %v1840
      %v1845 = vmul.f32 %v1844, %v1095
      %v1846 = vmul.f32 %v1843, %v1099
      %1847 = vrot.lane.b32.xlu0 %v1829, 15
      %v1848 = vpop.permute.xlu0 %1847
      %1849 = vrot.lane.b32.xlu0 %v1830, 15
      %v1850 = vpop.permute.xlu0 %1849
      %v1851 = vsel %vm1108, %v1848, %v1850
      %v1852 = vsel %vm1108, %v1850, %v1848
      %v1853 = vmul.f32 %v1852, %v1115
      %v1854 = vmul.f32 %v1851, %v1119
      %1855 = vrot.lane.b32.xlu0 %v1829, 1
      %v1856 = vpop.permute.xlu0 %1855
      %1857 = vrot.lane.b32.xlu0 %v1830, 1
      %v1858 = vpop.permute.xlu0 %1857
      %v1859 = vsel %vm1128, %v1856, %v1858
      %v1860 = vsel %vm1128, %v1858, %v1856
      %v1861 = vmul.f32 %v1860, %v1135
      %v1862 = vmul.f32 %v1859, %v1139
      %1863 = vrot.lane.b32.xlu0 %v1829, 127
      %v1864 = vpop.permute.xlu0 %1863
      %1865 = vrot.lane.b32.xlu0 %v1830, 127
      %v1866 = vpop.permute.xlu0 %1865
      %v1867 = vsel %vm1148, %v1864, %v1866
      %v1868 = vsel %vm1148, %v1866, %v1864
      %v1869 = vmul.f32 %v1867, %v1155
      %v1870 = vmul.f32 %v1868, %v1159
      %1871 = vrot.lane.b32.xlu0 %v1829, 113
      %v1872 = vpop.permute.xlu0 %1871
      %1873 = vrot.lane.b32.xlu0 %v1830, 113
      %v1874 = vpop.permute.xlu0 %1873
      %v1875 = vsel %vm1168, %v1872, %v1874
      %v1876 = vsel %vm1168, %v1874, %v1872
      %v1877 = vmul.f32 %v1875, %v1175
      %v1878 = vmul.f32 %v1876, %v1179
      %1879 = vrot.lane.b32.xlu0 %v1829, 112
      %v1880 = vpop.permute.xlu0 %1879
      %1881 = vrot.lane.b32.xlu0 %v1830, 112
      %v1882 = vpop.permute.xlu0 %1881
      %v1883 = vsel %vm1188, %v1880, %v1882
      %v1884 = vsel %vm1188, %v1882, %v1880
      %v1885 = vmul.f32 %v1883, %v1195
      %v1886 = vmul.f32 %v1884, %v1199
      %1887 = vrot.lane.b32.xlu0 %v1829, 111
      %v1888 = vpop.permute.xlu0 %1887
      %1889 = vrot.lane.b32.xlu0 %v1830, 111
      %v1890 = vpop.permute.xlu0 %1889
      %v1891 = vsel %vm1208, %v1888, %v1890
      %v1892 = vsel %vm1208, %v1890, %v1888
      %v1893 = vmul.f32 %v1891, %v1215
      %v1894 = vmul.f32 %v1892, %v1219
      %v1895 = vld [vmem:[%s29] sm:$0xff]
      %v1896 = vld [vmem:[%s31] sm:$0xff]
      %1898 = vset.pattern.permute.xlu0 0
      %1899 = vperm.xlu0 %1898, %v1896
      %v1900 = vpop.permute.xlu0 %1899
      %v1903 = vsel %vm1428, %v1895, 0
      %1905 = vmatprep.subr.mxu0 0.0
      %1906 = vmatpush1.msra.mxu0 0.0
      %1907 = vmatprep.subr.mxu0 0.0
      %1908 = vmatpush1.msra.mxu0 0.0
      %1909 = vmatprep.subr.mxu0 0.0
      %1910 = vmatpush1.msra.mxu0 0.0
      %1911 = vmatprep.subr.mxu0 0.0
      %1912 = vmatpush1.msra.mxu0 0.0
      %1913 = vmatprep.subr.mxu0 0.0
      %1914 = vmatpush1.msra.mxu0 0.0
      %1915 = vmatprep.subr.mxu0 0.0
      %1916 = vmatpush1.msra.mxu0 0.0
      %1917 = vmatprep.subr.mxu0 0.0
      %1918 = vmatpush1.msra.mxu0 0.0
      %1919 = vmatprep.subr.mxu0 %v1894
      %1920 = vmatpush1.msra.mxu0 %v1893
      %1921 = vmatprep.subr.mxu0 %v1886
      %1922 = vmatpush1.msra.mxu0 %v1885
      %1923 = vmatprep.subr.mxu0 %v1878
      %1924 = vmatpush1.msra.mxu0 %v1877
      %1925 = vmatprep.subr.mxu0 %v1870
      %1926 = vmatpush1.msra.mxu0 %v1869
      %1927 = vmatprep.subr.mxu0 %v1830
      %1928 = vmatpush1.msra.mxu0 %v1829
      %1929 = vmatprep.subr.mxu0 %v1862
      %1930 = vmatpush1.msra.mxu0 %v1861
      %1931 = vmatprep.subr.mxu0 %v1854
      %1932 = vmatpush1.msra.mxu0 %v1853
      %1933 = vmatprep.subr.mxu0 %v1846
      %1934 = vmatpush1.msra.mxu0 %v1845
      %1935 = vmatprep.subr.mxu0 %v1838
      %1936 = vmatpush1.msra.mxu0 %v1837
      %1937 = vmatprep.subr.mxu0 0.0
      %1938 = vmatpush2.msra.mxu0 0.0
      %1939 = vmatprep.subr.mxu0 0.0
      %1940 = vmatpush2.msra.mxu0 0.0
      %1941 = vmatprep.subr.mxu0 0.0
      %1942 = vmatpush2.msra.mxu0 0.0
      %1943 = vmatprep.subr.mxu0 0.0
      %1944 = vmatpush2.msra.mxu0 0.0
      %1945 = vmatprep.subr.mxu0 0.0
      %1946 = vmatpush2.msra.mxu0 0.0
      %1947 = vmatprep.subr.mxu0 0.0
      %1948 = vmatpush2.msra.mxu0 0.0
      %1949 = vmatprep.subr.mxu0 0.0
      %1950 = vmatpush2.msra.mxu0 0.0
      %1951 = vmatprep.subr.mxu0 0.0
      %1952 = vmatpush2.msra.mxu0 0.0
      %1953 = vmatprep.subr.mxu0 0.0
      %1954 = vmatpush2.msra.mxu0 0.0
      %1955 = vmatprep.subr.mxu0 0.0
      %1956 = vmatpush2.msra.mxu0 0.0
      %1957 = vmatprep.subr.mxu0 0.0
      %1958 = vmatpush2.msra.mxu0 0.0
      %1959 = vmatprep.subr.mxu0 0.0
      %1960 = vmatpush2.msra.mxu0 0.0
      %1961 = vmatprep.subr.mxu0 0.0
      %1962 = vmatpush2.msra.mxu0 0.0
      %1963 = vmatprep.subr.mxu0 0.0
      %1964 = vmatpush2.msra.mxu0 0.0
      %1965 = vmatprep.subr.mxu0 0.0
      %1966 = vmatpush2.msra.mxu0 0.0
      %1967 = vmatprep.subr.mxu0 0.0
      %1968 = vmatpush2.msra.mxu0 0.0
      %1969 = vmatprep.mubr.f32.mxu0 0.0
      %1970 = vmatmul.mubr.f32.gmra.mxu0 %v1903
      %v1971 = vpop.f32.mrf.mxu0
      %v1972 = vadd.f32 %v1900, %v1971
      %v1973 = vpop.f32.mrf.mxu0
      %v1974 = vadd.f32 %v1900, %v1973
      %1975 = vdwg.mxu0
      %vm1976 = vcmp.gt.f32.partialorder %v1972, 0.0
      %vm1977 = vcmp.gt.f32.partialorder %v1974, 0.0
      %v1978 = vld [vmem:[%s33] sm:$0xff]
      %1980 = vset.pattern.permute.xlu0 0
      %1981 = vperm.xlu0 %1980, %v1978
      %v1982 = vpop.permute.xlu0 %1981
      %v1984 = vmul.f32 %v1982, %v1972
      %v1985 = vmul.f32 %v1982, %v1974
      %v1986 = vsel %vm1976, %v1972, %v1984
      %v1987 = vsel %vm1977, %v1974, %v1985
      %1988 = vrot.lane.b32.xlu0 %v1986, 17
      %v1989 = vpop.permute.xlu0 %1988
      %1990 = vrot.lane.b32.xlu0 %v1987, 17
      %v1991 = vpop.permute.xlu0 %1990
      %v1992 = vsel %vm1068, %v1989, %v1991
      %v1993 = vsel %vm1068, %v1991, %v1989
      %v1994 = vmul.f32 %v1993, %v1075
      %v1995 = vmul.f32 %v1992, %v1079
      %1996 = vrot.lane.b32.xlu0 %v1986, 16
      %v1997 = vpop.permute.xlu0 %1996
      %1998 = vrot.lane.b32.xlu0 %v1987, 16
      %v1999 = vpop.permute.xlu0 %1998
      %v2000 = vsel %vm1088, %v1997, %v1999
      %v2001 = vsel %vm1088, %v1999, %v1997
      %v2002 = vmul.f32 %v2001, %v1095
      %v2003 = vmul.f32 %v2000, %v1099
      %2004 = vrot.lane.b32.xlu0 %v1986, 15
      %v2005 = vpop.permute.xlu0 %2004
      %2006 = vrot.lane.b32.xlu0 %v1987, 15
      %v2007 = vpop.permute.xlu0 %2006
      %v2008 = vsel %vm1108, %v2005, %v2007
      %v2009 = vsel %vm1108, %v2007, %v2005
      %v2010 = vmul.f32 %v2009, %v1115
      %v2011 = vmul.f32 %v2008, %v1119
      %2012 = vrot.lane.b32.xlu0 %v1986, 1
      %v2013 = vpop.permute.xlu0 %2012
      %2014 = vrot.lane.b32.xlu0 %v1987, 1
      %v2015 = vpop.permute.xlu0 %2014
      %v2016 = vsel %vm1128, %v2013, %v2015
      %v2017 = vsel %vm1128, %v2015, %v2013
      %v2018 = vmul.f32 %v2017, %v1135
      %v2019 = vmul.f32 %v2016, %v1139
      %2020 = vrot.lane.b32.xlu0 %v1986, 127
      %v2021 = vpop.permute.xlu0 %2020
      %2022 = vrot.lane.b32.xlu0 %v1987, 127
      %v2023 = vpop.permute.xlu0 %2022
      %v2024 = vsel %vm1148, %v2021, %v2023
      %v2025 = vsel %vm1148, %v2023, %v2021
      %v2026 = vmul.f32 %v2024, %v1155
      %v2027 = vmul.f32 %v2025, %v1159
      %2028 = vrot.lane.b32.xlu0 %v1986, 113
      %v2029 = vpop.permute.xlu0 %2028
      %2030 = vrot.lane.b32.xlu0 %v1987, 113
      %v2031 = vpop.permute.xlu0 %2030
      %v2032 = vsel %vm1168, %v2029, %v2031
      %v2033 = vsel %vm1168, %v2031, %v2029
      %v2034 = vmul.f32 %v2032, %v1175
      %v2035 = vmul.f32 %v2033, %v1179
      %2036 = vrot.lane.b32.xlu0 %v1986, 112
      %v2037 = vpop.permute.xlu0 %2036
      %2038 = vrot.lane.b32.xlu0 %v1987, 112
      %v2039 = vpop.permute.xlu0 %2038
      %v2040 = vsel %vm1188, %v2037, %v2039
      %v2041 = vsel %vm1188, %v2039, %v2037
      %v2042 = vmul.f32 %v2040, %v1195
      %v2043 = vmul.f32 %v2041, %v1199
      %2044 = vrot.lane.b32.xlu0 %v1986, 111
      %v2045 = vpop.permute.xlu0 %2044
      %2046 = vrot.lane.b32.xlu0 %v1987, 111
      %v2047 = vpop.permute.xlu0 %2046
      %v2048 = vsel %vm1208, %v2045, %v2047
      %v2049 = vsel %vm1208, %v2047, %v2045
      %v2050 = vmul.f32 %v2048, %v1215
      %v2051 = vmul.f32 %v2049, %v1219
      %v2052 = vld [vmem:[%s35] sm:$0xff]
      %v2053 = vld [vmem:[%s37] sm:$0xff]
      %2055 = vset.pattern.permute.xlu0 0
      %2056 = vperm.xlu0 %2055, %v2053
      %v2057 = vpop.permute.xlu0 %2056
      %v2060 = vsel %vm1428, %v2052, 0
      %2062 = vmatprep.subr.mxu0 0.0
      %2063 = vmatpush1.msra.mxu0 0.0
      %2064 = vmatprep.subr.mxu0 0.0
      %2065 = vmatpush1.msra.mxu0 0.0
      %2066 = vmatprep.subr.mxu0 0.0
      %2067 = vmatpush1.msra.mxu0 0.0
      %2068 = vmatprep.subr.mxu0 0.0
      %2069 = vmatpush1.msra.mxu0 0.0
      %2070 = vmatprep.subr.mxu0 0.0
      %2071 = vmatpush1.msra.mxu0 0.0
      %2072 = vmatprep.subr.mxu0 0.0
      %2073 = vmatpush1.msra.mxu0 0.0
      %2074 = vmatprep.subr.mxu0 0.0
      %2075 = vmatpush1.msra.mxu0 0.0
      %2076 = vmatprep.subr.mxu0 %v2051
      %2077 = vmatpush1.msra.mxu0 %v2050
      %2078 = vmatprep.subr.mxu0 %v2043
      %2079 = vmatpush1.msra.mxu0 %v2042
      %2080 = vmatprep.subr.mxu0 %v2035
      %2081 = vmatpush1.msra.mxu0 %v2034
      %2082 = vmatprep.subr.mxu0 %v2027
      %2083 = vmatpush1.msra.mxu0 %v2026
      %2084 = vmatprep.subr.mxu0 %v1987
      %2085 = vmatpush1.msra.mxu0 %v1986
      %2086 = vmatprep.subr.mxu0 %v2019
      %2087 = vmatpush1.msra.mxu0 %v2018
      %2088 = vmatprep.subr.mxu0 %v2011
      %2089 = vmatpush1.msra.mxu0 %v2010
      %2090 = vmatprep.subr.mxu0 %v2003
      %2091 = vmatpush1.msra.mxu0 %v2002
      %2092 = vmatprep.subr.mxu0 %v1995
      %2093 = vmatpush1.msra.mxu0 %v1994
      %2094 = vmatprep.subr.mxu0 0.0
      %2095 = vmatpush2.msra.mxu0 0.0
      %2096 = vmatprep.subr.mxu0 0.0
      %2097 = vmatpush2.msra.mxu0 0.0
      %2098 = vmatprep.subr.mxu0 0.0
      %2099 = vmatpush2.msra.mxu0 0.0
      %2100 = vmatprep.subr.mxu0 0.0
      %2101 = vmatpush2.msra.mxu0 0.0
      %2102 = vmatprep.subr.mxu0 0.0
      %2103 = vmatpush2.msra.mxu0 0.0
      %2104 = vmatprep.subr.mxu0 0.0
      %2105 = vmatpush2.msra.mxu0 0.0
      %2106 = vmatprep.subr.mxu0 0.0
      %2107 = vmatpush2.msra.mxu0 0.0
      %2108 = vmatprep.subr.mxu0 0.0
      %2109 = vmatpush2.msra.mxu0 0.0
      %2110 = vmatprep.subr.mxu0 0.0
      %2111 = vmatpush2.msra.mxu0 0.0
      %2112 = vmatprep.subr.mxu0 0.0
      %2113 = vmatpush2.msra.mxu0 0.0
      %2114 = vmatprep.subr.mxu0 0.0
      %2115 = vmatpush2.msra.mxu0 0.0
      %2116 = vmatprep.subr.mxu0 0.0
      %2117 = vmatpush2.msra.mxu0 0.0
      %2118 = vmatprep.subr.mxu0 0.0
      %2119 = vmatpush2.msra.mxu0 0.0
      %2120 = vmatprep.subr.mxu0 0.0
      %2121 = vmatpush2.msra.mxu0 0.0
      %2122 = vmatprep.subr.mxu0 0.0
      %2123 = vmatpush2.msra.mxu0 0.0
      %2124 = vmatprep.subr.mxu0 0.0
      %2125 = vmatpush2.msra.mxu0 0.0
      %2126 = vmatprep.mubr.f32.mxu0 0.0
      %2127 = vmatmul.mubr.f32.gmra.mxu0 %v2060
      %v2128 = vpop.f32.mrf.mxu0
      %v2129 = vadd.f32 %v2057, %v2128
      %v2130 = vpop.f32.mrf.mxu0
      %v2131 = vadd.f32 %v2057, %v2130
      %2132 = vdwg.mxu0
      %vm2133 = vcmp.gt.f32.partialorder %v2129, 0.0
      %vm2134 = vcmp.gt.f32.partialorder %v2131, 0.0
      %v2135 = vld [vmem:[%s39] sm:$0xff]
      %2137 = vset.pattern.permute.xlu0 0
      %2138 = vperm.xlu0 %2137, %v2135
      %v2139 = vpop.permute.xlu0 %2138
      %v2141 = vmul.f32 %v2139, %v2129
      %v2142 = vmul.f32 %v2139, %v2131
      %v2143 = vsel %vm2133, %v2129, %v2141
      %v2144 = vsel %vm2134, %v2131, %v2142
      %2145 = vrot.lane.b32.xlu0 %v2143, 17
      %v2146 = vpop.permute.xlu0 %2145
      %2147 = vrot.lane.b32.xlu0 %v2144, 17
      %v2148 = vpop.permute.xlu0 %2147
      %v2149 = vsel %vm1068, %v2146, %v2148
      %v2150 = vsel %vm1068, %v2148, %v2146
      %v2151 = vmul.f32 %v2150, %v1075
      %v2152 = vmul.f32 %v2149, %v1079
      %2153 = vrot.lane.b32.xlu0 %v2143, 16
      %v2154 = vpop.permute.xlu0 %2153
      %2155 = vrot.lane.b32.xlu0 %v2144, 16
      %v2156 = vpop.permute.xlu0 %2155
      %v2157 = vsel %vm1088, %v2154, %v2156
      %v2158 = vsel %vm1088, %v2156, %v2154
      %v2159 = vmul.f32 %v2158, %v1095
      %v2160 = vmul.f32 %v2157, %v1099
      %2161 = vrot.lane.b32.xlu0 %v2143, 15
      %v2162 = vpop.permute.xlu0 %2161
      %2163 = vrot.lane.b32.xlu0 %v2144, 15
      %v2164 = vpop.permute.xlu0 %2163
      %v2165 = vsel %vm1108, %v2162, %v2164
      %v2166 = vsel %vm1108, %v2164, %v2162
      %v2167 = vmul.f32 %v2166, %v1115
      %v2168 = vmul.f32 %v2165, %v1119
      %2169 = vrot.lane.b32.xlu0 %v2143, 1
      %v2170 = vpop.permute.xlu0 %2169
      %2171 = vrot.lane.b32.xlu0 %v2144, 1
      %v2172 = vpop.permute.xlu0 %2171
      %v2173 = vsel %vm1128, %v2170, %v2172
      %v2174 = vsel %vm1128, %v2172, %v2170
      %v2175 = vmul.f32 %v2174, %v1135
      %v2176 = vmul.f32 %v2173, %v1139
      %2177 = vrot.lane.b32.xlu0 %v2143, 127
      %v2178 = vpop.permute.xlu0 %2177
      %2179 = vrot.lane.b32.xlu0 %v2144, 127
      %v2180 = vpop.permute.xlu0 %2179
      %v2181 = vsel %vm1148, %v2178, %v2180
      %v2182 = vsel %vm1148, %v2180, %v2178
      %v2183 = vmul.f32 %v2181, %v1155
      %v2184 = vmul.f32 %v2182, %v1159
      %2185 = vrot.lane.b32.xlu0 %v2143, 113
      %v2186 = vpop.permute.xlu0 %2185
      %2187 = vrot.lane.b32.xlu0 %v2144, 113
      %v2188 = vpop.permute.xlu0 %2187
      %v2189 = vsel %vm1168, %v2186, %v2188
      %v2190 = vsel %vm1168, %v2188, %v2186
      %v2191 = vmul.f32 %v2189, %v1175
      %v2192 = vmul.f32 %v2190, %v1179
      %2193 = vrot.lane.b32.xlu0 %v2143, 112
      %v2194 = vpop.permute.xlu0 %2193
      %2195 = vrot.lane.b32.xlu0 %v2144, 112
      %v2196 = vpop.permute.xlu0 %2195
      %v2197 = vsel %vm1188, %v2194, %v2196
      %v2198 = vsel %vm1188, %v2196, %v2194
      %v2199 = vmul.f32 %v2197, %v1195
      %v2200 = vmul.f32 %v2198, %v1199
      %2201 = vrot.lane.b32.xlu0 %v2143, 111
      %v2202 = vpop.permute.xlu0 %2201
      %2203 = vrot.lane.b32.xlu0 %v2144, 111
      %v2204 = vpop.permute.xlu0 %2203
      %v2205 = vsel %vm1208, %v2202, %v2204
      %v2206 = vsel %vm1208, %v2204, %v2202
      %v2207 = vmul.f32 %v2205, %v1215
      %v2208 = vmul.f32 %v2206, %v1219
      %v2209 = vld [vmem:[%s41] sm:$0xff]
      %v2210 = vld [vmem:[%s41 + $0x8] sm:$0xff]
      %v2211 = vld [vmem:[%s43] sm:$0xff]
      %2213 = vset.pattern.permute.xlu0 0
      %2214 = vperm.xlu0 %2213, %v2211
      %v2215 = vpop.permute.xlu0 %2214
      %v2218 = vsel %vm1744, %v2210, 0
      %2220 = vmatprep.subr.mxu0 %v1870
      %2221 = vmatpush1.msra.mxu0 %v1869
      %2222 = vmatprep.subr.mxu0 %v2144
      %2223 = vmatpush1.msra.mxu0 %v2143
      %2224 = vmatprep.subr.mxu0 %v1987
      %2225 = vmatpush1.msra.mxu0 %v1986
      %2226 = vmatprep.subr.mxu0 %v1830
      %2227 = vmatpush1.msra.mxu0 %v1829
      %2228 = vmatprep.subr.mxu0 %v2176
      %2229 = vmatpush1.msra.mxu0 %v2175
      %2230 = vmatprep.subr.mxu0 %v2019
      %2231 = vmatpush1.msra.mxu0 %v2018
      %2232 = vmatprep.subr.mxu0 %v1862
      %2233 = vmatpush1.msra.mxu0 %v1861
      %2234 = vmatprep.subr.mxu0 %v2168
      %2235 = vmatpush1.msra.mxu0 %v2167
      %2236 = vmatprep.subr.mxu0 %v2011
      %2237 = vmatpush1.msra.mxu0 %v2010
      %2238 = vmatprep.subr.mxu0 %v1854
      %2239 = vmatpush1.msra.mxu0 %v1853
      %2240 = vmatprep.subr.mxu0 %v2160
      %2241 = vmatpush1.msra.mxu0 %v2159
      %2242 = vmatprep.subr.mxu0 %v2003
      %2243 = vmatpush1.msra.mxu0 %v2002
      %2244 = vmatprep.subr.mxu0 %v1846
      %2245 = vmatpush1.msra.mxu0 %v1845
      %2246 = vmatprep.subr.mxu0 %v2152
      %2247 = vmatpush1.msra.mxu0 %v2151
      %2248 = vmatprep.subr.mxu0 %v1995
      %2249 = vmatpush1.msra.mxu0 %v1994
      %2250 = vmatprep.subr.mxu0 %v1838
      %2251 = vmatpush1.msra.mxu0 %v1837
      %2252 = vmatprep.subr.mxu0 0.0
      %2253 = vmatpush2.msra.mxu0 0.0
      %2254 = vmatprep.subr.mxu0 0.0
      %2255 = vmatpush2.msra.mxu0 0.0
      %2256 = vmatprep.subr.mxu0 0.0
      %2257 = vmatpush2.msra.mxu0 0.0
      %2258 = vmatprep.subr.mxu0 0.0
      %2259 = vmatpush2.msra.mxu0 0.0
      %2260 = vmatprep.subr.mxu0 0.0
      %2261 = vmatpush2.msra.mxu0 0.0
      %2262 = vmatprep.subr.mxu0 %v2208
      %2263 = vmatpush2.msra.mxu0 %v2207
      %2264 = vmatprep.subr.mxu0 %v2051
      %2265 = vmatpush2.msra.mxu0 %v2050
      %2266 = vmatprep.subr.mxu0 %v1894
      %2267 = vmatpush2.msra.mxu0 %v1893
      %2268 = vmatprep.subr.mxu0 %v2200
      %2269 = vmatpush2.msra.mxu0 %v2199
      %2270 = vmatprep.subr.mxu0 %v2043
      %2271 = vmatpush2.msra.mxu0 %v2042
      %2272 = vmatprep.subr.mxu0 %v1886
      %2273 = vmatpush2.msra.mxu0 %v1885
      %2274 = vmatprep.subr.mxu0 %v2192
      %2275 = vmatpush2.msra.mxu0 %v2191
      %2276 = vmatprep.subr.mxu0 %v2035
      %2277 = vmatpush2.msra.mxu0 %v2034
      %2278 = vmatprep.subr.mxu0 %v1878
      %2279 = vmatpush2.msra.mxu0 %v1877
      %2280 = vmatprep.subr.mxu0 %v2184
      %2281 = vmatpush2.msra.mxu0 %v2183
      %2282 = vmatprep.subr.mxu0 %v2027
      %2283 = vmatpush2.msra.mxu0 %v2026
      %2284 = vmatprep.mubr.f32.mxu0 %v2218
      %2285 = vmatmul.mubr.f32.gmra.mxu0 %v2209
      %v2286 = vpop.f32.mrf.mxu0
      %v2287 = vadd.f32 %v2215, %v2286
      %v2288 = vpop.f32.mrf.mxu0
      %v2289 = vadd.f32 %v2215, %v2288
      %2290 = vdwg.mxu0
      %vm2291 = vcmp.gt.f32.partialorder %v2287, 0.0
      %vm2292 = vcmp.gt.f32.partialorder %v2289, 0.0
      %v2293 = vld [vmem:[%s45] sm:$0xff]
      %2295 = vset.pattern.permute.xlu0 0
      %2296 = vperm.xlu0 %2295, %v2293
      %v2297 = vpop.permute.xlu0 %2296
      %v2299 = vmul.f32 %v2297, %v2287
      %v2300 = vmul.f32 %v2297, %v2289
      %v2301 = vsel %vm2291, %v2287, %v2299
      %v2302 = vsel %vm2292, %v2289, %v2300
      %2303 = vrot.lane.b32.xlu0 %v2301, 17
      %v2304 = vpop.permute.xlu0 %2303
      %2305 = vrot.lane.b32.xlu0 %v2302, 17
      %v2306 = vpop.permute.xlu0 %2305
      %v2307 = vsel %vm1068, %v2304, %v2306
      %v2308 = vsel %vm1068, %v2306, %v2304
      %v2309 = vmul.f32 %v2308, %v1075
      %v2310 = vmul.f32 %v2307, %v1079
      %2311 = vrot.lane.b32.xlu0 %v2301, 16
      %v2312 = vpop.permute.xlu0 %2311
      %2313 = vrot.lane.b32.xlu0 %v2302, 16
      %v2314 = vpop.permute.xlu0 %2313
      %v2315 = vsel %vm1088, %v2312, %v2314
      %v2316 = vsel %vm1088, %v2314, %v2312
      %v2317 = vmul.f32 %v2316, %v1095
      %v2318 = vmul.f32 %v2315, %v1099
      %2319 = vrot.lane.b32.xlu0 %v2301, 15
      %v2320 = vpop.permute.xlu0 %2319
      %2321 = vrot.lane.b32.xlu0 %v2302, 15
      %v2322 = vpop.permute.xlu0 %2321
      %v2323 = vsel %vm1108, %v2320, %v2322
      %v2324 = vsel %vm1108, %v2322, %v2320
      %v2325 = vmul.f32 %v2324, %v1115
      %v2326 = vmul.f32 %v2323, %v1119
      %2327 = vrot.lane.b32.xlu0 %v2301, 1
      %v2328 = vpop.permute.xlu0 %2327
      %2329 = vrot.lane.b32.xlu0 %v2302, 1
      %v2330 = vpop.permute.xlu0 %2329
      %v2331 = vsel %vm1128, %v2328, %v2330
      %v2332 = vsel %vm1128, %v2330, %v2328
      %v2333 = vmul.f32 %v2332, %v1135
      %v2334 = vmul.f32 %v2331, %v1139
      %2335 = vrot.lane.b32.xlu0 %v2301, 127
      %v2336 = vpop.permute.xlu0 %2335
      %2337 = vrot.lane.b32.xlu0 %v2302, 127
      %v2338 = vpop.permute.xlu0 %2337
      %v2339 = vsel %vm1148, %v2336, %v2338
      %v2340 = vsel %vm1148, %v2338, %v2336
      %v2341 = vmul.f32 %v2339, %v1155
      %v2342 = vmul.f32 %v2340, %v1159
      %2343 = vrot.lane.b32.xlu0 %v2301, 113
      %v2344 = vpop.permute.xlu0 %2343
      %2345 = vrot.lane.b32.xlu0 %v2302, 113
      %v2346 = vpop.permute.xlu0 %2345
      %v2347 = vsel %vm1168, %v2344, %v2346
      %v2348 = vsel %vm1168, %v2346, %v2344
      %v2349 = vmul.f32 %v2347, %v1175
      %v2350 = vmul.f32 %v2348, %v1179
      %2351 = vrot.lane.b32.xlu0 %v2301, 112
      %v2352 = vpop.permute.xlu0 %2351
      %2353 = vrot.lane.b32.xlu0 %v2302, 112
      %v2354 = vpop.permute.xlu0 %2353
      %v2355 = vsel %vm1188, %v2352, %v2354
      %v2356 = vsel %vm1188, %v2354, %v2352
      %v2357 = vmul.f32 %v2355, %v1195
      %v2358 = vmul.f32 %v2356, %v1199
      %2359 = vrot.lane.b32.xlu0 %v2301, 111
      %v2360 = vpop.permute.xlu0 %2359
      %2361 = vrot.lane.b32.xlu0 %v2302, 111
      %v2362 = vpop.permute.xlu0 %2361
      %v2363 = vsel %vm1208, %v2360, %v2362
      %v2364 = vsel %vm1208, %v2362, %v2360
      %v2365 = vmul.f32 %v2363, %v1215
      %v2366 = vmul.f32 %v2364, %v1219
      %v2367 = vld [vmem:[%s47] sm:$0xff]
      %v2368 = vld [vmem:[%s49] sm:$0xff]
      %2370 = vset.pattern.permute.xlu0 0
      %2371 = vperm.xlu0 %2370, %v2368
      %v2372 = vpop.permute.xlu0 %2371
      %v2375 = vsel %vm1428, %v2367, 0
      %2377 = vmatprep.subr.mxu0 0.0
      %2378 = vmatpush1.msra.mxu0 0.0
      %2379 = vmatprep.subr.mxu0 0.0
      %2380 = vmatpush1.msra.mxu0 0.0
      %2381 = vmatprep.subr.mxu0 0.0
      %2382 = vmatpush1.msra.mxu0 0.0
      %2383 = vmatprep.subr.mxu0 0.0
      %2384 = vmatpush1.msra.mxu0 0.0
      %2385 = vmatprep.subr.mxu0 0.0
      %2386 = vmatpush1.msra.mxu0 0.0
      %2387 = vmatprep.subr.mxu0 0.0
      %2388 = vmatpush1.msra.mxu0 0.0
      %2389 = vmatprep.subr.mxu0 0.0
      %2390 = vmatpush1.msra.mxu0 0.0
      %2391 = vmatprep.subr.mxu0 %v2366
      %2392 = vmatpush1.msra.mxu0 %v2365
      %2393 = vmatprep.subr.mxu0 %v2358
      %2394 = vmatpush1.msra.mxu0 %v2357
      %2395 = vmatprep.subr.mxu0 %v2350
      %2396 = vmatpush1.msra.mxu0 %v2349
      %2397 = vmatprep.subr.mxu0 %v2342
      %2398 = vmatpush1.msra.mxu0 %v2341
      %2399 = vmatprep.subr.mxu0 %v2302
      %2400 = vmatpush1.msra.mxu0 %v2301
      %2401 = vmatprep.subr.mxu0 %v2334
      %2402 = vmatpush1.msra.mxu0 %v2333
      %2403 = vmatprep.subr.mxu0 %v2326
      %2404 = vmatpush1.msra.mxu0 %v2325
      %2405 = vmatprep.subr.mxu0 %v2318
      %2406 = vmatpush1.msra.mxu0 %v2317
      %2407 = vmatprep.subr.mxu0 %v2310
      %2408 = vmatpush1.msra.mxu0 %v2309
      %2409 = vmatprep.subr.mxu0 0.0
      %2410 = vmatpush2.msra.mxu0 0.0
      %2411 = vmatprep.subr.mxu0 0.0
      %2412 = vmatpush2.msra.mxu0 0.0
      %2413 = vmatprep.subr.mxu0 0.0
      %2414 = vmatpush2.msra.mxu0 0.0
      %2415 = vmatprep.subr.mxu0 0.0
      %2416 = vmatpush2.msra.mxu0 0.0
      %2417 = vmatprep.subr.mxu0 0.0
      %2418 = vmatpush2.msra.mxu0 0.0
      %2419 = vmatprep.subr.mxu0 0.0
      %2420 = vmatpush2.msra.mxu0 0.0
      %2421 = vmatprep.subr.mxu0 0.0
      %2422 = vmatpush2.msra.mxu0 0.0
      %2423 = vmatprep.subr.mxu0 0.0
      %2424 = vmatpush2.msra.mxu0 0.0
      %2425 = vmatprep.subr.mxu0 0.0
      %2426 = vmatpush2.msra.mxu0 0.0
      %2427 = vmatprep.subr.mxu0 0.0
      %2428 = vmatpush2.msra.mxu0 0.0
      %2429 = vmatprep.subr.mxu0 0.0
      %2430 = vmatpush2.msra.mxu0 0.0
      %2431 = vmatprep.subr.mxu0 0.0
      %2432 = vmatpush2.msra.mxu0 0.0
      %2433 = vmatprep.subr.mxu0 0.0
      %2434 = vmatpush2.msra.mxu0 0.0
      %2435 = vmatprep.subr.mxu0 0.0
      %2436 = vmatpush2.msra.mxu0 0.0
      %2437 = vmatprep.subr.mxu0 0.0
      %2438 = vmatpush2.msra.mxu0 0.0
      %2439 = vmatprep.subr.mxu0 0.0
      %2440 = vmatpush2.msra.mxu0 0.0
      %2441 = vmatprep.mubr.f32.mxu0 0.0
      %2442 = vmatmul.mubr.f32.gmra.mxu0 %v2375
      %v2443 = vpop.f32.mrf.mxu0
      %v2444 = vadd.f32 %v2372, %v2443
      %v2445 = vpop.f32.mrf.mxu0
      %v2446 = vadd.f32 %v2372, %v2445
      %2447 = vdwg.mxu0
      %vm2448 = vcmp.gt.f32.partialorder %v2444, 0.0
      %vm2449 = vcmp.gt.f32.partialorder %v2446, 0.0
      %v2450 = vld [vmem:[%s51] sm:$0xff]
      %2452 = vset.pattern.permute.xlu0 0
      %2453 = vperm.xlu0 %2452, %v2450
      %v2454 = vpop.permute.xlu0 %2453
      %v2456 = vmul.f32 %v2454, %v2444
      %v2457 = vmul.f32 %v2454, %v2446
      %v2458 = vsel %vm2448, %v2444, %v2456
      %v2459 = vsel %vm2449, %v2446, %v2457
      %2460 = vrot.lane.b32.xlu0 %v2458, 17
      %v2461 = vpop.permute.xlu0 %2460
      %2462 = vrot.lane.b32.xlu0 %v2459, 17
      %v2463 = vpop.permute.xlu0 %2462
      %v2464 = vsel %vm1068, %v2461, %v2463
      %v2465 = vsel %vm1068, %v2463, %v2461
      %v2466 = vmul.f32 %v2465, %v1075
      %v2467 = vmul.f32 %v2464, %v1079
      %2468 = vrot.lane.b32.xlu0 %v2458, 16
      %v2469 = vpop.permute.xlu0 %2468
      %2470 = vrot.lane.b32.xlu0 %v2459, 16
      %v2471 = vpop.permute.xlu0 %2470
      %v2472 = vsel %vm1088, %v2469, %v2471
      %v2473 = vsel %vm1088, %v2471, %v2469
      %v2474 = vmul.f32 %v2473, %v1095
      %v2475 = vmul.f32 %v2472, %v1099
      %2476 = vrot.lane.b32.xlu0 %v2458, 15
      %v2477 = vpop.permute.xlu0 %2476
      %2478 = vrot.lane.b32.xlu0 %v2459, 15
      %v2479 = vpop.permute.xlu0 %2478
      %v2480 = vsel %vm1108, %v2477, %v2479
      %v2481 = vsel %vm1108, %v2479, %v2477
      %v2482 = vmul.f32 %v2481, %v1115
      %v2483 = vmul.f32 %v2480, %v1119
      %2484 = vrot.lane.b32.xlu0 %v2458, 1
      %v2485 = vpop.permute.xlu0 %2484
      %2486 = vrot.lane.b32.xlu0 %v2459, 1
      %v2487 = vpop.permute.xlu0 %2486
      %v2488 = vsel %vm1128, %v2485, %v2487
      %v2489 = vsel %vm1128, %v2487, %v2485
      %v2490 = vmul.f32 %v2489, %v1135
      %v2491 = vmul.f32 %v2488, %v1139
      %2492 = vrot.lane.b32.xlu0 %v2458, 127
      %v2493 = vpop.permute.xlu0 %2492
      %2494 = vrot.lane.b32.xlu0 %v2459, 127
      %v2495 = vpop.permute.xlu0 %2494
      %v2496 = vsel %vm1148, %v2493, %v2495
      %v2497 = vsel %vm1148, %v2495, %v2493
      %v2498 = vmul.f32 %v2496, %v1155
      %v2499 = vmul.f32 %v2497, %v1159
      %2500 = vrot.lane.b32.xlu0 %v2458, 113
      %v2501 = vpop.permute.xlu0 %2500
      %2502 = vrot.lane.b32.xlu0 %v2459, 113
      %v2503 = vpop.permute.xlu0 %2502
      %v2504 = vsel %vm1168, %v2501, %v2503
      %v2505 = vsel %vm1168, %v2503, %v2501
      %v2506 = vmul.f32 %v2504, %v1175
      %v2507 = vmul.f32 %v2505, %v1179
      %2508 = vrot.lane.b32.xlu0 %v2458, 112
      %v2509 = vpop.permute.xlu0 %2508
      %2510 = vrot.lane.b32.xlu0 %v2459, 112
      %v2511 = vpop.permute.xlu0 %2510
      %v2512 = vsel %vm1188, %v2509, %v2511
      %v2513 = vsel %vm1188, %v2511, %v2509
      %v2514 = vmul.f32 %v2512, %v1195
      %v2515 = vmul.f32 %v2513, %v1199
      %2516 = vrot.lane.b32.xlu0 %v2458, 111
      %v2517 = vpop.permute.xlu0 %2516
      %2518 = vrot.lane.b32.xlu0 %v2459, 111
      %v2519 = vpop.permute.xlu0 %2518
      %v2520 = vsel %vm1208, %v2517, %v2519
      %v2521 = vsel %vm1208, %v2519, %v2517
      %v2522 = vmul.f32 %v2520, %v1215
      %v2523 = vmul.f32 %v2521, %v1219
      %v2524 = vld [vmem:[%s53] sm:$0xff]
      %v2525 = vld [vmem:[%s55] sm:$0xff]
      %2527 = vset.pattern.permute.xlu0 0
      %2528 = vperm.xlu0 %2527, %v2525
      %v2529 = vpop.permute.xlu0 %2528
      %v2532 = vsel %vm1428, %v2524, 0
      %2534 = vmatprep.subr.mxu0 0.0
      %2535 = vmatpush1.msra.mxu0 0.0
      %2536 = vmatprep.subr.mxu0 0.0
      %2537 = vmatpush1.msra.mxu0 0.0
      %2538 = vmatprep.subr.mxu0 0.0
      %2539 = vmatpush1.msra.mxu0 0.0
      %2540 = vmatprep.subr.mxu0 0.0
      %2541 = vmatpush1.msra.mxu0 0.0
      %2542 = vmatprep.subr.mxu0 0.0
      %2543 = vmatpush1.msra.mxu0 0.0
      %2544 = vmatprep.subr.mxu0 0.0
      %2545 = vmatpush1.msra.mxu0 0.0
      %2546 = vmatprep.subr.mxu0 0.0
      %2547 = vmatpush1.msra.mxu0 0.0
      %2548 = vmatprep.subr.mxu0 %v2523
      %2549 = vmatpush1.msra.mxu0 %v2522
      %2550 = vmatprep.subr.mxu0 %v2515
      %2551 = vmatpush1.msra.mxu0 %v2514
      %2552 = vmatprep.subr.mxu0 %v2507
      %2553 = vmatpush1.msra.mxu0 %v2506
      %2554 = vmatprep.subr.mxu0 %v2499
      %2555 = vmatpush1.msra.mxu0 %v2498
      %2556 = vmatprep.subr.mxu0 %v2459
      %2557 = vmatpush1.msra.mxu0 %v2458
      %2558 = vmatprep.subr.mxu0 %v2491
      %2559 = vmatpush1.msra.mxu0 %v2490
      %2560 = vmatprep.subr.mxu0 %v2483
      %2561 = vmatpush1.msra.mxu0 %v2482
      %2562 = vmatprep.subr.mxu0 %v2475
      %2563 = vmatpush1.msra.mxu0 %v2474
      %2564 = vmatprep.subr.mxu0 %v2467
      %2565 = vmatpush1.msra.mxu0 %v2466
      %2566 = vmatprep.subr.mxu0 0.0
      %2567 = vmatpush2.msra.mxu0 0.0
      %2568 = vmatprep.subr.mxu0 0.0
      %2569 = vmatpush2.msra.mxu0 0.0
      %2570 = vmatprep.subr.mxu0 0.0
      %2571 = vmatpush2.msra.mxu0 0.0
      %2572 = vmatprep.subr.mxu0 0.0
      %2573 = vmatpush2.msra.mxu0 0.0
      %2574 = vmatprep.subr.mxu0 0.0
      %2575 = vmatpush2.msra.mxu0 0.0
      %2576 = vmatprep.subr.mxu0 0.0
      %2577 = vmatpush2.msra.mxu0 0.0
      %2578 = vmatprep.subr.mxu0 0.0
      %2579 = vmatpush2.msra.mxu0 0.0
      %2580 = vmatprep.subr.mxu0 0.0
      %2581 = vmatpush2.msra.mxu0 0.0
      %2582 = vmatprep.subr.mxu0 0.0
      %2583 = vmatpush2.msra.mxu0 0.0
      %2584 = vmatprep.subr.mxu0 0.0
      %2585 = vmatpush2.msra.mxu0 0.0
      %2586 = vmatprep.subr.mxu0 0.0
      %2587 = vmatpush2.msra.mxu0 0.0
      %2588 = vmatprep.subr.mxu0 0.0
      %2589 = vmatpush2.msra.mxu0 0.0
      %2590 = vmatprep.subr.mxu0 0.0
      %2591 = vmatpush2.msra.mxu0 0.0
      %2592 = vmatprep.subr.mxu0 0.0
      %2593 = vmatpush2.msra.mxu0 0.0
      %2594 = vmatprep.subr.mxu0 0.0
      %2595 = vmatpush2.msra.mxu0 0.0
      %2596 = vmatprep.subr.mxu0 0.0
      %2597 = vmatpush2.msra.mxu0 0.0
      %2598 = vmatprep.mubr.f32.mxu0 0.0
      %2599 = vmatmul.mubr.f32.gmra.mxu0 %v2532
      %v2600 = vpop.f32.mrf.mxu0
      %v2601 = vadd.f32 %v2529, %v2600
      %v2602 = vpop.f32.mrf.mxu0
      %v2603 = vadd.f32 %v2529, %v2602
      %2604 = vdwg.mxu0
      %vm2605 = vcmp.gt.f32.partialorder %v2601, 0.0
      %vm2606 = vcmp.gt.f32.partialorder %v2603, 0.0
      %v2607 = vld [vmem:[%s57] sm:$0xff]
      %2609 = vset.pattern.permute.xlu0 0
      %2610 = vperm.xlu0 %2609, %v2607
      %v2611 = vpop.permute.xlu0 %2610
      %v2613 = vmul.f32 %v2611, %v2601
      %v2614 = vmul.f32 %v2611, %v2603
      %v2615 = vsel %vm2605, %v2601, %v2613
      %v2616 = vsel %vm2606, %v2603, %v2614
      %v2617 = vld [vmem:[%s59] sm:$0xff]
      %v2618 = vld [vmem:[%s59 + $0x8] sm:$0xff]
      %v2619 = vld [vmem:[%s61] sm:$0xff]
      %v2620 = vld [vmem:[%s61 + $0x8] sm:$0xff]
      %2622 = vset.pattern.permute.xlu0 0
      %2623 = vperm.xlu0 %2622, %v2619
      %v2624 = vpop.permute.xlu0 %2623
      %2627 = vset.pattern.permute.xlu0 0
      %2628 = vperm.xlu0 %2627, %v2620
      %v2629 = vpop.permute.xlu0 %2628
      %vm2631 = vcmask 195584
      %v2633 = vsel %vm2631, %v2617, 0
      %v2636 = vsel %vm2631, %v2618, 0
      %2638 = vmatprep.subr.mxu0 0.0
      %2639 = vmatpush1.msra.mxu0 0.0
      %2640 = vmatprep.subr.mxu0 0.0
      %2641 = vmatpush1.msra.mxu0 0.0
      %2642 = vmatprep.subr.mxu0 0.0
      %2643 = vmatpush1.msra.mxu0 0.0
      %2644 = vmatprep.subr.mxu0 0.0
      %2645 = vmatpush1.msra.mxu0 0.0
      %2646 = vmatprep.subr.mxu0 0.0
      %2647 = vmatpush1.msra.mxu0 0.0
      %2648 = vmatprep.subr.mxu0 0.0
      %2649 = vmatpush1.msra.mxu0 0.0
      %2650 = vmatprep.subr.mxu0 0.0
      %2651 = vmatpush1.msra.mxu0 0.0
      %2652 = vmatprep.subr.mxu0 0.0
      %2653 = vmatpush1.msra.mxu0 0.0
      %2654 = vmatprep.subr.mxu0 0.0
      %2655 = vmatpush1.msra.mxu0 0.0
      %2656 = vmatprep.subr.mxu0 0.0
      %2657 = vmatpush1.msra.mxu0 0.0
      %2658 = vmatprep.subr.mxu0 0.0
      %2659 = vmatpush1.msra.mxu0 0.0
      %2660 = vmatprep.subr.mxu0 0.0
      %2661 = vmatpush1.msra.mxu0 0.0
      %2662 = vmatprep.subr.mxu0 0.0
      %2663 = vmatpush1.msra.mxu0 0.0
      %2664 = vmatprep.subr.mxu0 %v2616
      %2665 = vmatpush1.msra.mxu0 %v2615
      %2666 = vmatprep.subr.mxu0 %v2459
      %2667 = vmatpush1.msra.mxu0 %v2458
      %2668 = vmatprep.subr.mxu0 %v2302
      %2669 = vmatpush1.msra.mxu0 %v2301
      %2670 = vmatprep.subr.mxu0 0.0
      %2671 = vmatpush2.msra.mxu0 0.0
      %2672 = vmatprep.subr.mxu0 0.0
      %2673 = vmatpush2.msra.mxu0 0.0
      %2674 = vmatprep.subr.mxu0 0.0
      %2675 = vmatpush2.msra.mxu0 0.0
      %2676 = vmatprep.subr.mxu0 0.0
      %2677 = vmatpush2.msra.mxu0 0.0
      %2678 = vmatprep.subr.mxu0 0.0
      %2679 = vmatpush2.msra.mxu0 0.0
      %2680 = vmatprep.subr.mxu0 0.0
      %2681 = vmatpush2.msra.mxu0 0.0
      %2682 = vmatprep.subr.mxu0 0.0
      %2683 = vmatpush2.msra.mxu0 0.0
      %2684 = vmatprep.subr.mxu0 0.0
      %2685 = vmatpush2.msra.mxu0 0.0
      %2686 = vmatprep.subr.mxu0 0.0
      %2687 = vmatpush2.msra.mxu0 0.0
      %2688 = vmatprep.subr.mxu0 0.0
      %2689 = vmatpush2.msra.mxu0 0.0
      %2690 = vmatprep.subr.mxu0 0.0
      %2691 = vmatpush2.msra.mxu0 0.0
      %2692 = vmatprep.subr.mxu0 0.0
      %2693 = vmatpush2.msra.mxu0 0.0
      %2694 = vmatprep.subr.mxu0 0.0
      %2695 = vmatpush2.msra.mxu0 0.0
      %2696 = vmatprep.subr.mxu0 0.0
      %2697 = vmatpush2.msra.mxu0 0.0
      %2698 = vmatprep.subr.mxu0 0.0
      %2699 = vmatpush2.msra.mxu0 0.0
      %2700 = vmatprep.subr.mxu0 0.0
      %2701 = vmatpush2.msra.mxu0 0.0
      %2702 = vmatprep.mubr.f32.mxu0 0.0
      %2703 = vmatmul.mubr.f32.gmra.mxu0 %v2633
      %v2704 = vpop.f32.mrf.mxu0
      %v2705 = vadd.f32 %v2624, %v2704
      %v2706 = vpop.f32.mrf.mxu0
      %v2707 = vadd.f32 %v2624, %v2706
      %2708 = vmatprep.mubr.f32.mxu0 0.0
      %2709 = vmatmul.mubr.f32.gmra.mxu0 %v2636
      %v2710 = vpop.f32.mrf.mxu0
      %v2711 = vadd.f32 %v2629, %v2710
      %v2712 = vpop.f32.mrf.mxu0
      %v2713 = vadd.f32 %v2629, %v2712
      %2714 = vdwg.mxu0
      %vm2715 = vcmp.gt.f32.partialorder %v2705, 0.0
      %vm2716 = vcmp.gt.f32.partialorder %v2707, 0.0
      %vm2717 = vcmp.gt.f32.partialorder %v2711, 0.0
      %vm2718 = vcmp.gt.f32.partialorder %v2713, 0.0
      %v2719 = vld [vmem:[%s63] sm:$0xff]
      %v2720 = vld [vmem:[%s63 + $0x8] sm:$0xff]
      %2722 = vset.pattern.permute.xlu0 0
      %2723 = vperm.xlu0 %2722, %v2719
      %v2724 = vpop.permute.xlu0 %2723
      %2727 = vset.pattern.permute.xlu0 0
      %2728 = vperm.xlu0 %2727, %v2720
      %v2729 = vpop.permute.xlu0 %2728
      %v2731 = vmul.f32 %v2724, %v2705
      %v2732 = vmul.f32 %v2724, %v2707
      %v2733 = vmul.f32 %v2729, %v2711
      %v2734 = vmul.f32 %v2729, %v2713
      %v2735 = vsel %vm2715, %v2705, %v2731
      %v2736 = vsel %vm2716, %v2707, %v2732
      %v2737 = vsel %vm2717, %v2711, %v2733
      %v2738 = vsel %vm2718, %v2713, %v2734
      %v2739 = vld [vmem:[%s65] sm:$0xf]
      %v2740 = vld [vmem:[%s67] sm:$0xf]
      %2742 = vset.pattern.permute.xlu0 0
      %2743 = vperm.xlu0 %2742, %v2740
      %v2744 = vpop.permute.xlu0 %2743
      %vm2746 = vcmask 130048
      %v2748 = vsel %vm2746, %v2739, 0
      %2750 = vmatprep.subr.mxu0 0.0
      %2751 = vmatpush1.msra.mxu0 0.0
      %2752 = vmatprep.subr.mxu0 0.0
      %2753 = vmatpush1.msra.mxu0 0.0
      %2754 = vmatprep.subr.mxu0 0.0
      %2755 = vmatpush1.msra.mxu0 0.0
      %2756 = vmatprep.subr.mxu0 0.0
      %2757 = vmatpush1.msra.mxu0 0.0
      %2758 = vmatprep.subr.mxu0 0.0
      %2759 = vmatpush1.msra.mxu0 0.0
      %2760 = vmatprep.subr.mxu0 0.0
      %2761 = vmatpush1.msra.mxu0 0.0
      %2762 = vmatprep.subr.mxu0 0.0
      %2763 = vmatpush1.msra.mxu0 0.0
      %2764 = vmatprep.subr.mxu0 0.0
      %2765 = vmatpush1.msra.mxu0 0.0
      %2766 = vmatprep.subr.mxu0 0.0
      %2767 = vmatpush1.msra.mxu0 0.0
      %2768 = vmatprep.subr.mxu0 0.0
      %2769 = vmatpush1.msra.mxu0 0.0
      %2770 = vmatprep.subr.mxu0 0.0
      %2771 = vmatpush1.msra.mxu0 0.0
      %2772 = vmatprep.subr.mxu0 0.0
      %2773 = vmatpush1.msra.mxu0 0.0
      %2774 = vmatprep.subr.mxu0 0.0
      %2775 = vmatpush1.msra.mxu0 0.0
      %2776 = vmatprep.subr.mxu0 0.0
      %2777 = vmatpush1.msra.mxu0 0.0
      %2778 = vmatprep.subr.mxu0 %v2738
      %2779 = vmatpush1.msra.mxu0 %v2737
      %2780 = vmatprep.subr.mxu0 %v2736
      %2781 = vmatpush1.msra.mxu0 %v2735
      %2782 = vmatprep.subr.mxu0 0.0
      %2783 = vmatpush2.msra.mxu0 0.0
      %2784 = vmatprep.subr.mxu0 0.0
      %2785 = vmatpush2.msra.mxu0 0.0
      %2786 = vmatprep.subr.mxu0 0.0
      %2787 = vmatpush2.msra.mxu0 0.0
      %2788 = vmatprep.subr.mxu0 0.0
      %2789 = vmatpush2.msra.mxu0 0.0
      %2790 = vmatprep.subr.mxu0 0.0
      %2791 = vmatpush2.msra.mxu0 0.0
      %2792 = vmatprep.subr.mxu0 0.0
      %2793 = vmatpush2.msra.mxu0 0.0
      %2794 = vmatprep.subr.mxu0 0.0
      %2795 = vmatpush2.msra.mxu0 0.0
      %2796 = vmatprep.subr.mxu0 0.0
      %2797 = vmatpush2.msra.mxu0 0.0
      %2798 = vmatprep.subr.mxu0 0.0
      %2799 = vmatpush2.msra.mxu0 0.0
      %2800 = vmatprep.subr.mxu0 0.0
      %2801 = vmatpush2.msra.mxu0 0.0
      %2802 = vmatprep.subr.mxu0 0.0
      %2803 = vmatpush2.msra.mxu0 0.0
      %2804 = vmatprep.subr.mxu0 0.0
      %2805 = vmatpush2.msra.mxu0 0.0
      %2806 = vmatprep.subr.mxu0 0.0
      %2807 = vmatpush2.msra.mxu0 0.0
      %2808 = vmatprep.subr.mxu0 0.0
      %2809 = vmatpush2.msra.mxu0 0.0
      %2810 = vmatprep.subr.mxu0 0.0
      %2811 = vmatpush2.msra.mxu0 0.0
      %2812 = vmatprep.subr.mxu0 0.0
      %2813 = vmatpush2.msra.mxu0 0.0
      %2814 = vmatprep.mubr.f32.mxu0 0.0
      %2815 = vmatmul.mubr.f32.gmra.mxu0 %v2748
      %v2816 = vpop.f32.mrf.mxu0
      %v2817 = vadd.f32 %v2744, %v2816
      %v2818 = vpop.f32.mrf.mxu0
      %v2819 = vadd.f32 %v2744, %v2818
      %2820 = vdwg.mxu0
      %v2823 = vcombine.low %v2817, %v2819
      %2825 = vst [vmem:[%s1042] sm:$0xff] %v2823
      %p2826 = scmp.lt.s32.totalorder %s80, 1
      %s2827 = scalar_select %p2826, %s80, 1
      %s2828 = smul.addr %s2827, 2
      %s2829 = smul.addr %s2828, 4
      %s2830 = scalar_lea.vmem %s69, %s2829
      // Predicated region
      $region157: #{ablock3x3_forward.1} parent=155 // pred_check
        %p2831 = pneg %p817
      $region158: #{ablock3x3_forward.1} parent=155 // pred_check_branch
        %2833 = sbr.rel (%p2831) target = $region160
      $region159: #{ablock3x3_forward.1} parent=155 // pred_region
        _
      $region160: #{ablock3x3_forward.1} parent=155 // pred_fallthru
        _
    $region156: #{ablock3x3_forward.1} parent=5 // pred_fallthru
      _
    %p2834 = scmp.le.s32.totalorder 2, %s75
    // Predicated region
    $region161: #{ablock3x3_forward.1} parent=5 // pred_check
      %p2835 = pneg %p2834
    $region162: #{ablock3x3_forward.1} parent=5 // pred_check_branch
      %2837 = sbr.rel (%p2835) target = $region164
    $region163: #{ablock3x3_forward.1} parent=5 // pred_region
      %s2838 = ssub.s32 %s75, 2
      // Predicated region
      $region165: #{ablock3x3_forward.1} parent=163 // pred_check
        %p2839 = pneg %p823
      $region166: #{ablock3x3_forward.1} parent=163 // pred_check_branch
        %2841 = sbr.rel (%p2839) target = $region168
      $region167: #{ablock3x3_forward.1} parent=163 // pred_region
        %p2842 = scmp.lt.s32.totalorder %s81, 1
        %s2843 = scalar_select %p2842, %s81, 1
        %s2844 = smul.addr %s2843, 2
        %s2845 = smul.addr %s2844, 4
        %s2846 = scalar_lea.vmem %s69, %s2845
      $region168: #{ablock3x3_forward.1} parent=163 // pred_fallthru
        _
    $region164: #{ablock3x3_forward.1} parent=5 // pred_fallthru
      _
  $region6: #{ablock3x3_forward.1} parent=0 // loop_footer
    %s79 = sadd.s32 1, %s75
  $region7: #{ablock3x3_forward.1} parent=0 // loop_footer_branch
    %74 = sbr.rel target = $region3
  $region8: #{ablock3x3_forward.1} parent=0 // loop_exit
    _

</llo_original>
